<compile_context>
chip_gen: v6e
topology: v6e:2x2x1
jax: 0.10.0
libtpu: 0.0.40
codegen_flags: <defaults>
</compile_context>

<pallas_src>
import functools

import jax
import jax.numpy as jnp
from jax.experimental import pallas as pl
from jax.experimental.pallas import tpu as pltpu


def _round_up(a, b):
    return ((a + b - 1) // b) * b


def _default_max_tile_q():
    # 256x256 MXU parts (v6e / v7x) benefit from tile_q=256; v5e MXU is 128x128.
    try:
        kind = jax.devices()[0].device_kind.lower()
    except Exception:
        return 128
    if "v5 lite" in kind or "v5e" in kind or "v5litepod" in kind:
        return 128
    return 256


def _attn_kernel(x_ref, wq_ref, bq_ref, wk_ref, bk_ref, wv_ref, bv_ref,
                 wp_ref, bp_ref, o_ref,
                 kT_s, v_s, q_s, ctx_s,
                 *, num_heads, head_dim, scale, seq_valid, seq_pad, tile_q,
                 single_q_tile):
    qi = pl.program_id(1)
    cdt = v_s.dtype  # bf16 compute dtype

    # --- K / V projection for the whole padded sequence, once per batch -----
    def _compute_kv():
        x_all = x_ref[0]                                        # (seq_pad, C)
        k = (jnp.dot(x_all, wk_ref[...], preferred_element_type=jnp.float32)
             + bk_ref[...])
        kT_s[...] = k.T.astype(cdt)                             # (C, seq_pad)
        v = (jnp.dot(x_all, wv_ref[...], preferred_element_type=jnp.float32)
             + bv_ref[...])
        v_s[...] = v.astype(cdt)                                # (seq_pad, C)

    if single_q_tile:
        _compute_kv()                       # fast path: no pl.when machinery
    else:
        pl.when(qi == 0)(_compute_kv)

    # --- Q projection for this tile of query rows (scale folded in) ---------
    row0 = pl.multiple_of(qi * tile_q, tile_q)
    x_q = x_ref[0, pl.ds(row0, tile_q), :]                      # (tile_q, C)
    q_s[...] = ((jnp.dot(x_q, wq_ref[...], preferred_element_type=jnp.float32)
                 + bq_ref[...]) * scale).astype(cdt)

    if seq_pad > seq_valid:
        kv_pos = jax.lax.broadcasted_iota(jnp.int32, (tile_q, seq_pad), 1)
        pad_mask = kv_pos >= seq_valid

    # --- per-head attention; contexts written straight into ctx scratch -----
    for h in range(num_heads):
        lo, hi = h * head_dim, (h + 1) * head_dim
        qh = q_s[:, lo:hi]                                      # (tile_q, Dh)
        kTh = kT_s[lo:hi, :]                                    # (Dh, seq_pad)
        vh = v_s[:, lo:hi]                                      # (seq_pad, Dh)

        s = jnp.dot(qh, kTh, preferred_element_type=jnp.float32)
        if seq_pad > seq_valid:
            s = jnp.where(pad_mask, -1e30, s)
        m = jnp.max(s, axis=-1, keepdims=True)
        p = jnp.exp(s - m)                                      # unnormalized
        denom = jnp.sum(p, axis=-1, keepdims=True)              # f32 stats
        ctx_h = jnp.dot(p.astype(cdt), vh,
                        preferred_element_type=jnp.float32)
        ctx_h = ctx_h * pl.reciprocal(denom, approx=True)
        ctx_s[:, lo:hi] = ctx_h.astype(cdt)

    # --- single full-contraction-depth output projection ---------------------
    out = (jnp.dot(ctx_s[...], wp_ref[...], preferred_element_type=jnp.float32)
           + bp_ref[...])
    o_ref[0] = out.astype(o_ref.dtype)


def pvt_attention(x, q_w, q_b, kv_w, kv_b, proj_w, proj_b, feat_size,
                  *, num_heads, sr_ratio=1, linear_attn=False,
                  max_tile_q=None, compute_dtype=jnp.bfloat16):
    """x: (B, N, C). Weights in PyTorch nn.Linear layout (out_features, in_features)."""
    # TODO(synk): sr_ratio>1 (strided Conv2d + LayerNorm) and linear_attn
    # (AdaptiveAvgPool2d + 1x1 Conv + LN + GELU) KV-reduction branches are not
    # implemented; this covers the default sr_ratio=1, linear_attn=False path
    # (feat_size is unused on that path). Dropouts are identity (eval / p=0).
    assert sr_ratio == 1 and not linear_attn

    B, N, C = x.shape
    assert C % num_heads == 0
    head_dim = C // num_heads
    scale = head_dim ** -0.5

    if max_tile_q is None:
        max_tile_q = _default_max_tile_q()

    # Lane-dense key padding (multiple of 128); padded keys are masked, padded
    # query rows are sliced off after the kernel.
    n_pad = max(_round_up(N, 128), 128)
    tile_q = min(max_tile_q, n_pad)
    if n_pad % tile_q != 0:
        tile_q = 128
    n_q_tiles = n_pad // tile_q

    x_pad = x if n_pad == N else jnp.pad(x, ((0, 0), (0, n_pad - N), (0, 0)))
    x_pad = x_pad.astype(compute_dtype)

    # PyTorch Linear: y = x @ W.T + b  ->  pre-transpose so the kernel does x @ W.
    wq_t = q_w.T.astype(compute_dtype)                 # (C, C)
    wk_t = kv_w[:C].T.astype(compute_dtype)            # (C, C)  kv rows [0, C)  -> K
    wv_t = kv_w[C:].T.astype(compute_dtype)            # (C, C)  kv rows [C, 2C) -> V
    wp_t = proj_w.T.astype(compute_dtype)              # (C, C)
    bq2 = q_b.reshape(1, C).astype(jnp.float32)
    bk2 = kv_b[:C].reshape(1, C).astype(jnp.float32)
    bv2 = kv_b[C:].reshape(1, C).astype(jnp.float32)
    bp2 = proj_b.reshape(1, C).astype(jnp.float32)

    kernel = functools.partial(
        _attn_kernel, num_heads=num_heads, head_dim=head_dim, scale=scale,
        seq_valid=N, seq_pad=n_pad, tile_q=tile_q,
        single_q_tile=(n_q_tiles == 1))

    # VMEM budget: pipeline blocks are double-buffered, scratch is not.
    cbytes = jnp.dtype(compute_dtype).itemsize
    obytes = jnp.dtype(x.dtype).itemsize
    est = (2 * n_pad * C * cbytes             # x block
           + 2 * tile_q * C * obytes          # output block
           + 2 * 4 * C * C * cbytes           # Wq/Wk/Wv/Wp blocks
           + 2 * 4 * C * 4                    # biases
           + 2 * n_pad * C * cbytes           # K^T + V scratch
           + 2 * tile_q * C * cbytes)         # Q + ctx scratch
    vmem_limit = int(min(max(int(est * 1.5), 32 << 20), 56 << 20))

    out_pad = pl.pallas_call(
        kernel,
        out_shape=jax.ShapeDtypeStruct((B, n_pad, C), x.dtype),
        grid_spec=pltpu.PrefetchScalarGridSpec(
            num_scalar_prefetch=0,
            grid=(B, n_q_tiles),
            in_specs=[
                pl.BlockSpec((1, n_pad, C), lambda b, qi: (b, 0, 0)),  # x (full seq per batch)
                pl.BlockSpec((C, C), lambda b, qi: (0, 0)),            # Wq
                pl.BlockSpec((1, C), lambda b, qi: (0, 0)),            # bq
                pl.BlockSpec((C, C), lambda b, qi: (0, 0)),            # Wk
                pl.BlockSpec((1, C), lambda b, qi: (0, 0)),            # bk
                pl.BlockSpec((C, C), lambda b, qi: (0, 0)),            # Wv
                pl.BlockSpec((1, C), lambda b, qi: (0, 0)),            # bv
                pl.BlockSpec((C, C), lambda b, qi: (0, 0)),            # Wproj
                pl.BlockSpec((1, C), lambda b, qi: (0, 0)),            # bproj
            ],
            out_specs=pl.BlockSpec((1, tile_q, C), lambda b, qi: (b, qi, 0)),
            scratch_shapes=[
                pltpu.VMEM((C, n_pad), compute_dtype),    # K^T  (current batch)
                pltpu.VMEM((n_pad, C), compute_dtype),    # V    (current batch)
                pltpu.VMEM((tile_q, C), compute_dtype),   # Q    (current tile)
                pltpu.VMEM((tile_q, C), compute_dtype),   # ctx  (current tile)
            ],
        ),
        compiler_params=pltpu.CompilerParams(
            dimension_semantics=("parallel", "arbitrary"),
            vmem_limit_bytes=vmem_limit,
        ),
    )(x_pad, wq_t, bq2, wk_t, bk2, wv_t, bv2, wp_t, bp2)

    return out_pad[:, :N, :]


def _reference_attention(x, q_w, q_b, kv_w, kv_b, proj_w, proj_b, num_heads):
    """Pure-JAX (f32) mirror of the PyTorch module (sr_ratio=1, eval mode)."""
    B, N, C = x.shape
    dh = C // num_heads
    scale = dh ** -0.5
    q = (x @ q_w.T + q_b).reshape(B, N, num_heads, dh).transpose(0, 2, 1, 3)
    kv = (x @ kv_w.T + kv_b).reshape(B, N, 2, num_heads, dh).transpose(2, 0, 3, 1, 4)
    k, v = kv[0], kv[1]
    attn = jax.nn.softmax((q * scale) @ jnp.swapaxes(k, -2, -1), axis=-1)
    ctx = (attn @ v).transpose(0, 2, 1, 3).reshape(B, N, C)
    return ctx @ proj_w.T + proj_b


if __name__ == "__main__":
    # Small config consistent with the module: B=2, N=8 tokens, dim=32, 4 heads.
    B, N, C = 2, 8, 32
    num_heads = 4
    feat_size = (2, 4)  # H*W == N; unused on the sr_ratio=1 path

    key = jax.random.PRNGKey(0)
    kx, k1, k2, k3, k4, k5, k6 = jax.random.split(key, 7)

    x = jax.random.normal(kx, (B, N, C), dtype=jnp.float32)
    q_w = jax.random.normal(k1, (C, C), dtype=jnp.float32) * 0.05
    q_b = jax.random.normal(k2, (C,), dtype=jnp.float32) * 0.05
    kv_w = jax.random.normal(k3, (2 * C, C), dtype=jnp.float32) * 0.05
    kv_b = jax.random.normal(k4, (2 * C,), dtype=jnp.float32) * 0.05
    proj_w = jax.random.normal(k5, (C, C), dtype=jnp.float32) * 0.05
    proj_b = jax.random.normal(k6, (C,), dtype=jnp.float32) * 0.05

    fn = jax.jit(functools.partial(pvt_attention, num_heads=num_heads))
    out = fn(x, q_w, q_b, kv_w, kv_b, proj_w, proj_b, feat_size)
    jax.block_until_ready(out)

    assert out.shape == (B, N, C), out.shape
    ref = _reference_attention(x, q_w, q_b, kv_w, kv_b, proj_w, proj_b, num_heads)
    max_err = float(jnp.max(jnp.abs(out - ref)))
    # bf16 MXU operands + approx reciprocal => looser tolerance than pure f32.
    assert max_err < 2e-2, f"max abs error {max_err}"
    print("KERNEL_OK")
</pallas_src>

<mosaic_0001>
module attributes {stable_mosaic.version = 11 : i64} {
  func.func @_attn_kernel(%arg0: i32, %arg1: i32, %arg2: memref<1x128x32xbf16, #tpu.memory_space<vmem>>, %arg3: memref<32x32xbf16, #tpu.memory_space<vmem>>, %arg4: memref<1x32xf32, #tpu.memory_space<vmem>>, %arg5: memref<32x32xbf16, #tpu.memory_space<vmem>>, %arg6: memref<1x32xf32, #tpu.memory_space<vmem>>, %arg7: memref<32x32xbf16, #tpu.memory_space<vmem>>, %arg8: memref<1x32xf32, #tpu.memory_space<vmem>>, %arg9: memref<32x32xbf16, #tpu.memory_space<vmem>>, %arg10: memref<1x32xf32, #tpu.memory_space<vmem>>, %arg11: memref<1x128x32xf32, #tpu.memory_space<vmem>>, %arg12: memref<32x128xbf16, #tpu.memory_space<vmem>>, %arg13: memref<128x32xbf16, #tpu.memory_space<vmem>>, %arg14: memref<128x32xbf16, #tpu.memory_space<vmem>>, %arg15: memref<128x32xbf16, #tpu.memory_space<vmem>>) attributes {dimension_semantics = [#tpu.dimension_semantics<parallel>, #tpu.dimension_semantics<arbitrary>], iteration_bounds = array<i64: 2, 1>, scalar_prefetch = 0 : i64, scratch_operands = 4 : i64, tpu.core_type = #tpu.core_type<tc>, window_params = [{transform_indices = @transform_0, window_bounds = array<i64: 1, 128, 32>}, {pipeline_mode = #tpu.pipeline_mode<synchronous>, transform_indices = @transform_1, window_bounds = array<i64: 32, 32>}, {pipeline_mode = #tpu.pipeline_mode<synchronous>, transform_indices = @transform_2, window_bounds = array<i64: 1, 32>}, {pipeline_mode = #tpu.pipeline_mode<synchronous>, transform_indices = @transform_3, window_bounds = array<i64: 32, 32>}, {pipeline_mode = #tpu.pipeline_mode<synchronous>, transform_indices = @transform_4, window_bounds = array<i64: 1, 32>}, {pipeline_mode = #tpu.pipeline_mode<synchronous>, transform_indices = @transform_5, window_bounds = array<i64: 32, 32>}, {pipeline_mode = #tpu.pipeline_mode<synchronous>, transform_indices = @transform_6, window_bounds = array<i64: 1, 32>}, {pipeline_mode = #tpu.pipeline_mode<synchronous>, transform_indices = @transform_7, window_bounds = array<i64: 32, 32>}, {pipeline_mode = #tpu.pipeline_mode<synchronous>, transform_indices = @transform_8, window_bounds = array<i64: 1, 32>}, {transform_indices = @transform_9, window_bounds = array<i64: 1, 128, 32>}]} {
    %c0 = arith.constant 0 : index
    %c0_0 = arith.constant 0 : index
    %c0_1 = arith.constant 0 : index
    %0 = vector.load %arg2[%c0, %c0_0, %c0_1] : memref<1x128x32xbf16, #tpu.memory_space<vmem>>, vector<1x128x32xbf16>
    %1 = vector.shape_cast %0 : vector<1x128x32xbf16> to vector<128x32xbf16>
    %c0_2 = arith.constant 0 : index
    %c0_3 = arith.constant 0 : index
    %2 = vector.load %arg5[%c0_2, %c0_3] : memref<32x32xbf16, #tpu.memory_space<vmem>>, vector<32x32xbf16>
    %cst = arith.constant dense<0.000000e+00> : vector<128x32xf32>
    %3 = tpu.matmul %1, %2, %cst {dimension_numbers = #tpu.dot_dimension_numbers<[1], [0], [0], [1], [0, 0, 1, 1], [], []>} : vector<128x32xbf16>, vector<32x32xbf16>, vector<128x32xf32> -> vector<128x32xf32>
    %c0_4 = arith.constant 0 : index
    %c0_5 = arith.constant 0 : index
    %4 = vector.load %arg6[%c0_4, %c0_5] : memref<1x32xf32, #tpu.memory_space<vmem>>, vector<1x32xf32>
    %5 = vector.broadcast %4 : vector<1x32xf32> to vector<128x32xf32>
    %6 = arith.addf %3, %5 : vector<128x32xf32>
    %7 = tpu.transpose %6, [1, 0] : vector<128x32xf32> -> vector<32x128xf32>
    %8 = arith.truncf %7 : vector<32x128xf32> to vector<32x128xbf16>
    %c0_6 = arith.constant 0 : index
    %c0_7 = arith.constant 0 : index
    %9 = vector.load %arg12[%c0_6, %c0_7] : memref<32x128xbf16, #tpu.memory_space<vmem>>, vector<32x128xbf16>
    tpu.vector_store %arg12[%c0_6, %c0_7], %8 {strides = array<i32>} : memref<32x128xbf16, #tpu.memory_space<vmem>>, vector<32x128xbf16>,
    %c0_8 = arith.constant 0 : index
    %c0_9 = arith.constant 0 : index
    %10 = vector.load %arg7[%c0_8, %c0_9] : memref<32x32xbf16, #tpu.memory_space<vmem>>, vector<32x32xbf16>
    %cst_10 = arith.constant dense<0.000000e+00> : vector<128x32xf32>
    %11 = tpu.matmul %1, %10, %cst_10 {dimension_numbers = #tpu.dot_dimension_numbers<[1], [0], [0], [1], [0, 0, 1, 1], [], []>} : vector<128x32xbf16>, vector<32x32xbf16>, vector<128x32xf32> -> vector<128x32xf32>
    %c0_11 = arith.constant 0 : index
    %c0_12 = arith.constant 0 : index
    %12 = vector.load %arg8[%c0_11, %c0_12] : memref<1x32xf32, #tpu.memory_space<vmem>>, vector<1x32xf32>
    %13 = vector.broadcast %12 : vector<1x32xf32> to vector<128x32xf32>
    %14 = arith.addf %11, %13 : vector<128x32xf32>
    %15 = arith.truncf %14 : vector<128x32xf32> to vector<128x32xbf16>
    %c0_13 = arith.constant 0 : index
    %c0_14 = arith.constant 0 : index
    %16 = vector.load %arg13[%c0_13, %c0_14] : memref<128x32xbf16, #tpu.memory_space<vmem>>, vector<128x32xbf16>
    tpu.vector_store %arg13[%c0_13, %c0_14], %15 {strides = array<i32>} : memref<128x32xbf16, #tpu.memory_space<vmem>>, vector<128x32xbf16>,
    %c128_i32 = arith.constant 128 : i32
    %17 = arith.muli %arg1, %c128_i32 : i32
    %18 = tpu.assume_multiple %17, 128 : i32
    %c0_15 = arith.constant 0 : index
    %19 = arith.index_cast %18 : i32 to index
    %c0_16 = arith.constant 0 : index
    %20 = vector.load %arg2[%c0_15, %19, %c0_16] : memref<1x128x32xbf16, #tpu.memory_space<vmem>>, vector<1x128x32xbf16>
    %21 = vector.shape_cast %20 : vector<1x128x32xbf16> to vector<128x32xbf16>
    %c0_17 = arith.constant 0 : index
    %c0_18 = arith.constant 0 : index
    %22 = vector.load %arg3[%c0_17, %c0_18] : memref<32x32xbf16, #tpu.memory_space<vmem>>, vector<32x32xbf16>
    %cst_19 = arith.constant dense<0.000000e+00> : vector<128x32xf32>
    %23 = tpu.matmul %21, %22, %cst_19 {dimension_numbers = #tpu.dot_dimension_numbers<[1], [0], [0], [1], [0, 0, 1, 1], [], []>} : vector<128x32xbf16>, vector<32x32xbf16>, vector<128x32xf32> -> vector<128x32xf32>
    %c0_20 = arith.constant 0 : index
    %c0_21 = arith.constant 0 : index
    %24 = vector.load %arg4[%c0_20, %c0_21] : memref<1x32xf32, #tpu.memory_space<vmem>>, vector<1x32xf32>
    %25 = vector.broadcast %24 : vector<1x32xf32> to vector<128x32xf32>
    %26 = arith.addf %23, %25 : vector<128x32xf32>
    %cst_22 = arith.constant 0.353553385 : f32
    %27 = vector.broadcast %cst_22 : f32 to vector<128x32xf32>
    %28 = arith.mulf %26, %27 : vector<128x32xf32>
    %29 = arith.truncf %28 : vector<128x32xf32> to vector<128x32xbf16>
    %c0_23 = arith.constant 0 : index
    %c0_24 = arith.constant 0 : index
    %30 = vector.load %arg14[%c0_23, %c0_24] : memref<128x32xbf16, #tpu.memory_space<vmem>>, vector<128x32xbf16>
    tpu.vector_store %arg14[%c0_23, %c0_24], %29 {strides = array<i32>} : memref<128x32xbf16, #tpu.memory_space<vmem>>, vector<128x32xbf16>,
    %31 = tpu.iota {dimensions = array<i32: 1>} : vector<128x128xi32>
    %c8_i32 = arith.constant 8 : i32
    %32 = vector.broadcast %c8_i32 : i32 to vector<128x128xi32>
    %33 = arith.cmpi sge, %31, %32 : vector<128x128xi32>
    %c0_25 = arith.constant 0 : index
    %c0_26 = arith.constant 0 : index
    %34 = vector.load %arg14[%c0_25, %c0_26] : memref<128x32xbf16, #tpu.memory_space<vmem>>, vector<128x8xbf16>
    %c0_27 = arith.constant 0 : index
    %c0_28 = arith.constant 0 : index
    %35 = vector.load %arg12[%c0_27, %c0_28] : memref<32x128xbf16, #tpu.memory_space<vmem>>, vector<8x128xbf16>
    %c0_29 = arith.constant 0 : index
    %c0_30 = arith.constant 0 : index
    %36 = vector.load %arg13[%c0_29, %c0_30] : memref<128x32xbf16, #tpu.memory_space<vmem>>, vector<128x8xbf16>
    %cst_31 = arith.constant dense<0.000000e+00> : vector<128x128xf32>
    %37 = tpu.matmul %34, %35, %cst_31 {dimension_numbers = #tpu.dot_dimension_numbers<[1], [0], [0], [1], [0, 0, 1, 1], [], []>} : vector<128x8xbf16>, vector<8x128xbf16>, vector<128x128xf32> -> vector<128x128xf32>
    %cst_32 = arith.constant -1.000000e+30 : f32
    %38 = vector.broadcast %cst_32 : f32 to vector<128x128xf32>
    %39 = arith.select %33, %38, %37 : vector<128x128xi1>, vector<128x128xf32>
    %cst_33 = arith.constant dense<0xFF800000> : vector<128xf32>
    %40 = vector.multi_reduction <maximumf>, %39, %cst_33 [1] : vector<128x128xf32> to vector<128xf32>
    %41 = vector.shape_cast %40 : vector<128xf32> to vector<128x1xf32>
    %42 = vector.broadcast %41 : vector<128x1xf32> to vector<128x128xf32>
    %43 = arith.subf %39, %42 : vector<128x128xf32>
    %44 = math.exp %43 : vector<128x128xf32>
    %cst_34 = arith.constant dense<0.000000e+00> : vector<128xf32>
    %45 = vector.multi_reduction <add>, %44, %cst_34 [1] : vector<128x128xf32> to vector<128xf32>
    %46 = vector.shape_cast %45 : vector<128xf32> to vector<128x1xf32>
    %47 = arith.truncf %44 : vector<128x128xf32> to vector<128x128xbf16>
    %cst_35 = arith.constant dense<0.000000e+00> : vector<128x8xf32>
    %48 = tpu.matmul %47, %36, %cst_35 {dimension_numbers = #tpu.dot_dimension_numbers<[1], [0], [0], [1], [0, 0, 1, 1], [], []>} : vector<128x128xbf16>, vector<128x8xbf16>, vector<128x8xf32> -> vector<128x8xf32>
    %49 = tpu.reciprocal %46 {approx = true} : vector<128x1xf32> -> vector<128x1xf32>
    %50 = vector.broadcast %49 : vector<128x1xf32> to vector<128x8xf32>
    %51 = arith.mulf %48, %50 : vector<128x8xf32>
    %52 = arith.truncf %51 : vector<128x8xf32> to vector<128x8xbf16>
    %c0_36 = arith.constant 0 : index
    %c0_37 = arith.constant 0 : index
    %53 = vector.load %arg15[%c0_36, %c0_37] : memref<128x32xbf16, #tpu.memory_space<vmem>>, vector<128x8xbf16>
    tpu.vector_store %arg15[%c0_36, %c0_37], %52 {strides = array<i32>} : memref<128x32xbf16, #tpu.memory_space<vmem>>, vector<128x8xbf16>,
    %c0_38 = arith.constant 0 : index
    %c8 = arith.constant 8 : index
    %54 = vector.load %arg14[%c0_38, %c8] : memref<128x32xbf16, #tpu.memory_space<vmem>>, vector<128x8xbf16>
    %c8_39 = arith.constant 8 : index
    %c0_40 = arith.constant 0 : index
    %55 = vector.load %arg12[%c8_39, %c0_40] : memref<32x128xbf16, #tpu.memory_space<vmem>>, vector<8x128xbf16>
    %c0_41 = arith.constant 0 : index
    %c8_42 = arith.constant 8 : index
    %56 = vector.load %arg13[%c0_41, %c8_42] : memref<128x32xbf16, #tpu.memory_space<vmem>>, vector<128x8xbf16>
    %cst_43 = arith.constant dense<0.000000e+00> : vector<128x128xf32>
    %57 = tpu.matmul %54, %55, %cst_43 {dimension_numbers = #tpu.dot_dimension_numbers<[1], [0], [0], [1], [0, 0, 1, 1], [], []>} : vector<128x8xbf16>, vector<8x128xbf16>, vector<128x128xf32> -> vector<128x128xf32>
    %cst_44 = arith.constant -1.000000e+30 : f32
    %58 = vector.broadcast %cst_44 : f32 to vector<128x128xf32>
    %59 = arith.select %33, %58, %57 : vector<128x128xi1>, vector<128x128xf32>
    %cst_45 = arith.constant dense<0xFF800000> : vector<128xf32>
    %60 = vector.multi_reduction <maximumf>, %59, %cst_45 [1] : vector<128x128xf32> to vector<128xf32>
    %61 = vector.shape_cast %60 : vector<128xf32> to vector<128x1xf32>
    %62 = vector.broadcast %61 : vector<128x1xf32> to vector<128x128xf32>
    %63 = arith.subf %59, %62 : vector<128x128xf32>
    %64 = math.exp %63 : vector<128x128xf32>
    %cst_46 = arith.constant dense<0.000000e+00> : vector<128xf32>
    %65 = vector.multi_reduction <add>, %64, %cst_46 [1] : vector<128x128xf32> to vector<128xf32>
    %66 = vector.shape_cast %65 : vector<128xf32> to vector<128x1xf32>
    %67 = arith.truncf %64 : vector<128x128xf32> to vector<128x128xbf16>
    %cst_47 = arith.constant dense<0.000000e+00> : vector<128x8xf32>
    %68 = tpu.matmul %67, %56, %cst_47 {dimension_numbers = #tpu.dot_dimension_numbers<[1], [0], [0], [1], [0, 0, 1, 1], [], []>} : vector<128x128xbf16>, vector<128x8xbf16>, vector<128x8xf32> -> vector<128x8xf32>
    %69 = tpu.reciprocal %66 {approx = true} : vector<128x1xf32> -> vector<128x1xf32>
    %70 = vector.broadcast %69 : vector<128x1xf32> to vector<128x8xf32>
    %71 = arith.mulf %68, %70 : vector<128x8xf32>
    %72 = arith.truncf %71 : vector<128x8xf32> to vector<128x8xbf16>
    %c0_48 = arith.constant 0 : index
    %c8_49 = arith.constant 8 : index
    %73 = vector.load %arg15[%c0_48, %c8_49] : memref<128x32xbf16, #tpu.memory_space<vmem>>, vector<128x8xbf16>
    tpu.vector_store %arg15[%c0_48, %c8_49], %72 {strides = array<i32>} : memref<128x32xbf16, #tpu.memory_space<vmem>>, vector<128x8xbf16>,
    %c0_50 = arith.constant 0 : index
    %c16 = arith.constant 16 : index
    %74 = vector.load %arg14[%c0_50, %c16] : memref<128x32xbf16, #tpu.memory_space<vmem>>, vector<128x8xbf16>
    %c16_51 = arith.constant 16 : index
    %c0_52 = arith.constant 0 : index
    %75 = vector.load %arg12[%c16_51, %c0_52] : memref<32x128xbf16, #tpu.memory_space<vmem>>, vector<8x128xbf16>
    %c0_53 = arith.constant 0 : index
    %c16_54 = arith.constant 16 : index
    %76 = vector.load %arg13[%c0_53, %c16_54] : memref<128x32xbf16, #tpu.memory_space<vmem>>, vector<128x8xbf16>
    %cst_55 = arith.constant dense<0.000000e+00> : vector<128x128xf32>
    %77 = tpu.matmul %74, %75, %cst_55 {dimension_numbers = #tpu.dot_dimension_numbers<[1], [0], [0], [1], [0, 0, 1, 1], [], []>} : vector<128x8xbf16>, vector<8x128xbf16>, vector<128x128xf32> -> vector<128x128xf32>
    %cst_56 = arith.constant -1.000000e+30 : f32
    %78 = vector.broadcast %cst_56 : f32 to vector<128x128xf32>
    %79 = arith.select %33, %78, %77 : vector<128x128xi1>, vector<128x128xf32>
    %cst_57 = arith.constant dense<0xFF800000> : vector<128xf32>
    %80 = vector.multi_reduction <maximumf>, %79, %cst_57 [1] : vector<128x128xf32> to vector<128xf32>
    %81 = vector.shape_cast %80 : vector<128xf32> to vector<128x1xf32>
    %82 = vector.broadcast %81 : vector<128x1xf32> to vector<128x128xf32>
    %83 = arith.subf %79, %82 : vector<128x128xf32>
    %84 = math.exp %83 : vector<128x128xf32>
    %cst_58 = arith.constant dense<0.000000e+00> : vector<128xf32>
    %85 = vector.multi_reduction <add>, %84, %cst_58 [1] : vector<128x128xf32> to vector<128xf32>
    %86 = vector.shape_cast %85 : vector<128xf32> to vector<128x1xf32>
    %87 = arith.truncf %84 : vector<128x128xf32> to vector<128x128xbf16>
    %cst_59 = arith.constant dense<0.000000e+00> : vector<128x8xf32>
    %88 = tpu.matmul %87, %76, %cst_59 {dimension_numbers = #tpu.dot_dimension_numbers<[1], [0], [0], [1], [0, 0, 1, 1], [], []>} : vector<128x128xbf16>, vector<128x8xbf16>, vector<128x8xf32> -> vector<128x8xf32>
    %89 = tpu.reciprocal %86 {approx = true} : vector<128x1xf32> -> vector<128x1xf32>
    %90 = vector.broadcast %89 : vector<128x1xf32> to vector<128x8xf32>
    %91 = arith.mulf %88, %90 : vector<128x8xf32>
    %92 = arith.truncf %91 : vector<128x8xf32> to vector<128x8xbf16>
    %c0_60 = arith.constant 0 : index
    %c16_61 = arith.constant 16 : index
    %93 = vector.load %arg15[%c0_60, %c16_61] : memref<128x32xbf16, #tpu.memory_space<vmem>>, vector<128x8xbf16>
    tpu.vector_store %arg15[%c0_60, %c16_61], %92 {strides = array<i32>} : memref<128x32xbf16, #tpu.memory_space<vmem>>, vector<128x8xbf16>,
    %c0_62 = arith.constant 0 : index
    %c24 = arith.constant 24 : index
    %94 = vector.load %arg14[%c0_62, %c24] : memref<128x32xbf16, #tpu.memory_space<vmem>>, vector<128x8xbf16>
    %c24_63 = arith.constant 24 : index
    %c0_64 = arith.constant 0 : index
    %95 = vector.load %arg12[%c24_63, %c0_64] : memref<32x128xbf16, #tpu.memory_space<vmem>>, vector<8x128xbf16>
    %c0_65 = arith.constant 0 : index
    %c24_66 = arith.constant 24 : index
    %96 = vector.load %arg13[%c0_65, %c24_66] : memref<128x32xbf16, #tpu.memory_space<vmem>>, vector<128x8xbf16>
    %cst_67 = arith.constant dense<0.000000e+00> : vector<128x128xf32>
    %97 = tpu.matmul %94, %95, %cst_67 {dimension_numbers = #tpu.dot_dimension_numbers<[1], [0], [0], [1], [0, 0, 1, 1], [], []>} : vector<128x8xbf16>, vector<8x128xbf16>, vector<128x128xf32> -> vector<128x128xf32>
    %cst_68 = arith.constant -1.000000e+30 : f32
    %98 = vector.broadcast %cst_68 : f32 to vector<128x128xf32>
    %99 = arith.select %33, %98, %97 : vector<128x128xi1>, vector<128x128xf32>
    %cst_69 = arith.constant dense<0xFF800000> : vector<128xf32>
    %100 = vector.multi_reduction <maximumf>, %99, %cst_69 [1] : vector<128x128xf32> to vector<128xf32>
    %101 = vector.shape_cast %100 : vector<128xf32> to vector<128x1xf32>
    %102 = vector.broadcast %101 : vector<128x1xf32> to vector<128x128xf32>
    %103 = arith.subf %99, %102 : vector<128x128xf32>
    %104 = math.exp %103 : vector<128x128xf32>
    %cst_70 = arith.constant dense<0.000000e+00> : vector<128xf32>
    %105 = vector.multi_reduction <add>, %104, %cst_70 [1] : vector<128x128xf32> to vector<128xf32>
    %106 = vector.shape_cast %105 : vector<128xf32> to vector<128x1xf32>
    %107 = arith.truncf %104 : vector<128x128xf32> to vector<128x128xbf16>
    %cst_71 = arith.constant dense<0.000000e+00> : vector<128x8xf32>
    %108 = tpu.matmul %107, %96, %cst_71 {dimension_numbers = #tpu.dot_dimension_numbers<[1], [0], [0], [1], [0, 0, 1, 1], [], []>} : vector<128x128xbf16>, vector<128x8xbf16>, vector<128x8xf32> -> vector<128x8xf32>
    %109 = tpu.reciprocal %106 {approx = true} : vector<128x1xf32> -> vector<128x1xf32>
    %110 = vector.broadcast %109 : vector<128x1xf32> to vector<128x8xf32>
    %111 = arith.mulf %108, %110 : vector<128x8xf32>
    %112 = arith.truncf %111 : vector<128x8xf32> to vector<128x8xbf16>
    %c0_72 = arith.constant 0 : index
    %c24_73 = arith.constant 24 : index
    %113 = vector.load %arg15[%c0_72, %c24_73] : memref<128x32xbf16, #tpu.memory_space<vmem>>, vector<128x8xbf16>
    tpu.vector_store %arg15[%c0_72, %c24_73], %112 {strides = array<i32>} : memref<128x32xbf16, #tpu.memory_space<vmem>>, vector<128x8xbf16>,
    %c0_74 = arith.constant 0 : index
    %c0_75 = arith.constant 0 : index
    %114 = vector.load %arg15[%c0_74, %c0_75] : memref<128x32xbf16, #tpu.memory_space<vmem>>, vector<128x32xbf16>
    %c0_76 = arith.constant 0 : index
    %c0_77 = arith.constant 0 : index
    %115 = vector.load %arg9[%c0_76, %c0_77] : memref<32x32xbf16, #tpu.memory_space<vmem>>, vector<32x32xbf16>
    %cst_78 = arith.constant dense<0.000000e+00> : vector<128x32xf32>
    %116 = tpu.matmul %114, %115, %cst_78 {dimension_numbers = #tpu.dot_dimension_numbers<[1], [0], [0], [1], [0, 0, 1, 1], [], []>} : vector<128x32xbf16>, vector<32x32xbf16>, vector<128x32xf32> -> vector<128x32xf32>
    %c0_79 = arith.constant 0 : index
    %c0_80 = arith.constant 0 : index
    %117 = vector.load %arg10[%c0_79, %c0_80] : memref<1x32xf32, #tpu.memory_space<vmem>>, vector<1x32xf32>
    %118 = vector.broadcast %117 : vector<1x32xf32> to vector<128x32xf32>
    %119 = arith.addf %116, %118 : vector<128x32xf32>
    %c0_81 = arith.constant 0 : index
    %c0_82 = arith.constant 0 : index
    %c0_83 = arith.constant 0 : index
    %120 = vector.load %arg11[%c0_81, %c0_82, %c0_83] : memref<1x128x32xf32, #tpu.memory_space<vmem>>, vector<1x128x32xf32>
    %121 = vector.shape_cast %120 : vector<1x128x32xf32> to vector<128x32xf32>
    %122 = vector.shape_cast %119 : vector<128x32xf32> to vector<1x128x32xf32>
    tpu.vector_store %arg11[%c0_81, %c0_82, %c0_83], %122 {strides = array<i32>} : memref<1x128x32xf32, #tpu.memory_space<vmem>>, vector<1x128x32xf32>,
    return
  }
  func.func @transform_0(%arg0: i32, %arg1: i32) -> (i32, i32, i32) {
    %c0_i32 = arith.constant 0 : i32
    %c0_i32_0 = arith.constant 0 : i32
    %c0_i32_1 = arith.constant 0 : i32
    return %arg0, %c0_i32, %c0_i32_0 : i32, i32, i32
  }
  func.func @transform_1(%arg0: i32, %arg1: i32) -> (i32, i32) {
    %c0_i32 = arith.constant 0 : i32
    %c0_i32_0 = arith.constant 0 : i32
    %c0_i32_1 = arith.constant 0 : i32
    return %c0_i32, %c0_i32_0 : i32, i32
  }
  func.func @transform_2(%arg0: i32, %arg1: i32) -> (i32, i32) {
    %c0_i32 = arith.constant 0 : i32
    %c0_i32_0 = arith.constant 0 : i32
    %c0_i32_1 = arith.constant 0 : i32
    return %c0_i32, %c0_i32_0 : i32, i32
  }
  func.func @transform_3(%arg0: i32, %arg1: i32) -> (i32, i32) {
    %c0_i32 = arith.constant 0 : i32
    %c0_i32_0 = arith.constant 0 : i32
    %c0_i32_1 = arith.constant 0 : i32
    return %c0_i32, %c0_i32_0 : i32, i32
  }
  func.func @transform_4(%arg0: i32, %arg1: i32) -> (i32, i32) {
    %c0_i32 = arith.constant 0 : i32
    %c0_i32_0 = arith.constant 0 : i32
    %c0_i32_1 = arith.constant 0 : i32
    return %c0_i32, %c0_i32_0 : i32, i32
  }
  func.func @transform_5(%arg0: i32, %arg1: i32) -> (i32, i32) {
    %c0_i32 = arith.constant 0 : i32
    %c0_i32_0 = arith.constant 0 : i32
    %c0_i32_1 = arith.constant 0 : i32
    return %c0_i32, %c0_i32_0 : i32, i32
  }
  func.func @transform_6(%arg0: i32, %arg1: i32) -> (i32, i32) {
    %c0_i32 = arith.constant 0 : i32
    %c0_i32_0 = arith.constant 0 : i32
    %c0_i32_1 = arith.constant 0 : i32
    return %c0_i32, %c0_i32_0 : i32, i32
  }
  func.func @transform_7(%arg0: i32, %arg1: i32) -> (i32, i32) {
    %c0_i32 = arith.constant 0 : i32
    %c0_i32_0 = arith.constant 0 : i32
    %c0_i32_1 = arith.constant 0 : i32
    return %c0_i32, %c0_i32_0 : i32, i32
  }
  func.func @transform_8(%arg0: i32, %arg1: i32) -> (i32, i32) {
    %c0_i32 = arith.constant 0 : i32
    %c0_i32_0 = arith.constant 0 : i32
    %c0_i32_1 = arith.constant 0 : i32
    return %c0_i32, %c0_i32_0 : i32, i32
  }
  func.func @transform_9(%arg0: i32, %arg1: i32) -> (i32, i32, i32) {
    %c0_i32 = arith.constant 0 : i32
    %c0_i32_0 = arith.constant 0 : i32
    return %arg0, %arg1, %c0_i32 : i32, i32, i32
  }
}

</mosaic_0001>

<llo_original>
// kernel: pvt_attention.1
$region0: #{pvt_attention.1}
  #allocation0 [shape = 'u32[]', space=smem, size = 0x4, offset = 0x4, fixed_abs, tag = 'smem constant byte address 0x4 - core index']
  #allocation1 [shape = 'u32[144,128]{1,0:T(1,128)}', space=vmem, size = 0x12000, scoped, tag = 'internal scratch']
  #allocation2 [shape = 'bf16[32,128]{1,0:T(8,128)(2,1)}', space=vmem, size = 0x2000, scoped, tag = 'scratch operand']
  #allocation3 [shape = 'bf16[128,32]{1,0:T(8,128)(2,1)}', space=vmem, size = 0x8000, scoped, tag = 'scratch operand']
  #allocation4 [shape = 'bf16[128,32]{1,0:T(8,128)(2,1)}', space=vmem, size = 0x8000, scoped, tag = 'scratch operand']
  #allocation5 [shape = 'bf16[128,32]{1,0:T(8,128)(2,1)}', space=vmem, size = 0x8000, scoped, tag = 'scratch operand']
  %s0 = inlined_call_operand.vmem [shape: bf16[2,128,32], index: 0, kind: input, shape index: {}]
  %s1 = inlined_call_operand.vmem [shape: bf16[32,32], index: 1, kind: input, shape index: {}]
  %s2 = inlined_call_operand.vmem [shape: f32[1,32], index: 2, kind: input, shape index: {}]
  %s3 = inlined_call_operand.vmem [shape: bf16[32,32], index: 3, kind: input, shape index: {}]
  %s4 = inlined_call_operand.vmem [shape: f32[1,32], index: 4, kind: input, shape index: {}]
  %s5 = inlined_call_operand.vmem [shape: bf16[32,32], index: 5, kind: input, shape index: {}]
  %s6 = inlined_call_operand.vmem [shape: f32[1,32], index: 6, kind: input, shape index: {}]
  %s7 = inlined_call_operand.vmem [shape: bf16[32,32], index: 7, kind: input, shape index: {}]
  %s8 = inlined_call_operand.vmem [shape: f32[1,32], index: 8, kind: input, shape index: {}]
  %s9 = inlined_call_operand.vmem [shape: f32[2,128,32], index: 9, kind: output, shape index: {}]
  %s10 = sld [smem:[#allocation0]]
  $region69: #{pvt_attention.1} parent=0
    _
  %s12 = ssub.s32 1, %s10
  %s13 = scalar_select 0, %s12, %s10
  loop: start=0, step=1, limit=4
  $region2: #{pvt_attention.1} parent=0 // loop_pre_header
    _
  $region3: #{pvt_attention.1} parent=0 // loop_header
    %s15 = sphi 0, %s19
    %p16 = scmp.ge.s32.totalorder %s15, 4
    %s22 = sphi 0, %s34
    %s23 = sphi 0, %s30
    %s24 = sphi 0, %s22
    %s25 = sphi 0, %s23
    %s26 = sphi 0, %s24
    %s27 = sphi 0, %s25
    %s37 = sphi 0, %s39
    %s40 = sphi 0, %s37
    %s41 = sphi 0, %s40
    %s57 = sphi 0, %s41
    %s61 = sphi 0, %s61
    %s63 = sphi 0, %s61
    %s64 = sphi 0, %s63
    %s78 = sphi 0, %s64
    %s82 = sphi 0, %s82
    %s84 = sphi 0, %s82
    %s85 = sphi 0, %s84
    %s99 = sphi 0, %s85
    %s103 = sphi 0, %s103
    %s105 = sphi 0, %s103
    %s106 = sphi 0, %s105
    %s120 = sphi 0, %s106
    %s124 = sphi 0, %s124
    %s126 = sphi 0, %s124
    %s127 = sphi 0, %s126
    %s141 = sphi 0, %s127
    %s145 = sphi 0, %s145
    %s147 = sphi 0, %s145
    %s148 = sphi 0, %s147
    %s162 = sphi 0, %s148
    %s166 = sphi 0, %s166
    %s168 = sphi 0, %s166
    %s169 = sphi 0, %s168
    %s183 = sphi 0, %s169
    %s187 = sphi 0, %s187
    %s189 = sphi 0, %s187
    %s190 = sphi 0, %s189
    %s204 = sphi 0, %s190
    %s208 = sphi 0, %s208
    %s210 = sphi 0, %s208
    %s211 = sphi 0, %s210
    %s225 = sphi 0, %s211
    %s233 = sphi 0, %s235
    %s236 = sphi 0, %s233
    %s237 = sphi 0, %s236
    %s253 = sphi 0, %s237
  $region4: #{pvt_attention.1} parent=0 // loop_header_branch
    %18 = sbr.rel (%p16) target = $region8
  $region5: #{pvt_attention.1} parent=0 // loop_body
    %s20 = ssub.s32 %s15, 1
    %s21 = ssub.s32 %s15, 2
    %s28 = sadd.s32 1, %s23
    %p29 = scmp.ge.s32.totalorder %s28, 1
    %s30 = scalar_select %p29, 0, %s28
    %s31 = sadd.s32 1, %s22
    %s32 = scalar_select %p29, %s31, %s22
    %p33 = scmp.ge.s32.totalorder %s32, 2
    %s34 = scalar_select %p33, 0, %s32
    %s35 = ssub.s32 %s22, %s34
    %p36 = scmp.eq.s32.totalorder %s35, 0
    %s38 = sadd.s32 %s37, 1
    %s39 = scalar_select %p36, %s37, %s38
    %p42 = pneg %p36
    %p43 = scmp.eq.s32.totalorder %s15, 1
    %p44 = por %p42, %p43
    %p45 = scmp.ne.s32.totalorder %s37, %s40
    %p46 = scmp.eq.s32.totalorder %s15, 0
    %p47 = por %p45, %p46
    %p48 = scmp.ne.s32.totalorder %s37, %s40
    %p49 = scmp.eq.s32.totalorder %s20, 1
    %p50 = por %p48, %p49
    %p51 = scmp.ne.s32.totalorder %s40, %s41
    %p52 = scmp.eq.s32.totalorder %s20, 0
    %p53 = por %p51, %p52
    %p54 = scmp.ne.s32.totalorder %s40, %s41
    %p55 = scmp.eq.s32.totalorder %s21, 1
    %p56 = por %p54, %p55
    %p58 = scmp.ne.s32.totalorder %s41, %s57
    %p59 = scmp.eq.s32.totalorder %s21, 0
    %p60 = por %p58, %p59
    %s62 = sadd.s32 %s61, 1
    %p65 = scmp.eq.s32.totalorder %s15, 1
    %p66 = scmp.ne.s32.totalorder %s61, %s63
    %p67 = scmp.eq.s32.totalorder %s15, 0
    %p68 = por %p66, %p67
    %p69 = scmp.ne.s32.totalorder %s61, %s63
    %p70 = scmp.eq.s32.totalorder %s20, 1
    %p71 = por %p69, %p70
    %p72 = scmp.ne.s32.totalorder %s63, %s64
    %p73 = scmp.eq.s32.totalorder %s20, 0
    %p74 = por %p72, %p73
    %p75 = scmp.ne.s32.totalorder %s63, %s64
    %p76 = scmp.eq.s32.totalorder %s21, 1
    %p77 = por %p75, %p76
    %p79 = scmp.ne.s32.totalorder %s64, %s78
    %p80 = scmp.eq.s32.totalorder %s21, 0
    %p81 = por %p79, %p80
    %s83 = sadd.s32 %s82, 1
    %p86 = scmp.eq.s32.totalorder %s15, 1
    %p87 = scmp.ne.s32.totalorder %s82, %s84
    %p88 = scmp.eq.s32.totalorder %s15, 0
    %p89 = por %p87, %p88
    %p90 = scmp.ne.s32.totalorder %s82, %s84
    %p91 = scmp.eq.s32.totalorder %s20, 1
    %p92 = por %p90, %p91
    %p93 = scmp.ne.s32.totalorder %s84, %s85
    %p94 = scmp.eq.s32.totalorder %s20, 0
    %p95 = por %p93, %p94
    %p96 = scmp.ne.s32.totalorder %s84, %s85
    %p97 = scmp.eq.s32.totalorder %s21, 1
    %p98 = por %p96, %p97
    %p100 = scmp.ne.s32.totalorder %s85, %s99
    %p101 = scmp.eq.s32.totalorder %s21, 0
    %p102 = por %p100, %p101
    %s104 = sadd.s32 %s103, 1
    %p107 = scmp.eq.s32.totalorder %s15, 1
    %p108 = scmp.ne.s32.totalorder %s103, %s105
    %p109 = scmp.eq.s32.totalorder %s15, 0
    %p110 = por %p108, %p109
    %p111 = scmp.ne.s32.totalorder %s103, %s105
    %p112 = scmp.eq.s32.totalorder %s20, 1
    %p113 = por %p111, %p112
    %p114 = scmp.ne.s32.totalorder %s105, %s106
    %p115 = scmp.eq.s32.totalorder %s20, 0
    %p116 = por %p114, %p115
    %p117 = scmp.ne.s32.totalorder %s105, %s106
    %p118 = scmp.eq.s32.totalorder %s21, 1
    %p119 = por %p117, %p118
    %p121 = scmp.ne.s32.totalorder %s106, %s120
    %p122 = scmp.eq.s32.totalorder %s21, 0
    %p123 = por %p121, %p122
    %s125 = sadd.s32 %s124, 1
    %p128 = scmp.eq.s32.totalorder %s15, 1
    %p129 = scmp.ne.s32.totalorder %s124, %s126
    %p130 = scmp.eq.s32.totalorder %s15, 0
    %p131 = por %p129, %p130
    %p132 = scmp.ne.s32.totalorder %s124, %s126
    %p133 = scmp.eq.s32.totalorder %s20, 1
    %p134 = por %p132, %p133
    %p135 = scmp.ne.s32.totalorder %s126, %s127
    %p136 = scmp.eq.s32.totalorder %s20, 0
    %p137 = por %p135, %p136
    %p138 = scmp.ne.s32.totalorder %s126, %s127
    %p139 = scmp.eq.s32.totalorder %s21, 1
    %p140 = por %p138, %p139
    %p142 = scmp.ne.s32.totalorder %s127, %s141
    %p143 = scmp.eq.s32.totalorder %s21, 0
    %p144 = por %p142, %p143
    %s146 = sadd.s32 %s145, 1
    %p149 = scmp.eq.s32.totalorder %s15, 1
    %p150 = scmp.ne.s32.totalorder %s145, %s147
    %p151 = scmp.eq.s32.totalorder %s15, 0
    %p152 = por %p150, %p151
    %p153 = scmp.ne.s32.totalorder %s145, %s147
    %p154 = scmp.eq.s32.totalorder %s20, 1
    %p155 = por %p153, %p154
    %p156 = scmp.ne.s32.totalorder %s147, %s148
    %p157 = scmp.eq.s32.totalorder %s20, 0
    %p158 = por %p156, %p157
    %p159 = scmp.ne.s32.totalorder %s147, %s148
    %p160 = scmp.eq.s32.totalorder %s21, 1
    %p161 = por %p159, %p160
    %p163 = scmp.ne.s32.totalorder %s148, %s162
    %p164 = scmp.eq.s32.totalorder %s21, 0
    %p165 = por %p163, %p164
    %s167 = sadd.s32 %s166, 1
    %p170 = scmp.eq.s32.totalorder %s15, 1
    %p171 = scmp.ne.s32.totalorder %s166, %s168
    %p172 = scmp.eq.s32.totalorder %s15, 0
    %p173 = por %p171, %p172
    %p174 = scmp.ne.s32.totalorder %s166, %s168
    %p175 = scmp.eq.s32.totalorder %s20, 1
    %p176 = por %p174, %p175
    %p177 = scmp.ne.s32.totalorder %s168, %s169
    %p178 = scmp.eq.s32.totalorder %s20, 0
    %p179 = por %p177, %p178
    %p180 = scmp.ne.s32.totalorder %s168, %s169
    %p181 = scmp.eq.s32.totalorder %s21, 1
    %p182 = por %p180, %p181
    %p184 = scmp.ne.s32.totalorder %s169, %s183
    %p185 = scmp.eq.s32.totalorder %s21, 0
    %p186 = por %p184, %p185
    %s188 = sadd.s32 %s187, 1
    %p191 = scmp.eq.s32.totalorder %s15, 1
    %p192 = scmp.ne.s32.totalorder %s187, %s189
    %p193 = scmp.eq.s32.totalorder %s15, 0
    %p194 = por %p192, %p193
    %p195 = scmp.ne.s32.totalorder %s187, %s189
    %p196 = scmp.eq.s32.totalorder %s20, 1
    %p197 = por %p195, %p196
    %p198 = scmp.ne.s32.totalorder %s189, %s190
    %p199 = scmp.eq.s32.totalorder %s20, 0
    %p200 = por %p198, %p199
    %p201 = scmp.ne.s32.totalorder %s189, %s190
    %p202 = scmp.eq.s32.totalorder %s21, 1
    %p203 = por %p201, %p202
    %p205 = scmp.ne.s32.totalorder %s190, %s204
    %p206 = scmp.eq.s32.totalorder %s21, 0
    %p207 = por %p205, %p206
    %s209 = sadd.s32 %s208, 1
    %p212 = scmp.eq.s32.totalorder %s15, 1
    %p213 = scmp.ne.s32.totalorder %s208, %s210
    %p214 = scmp.eq.s32.totalorder %s15, 0
    %p215 = por %p213, %p214
    %p216 = scmp.ne.s32.totalorder %s208, %s210
    %p217 = scmp.eq.s32.totalorder %s20, 1
    %p218 = por %p216, %p217
    %p219 = scmp.ne.s32.totalorder %s210, %s211
    %p220 = scmp.eq.s32.totalorder %s20, 0
    %p221 = por %p219, %p220
    %p222 = scmp.ne.s32.totalorder %s210, %s211
    %p223 = scmp.eq.s32.totalorder %s21, 1
    %p224 = por %p222, %p223
    %p226 = scmp.ne.s32.totalorder %s211, %s225
    %p227 = scmp.eq.s32.totalorder %s21, 0
    %p228 = por %p226, %p227
    %s229 = ssub.s32 %s22, %s34
    %s230 = ssub.s32 %s23, %s30
    %s231 = sor.u32 %s229, %s230
    %p232 = scmp.eq.s32.totalorder %s231, 0
    %s234 = sadd.s32 %s233, 1
    %s235 = scalar_select %p232, %s233, %s234
    %p238 = pneg %p232
    %p239 = scmp.eq.s32.totalorder %s15, 1
    %p240 = por %p238, %p239
    %p241 = scmp.ne.s32.totalorder %s233, %s236
    %p242 = scmp.eq.s32.totalorder %s15, 0
    %p243 = por %p241, %p242
    %p244 = scmp.ne.s32.totalorder %s233, %s236
    %p245 = scmp.eq.s32.totalorder %s20, 1
    %p246 = por %p244, %p245
    %p247 = scmp.ne.s32.totalorder %s236, %s237
    %p248 = scmp.eq.s32.totalorder %s20, 0
    %p249 = por %p247, %p248
    %p250 = scmp.ne.s32.totalorder %s236, %s237
    %p251 = scmp.eq.s32.totalorder %s21, 1
    %p252 = por %p250, %p251
    %p254 = scmp.ne.s32.totalorder %s237, %s253
    %p255 = scmp.eq.s32.totalorder %s21, 0
    %p256 = por %p254, %p255
    %p257 = scmp.le.s32.totalorder 1, %s15
    %p258 = scmp.lt.s32.totalorder %s15, 3
    %p259 = pnand %p257, %p258
    %p260 = pneg %p259
    // Predicated region
    $region9: #{pvt_attention.1} parent=5 // pred_check
      _
    $region10: #{pvt_attention.1} parent=5 // pred_check_branch
      %262 = sbr.rel (%p259) target = $region12
    $region11: #{pvt_attention.1} parent=5 // pred_region
      %s263 = ssub.s32 %s15, 1
      // Predicated region
      $region13: #{pvt_attention.1} parent=11 // pred_check
        %p264 = pneg %p74
      $region14: #{pvt_attention.1} parent=11 // pred_check_branch
        %266 = sbr.rel (%p264) target = $region16
      $region15: #{pvt_attention.1} parent=11 // pred_region
        _
      $region16: #{pvt_attention.1} parent=11 // pred_fallthru
        _
      // Predicated region
      $region17: #{pvt_attention.1} parent=11 // pred_check
        %p267 = pneg %p95
      $region18: #{pvt_attention.1} parent=11 // pred_check_branch
        %269 = sbr.rel (%p267) target = $region20
      $region19: #{pvt_attention.1} parent=11 // pred_region
        _
      $region20: #{pvt_attention.1} parent=11 // pred_fallthru
        _
      // Predicated region
      $region21: #{pvt_attention.1} parent=11 // pred_check
        %p270 = pneg %p116
      $region22: #{pvt_attention.1} parent=11 // pred_check_branch
        %272 = sbr.rel (%p270) target = $region24
      $region23: #{pvt_attention.1} parent=11 // pred_region
        _
      $region24: #{pvt_attention.1} parent=11 // pred_fallthru
        _
      // Predicated region
      $region25: #{pvt_attention.1} parent=11 // pred_check
        %p273 = pneg %p137
      $region26: #{pvt_attention.1} parent=11 // pred_check_branch
        %275 = sbr.rel (%p273) target = $region28
      $region27: #{pvt_attention.1} parent=11 // pred_region
        _
      $region28: #{pvt_attention.1} parent=11 // pred_fallthru
        _
      // Predicated region
      $region29: #{pvt_attention.1} parent=11 // pred_check
        %p276 = pneg %p158
      $region30: #{pvt_attention.1} parent=11 // pred_check_branch
        %278 = sbr.rel (%p276) target = $region32
      $region31: #{pvt_attention.1} parent=11 // pred_region
        _
      $region32: #{pvt_attention.1} parent=11 // pred_fallthru
        _
      // Predicated region
      $region33: #{pvt_attention.1} parent=11 // pred_check
        %p279 = pneg %p179
      $region34: #{pvt_attention.1} parent=11 // pred_check_branch
        %281 = sbr.rel (%p279) target = $region36
      $region35: #{pvt_attention.1} parent=11 // pred_region
        _
      $region36: #{pvt_attention.1} parent=11 // pred_fallthru
        _
      // Predicated region
      $region37: #{pvt_attention.1} parent=11 // pred_check
        %p282 = pneg %p200
      $region38: #{pvt_attention.1} parent=11 // pred_check_branch
        %284 = sbr.rel (%p282) target = $region40
      $region39: #{pvt_attention.1} parent=11 // pred_region
        _
      $region40: #{pvt_attention.1} parent=11 // pred_fallthru
        _
      // Predicated region
      $region41: #{pvt_attention.1} parent=11 // pred_check
        %p285 = pneg %p221
      $region42: #{pvt_attention.1} parent=11 // pred_check_branch
        %287 = sbr.rel (%p285) target = $region44
      $region43: #{pvt_attention.1} parent=11 // pred_region
        _
      $region44: #{pvt_attention.1} parent=11 // pred_fallthru
        _
    $region12: #{pvt_attention.1} parent=5 // pred_fallthru
      _
    %p288 = scmp.lt.s32.totalorder %s15, 2
    // Predicated region
    $region45: #{pvt_attention.1} parent=5 // pred_check
      %p289 = pneg %p288
    $region46: #{pvt_attention.1} parent=5 // pred_check_branch
      %291 = sbr.rel (%p289) target = $region48
    $region47: #{pvt_attention.1} parent=5 // pred_region
      // Predicated region
      $region49: #{pvt_attention.1} parent=47 // pred_check
        %p292 = pneg %p47
      $region50: #{pvt_attention.1} parent=47 // pred_check_branch
        %294 = sbr.rel (%p292) target = $region52
      $region51: #{pvt_attention.1} parent=47 // pred_region
        %p295 = scmp.lt.s32.totalorder %s22, 1
        %s296 = scalar_select %p295, %s22, 1
        %s297 = smul.addr %s296, 16
        %s298 = smul.addr %s297, 4
        %s299 = scalar_lea.vmem %s0, %s298
      $region52: #{pvt_attention.1} parent=47 // pred_fallthru
        _
    $region48: #{pvt_attention.1} parent=5 // pred_fallthru
      _
    %p300 = scmp.le.s32.totalorder 1, %s15
    %p301 = scmp.lt.s32.totalorder %s15, 3
    %p302 = pnand %p300, %p301
    %p303 = pneg %p302
    // Predicated region
    $region53: #{pvt_attention.1} parent=5 // pred_check
      _
    $region54: #{pvt_attention.1} parent=5 // pred_check_branch
      %305 = sbr.rel (%p302) target = $region56
    $region55: #{pvt_attention.1} parent=5 // pred_region
      %s306 = ssub.s32 %s15, 1
      %p307 = scmp.lt.s32.totalorder %s24, 1
      %s308 = scalar_select %p307, %s24, 1
      %s309 = smul.addr %s308, 16
      %s310 = smul.addr %s309, 4
      %s311 = scalar_lea.vmem %s0, %s310
      %p312 = pneg %p53
      %p313 = pneg %p50
      %p314 = pneg %p74
      %p315 = pneg %p71
      %p316 = pneg %p95
      %p317 = pneg %p92
      %p318 = pneg %p116
      %p319 = pneg %p113
      %p320 = pneg %p137
      %p321 = pneg %p134
      %p322 = pneg %p158
      %p323 = pneg %p155
      %p324 = pneg %p179
      %p325 = pneg %p176
      %p326 = pneg %p200
      %p327 = pneg %p197
      %p328 = pneg %p221
      %p329 = pneg %p218
      %p330 = pneg %p249
      %p331 = pneg %p246
      %s332 = smul.u32 16, %s25
      %p333 = scmp.lt.s32.totalorder %s24, 1
      %s334 = scalar_select %p333, %s24, 1
      %p335 = scmp.lt.s32.totalorder %s332, 15
      %s336 = scalar_select %p335, %s332, 15
      %s337 = smul.addr %s334, 16
      %s338 = sadd.s32 %s336, %s337
      %s339 = smul.addr %s338, 8
      %s340 = scalar_lea.vmem %s9, %s339
      %p341 = scmp.lt.s32.totalorder %s24, 1
      %s342 = scalar_select %p341, %s24, 1
      %s343 = smul.addr %s342, 16
      %s344 = smul.addr %s343, 4
      %s345 = scalar_lea.vmem %s0, %s344
      %s346 = smul.u32 16, %s25
      %p347 = scmp.lt.s32.totalorder %s24, 1
      %s348 = scalar_select %p347, %s24, 1
      %p349 = scmp.lt.s32.totalorder %s346, 15
      %s350 = scalar_select %p349, %s346, 15
      %s351 = smul.addr %s348, 16
      %s352 = sadd.s32 %s350, %s351
      %s353 = smul.addr %s352, 8
      %s354 = scalar_lea.vmem %s9, %s353
      %s355 = smul.u32 16, %s25
      %v357 = vld [vmem:[%s345] sm:$0xf]
      %v358 = vld [vmem:[%s345 + $0x4] sm:$0xf]
      %v359 = vld [vmem:[%s345 + $0x8] sm:$0xf]
      %v360 = vld [vmem:[%s345 + $0xc] sm:$0xf]
      %v361 = vld [vmem:[%s345 + $0x10] sm:$0xf]
      %v362 = vld [vmem:[%s345 + $0x14] sm:$0xf]
      %v363 = vld [vmem:[%s345 + $0x18] sm:$0xf]
      %v364 = vld [vmem:[%s345 + $0x1c] sm:$0xf]
      %v365 = vld [vmem:[%s345 + $0x20] sm:$0xf]
      %v366 = vld [vmem:[%s345 + $0x24] sm:$0xf]
      %v367 = vld [vmem:[%s345 + $0x28] sm:$0xf]
      %v368 = vld [vmem:[%s345 + $0x2c] sm:$0xf]
      %v369 = vld [vmem:[%s345 + $0x30] sm:$0xf]
      %v370 = vld [vmem:[%s345 + $0x34] sm:$0xf]
      %v371 = vld [vmem:[%s345 + $0x38] sm:$0xf]
      %v372 = vld [vmem:[%s345 + $0x3c] sm:$0xf]
      %v373 = vld [vmem:[%s3] sm:$0xf]
      %v374 = vld [vmem:[%s3 + $0x4] sm:$0xf]
      %v375 = vld [vmem:[%s3 + $0x8] sm:$0xf]
      %v376 = vld [vmem:[%s3 + $0xc] sm:$0xf]
      %v377 = vld [vmem:[%s4] sm:$0x1]
      %v379 = vlaneseq
      %v380 = vshrl.u32 %v379, 7
      %v381 = vsub.s32 0, %v380
      %v382 = vrot.slane %v377, %v381
      %v400 = vunpack.c.l.b16 %v357
      %v401 = vunpack.c.l.b16 %v358
      %v402 = vunpack.c.l.b16 %v359
      %v403 = vunpack.c.l.b16 %v360
      %v404 = vunpack.c.l.b16 %v361
      %v405 = vunpack.c.l.b16 %v362
      %v406 = vunpack.c.l.b16 %v363
      %v407 = vunpack.c.l.b16 %v364
      %v408 = vunpack.c.l.b16 %v365
      %v409 = vunpack.c.l.b16 %v366
      %v410 = vunpack.c.l.b16 %v367
      %v411 = vunpack.c.l.b16 %v368
      %v412 = vunpack.c.l.b16 %v369
      %v413 = vunpack.c.l.b16 %v370
      %v414 = vunpack.c.l.b16 %v371
      %v415 = vunpack.c.l.b16 %v372
      %v416 = vpack.c.b16 %v401, %v400
      %v417 = vpack.c.b16 %v403, %v402
      %v418 = vpack.c.b16 %v405, %v404
      %v419 = vpack.c.b16 %v407, %v406
      %v420 = vpack.c.b16 %v409, %v408
      %v421 = vpack.c.b16 %v411, %v410
      %v422 = vpack.c.b16 %v413, %v412
      %v423 = vpack.c.b16 %v415, %v414
      %v428 = vunpack.c.l.b16 %v373
      %v429 = vunpack.c.l.b16 %v374
      %v430 = vunpack.c.l.b16 %v375
      %v431 = vunpack.c.l.b16 %v376
      %v432 = vpack.c.b16 %v429, %v428
      %v433 = vpack.c.b16 %v431, %v430
      %vm436 = vcmask 261120
      %v438 = vsel %vm436, %v416, 0
      %v441 = vsel %vm436, %v417, 0
      %v444 = vsel %vm436, %v418, 0
      %v447 = vsel %vm436, %v419, 0
      %v450 = vsel %vm436, %v420, 0
      %v453 = vsel %vm436, %v421, 0
      %v456 = vsel %vm436, %v422, 0
      %v459 = vsel %vm436, %v423, 0
      %461 = vmatprep.subr.bf16.mxu0 0
      %462 = vmatpush1.bf16.msra.mxu0 0
      %463 = vmatprep.subr.bf16.mxu0 0
      %464 = vmatpush1.bf16.msra.mxu0 0
      %465 = vmatprep.subr.bf16.mxu0 0
      %466 = vmatpush1.bf16.msra.mxu0 0
      %467 = vmatprep.subr.bf16.mxu0 0
      %468 = vmatpush1.bf16.msra.mxu0 0
      %469 = vmatprep.subr.bf16.mxu0 0
      %470 = vmatpush1.bf16.msra.mxu0 0
      %471 = vmatprep.subr.bf16.mxu0 0
      %472 = vmatpush1.bf16.msra.mxu0 0
      %473 = vmatprep.subr.bf16.mxu0 0
      %474 = vmatpush1.bf16.msra.mxu0 %v433
      %475 = vmatprep.subr.bf16.mxu0 0
      %476 = vmatpush1.bf16.msra.mxu0 %v432
      %477 = vmatprep.subr.bf16.mxu0 0
      %478 = vmatpush2.bf16.msra.mxu0 0
      %479 = vmatprep.subr.bf16.mxu0 0
      %480 = vmatpush2.bf16.msra.mxu0 0
      %481 = vmatprep.subr.bf16.mxu0 0
      %482 = vmatpush2.bf16.msra.mxu0 0
      %483 = vmatprep.subr.bf16.mxu0 0
      %484 = vmatpush2.bf16.msra.mxu0 0
      %485 = vmatprep.subr.bf16.mxu0 0
      %486 = vmatpush2.bf16.msra.mxu0 0
      %487 = vmatprep.subr.bf16.mxu0 0
      %488 = vmatpush2.bf16.msra.mxu0 0
      %489 = vmatprep.subr.bf16.mxu0 0
      %490 = vmatpush2.bf16.msra.mxu0 0
      %491 = vmatprep.subr.bf16.mxu0 0
      %492 = vmatpush2.bf16.msra.mxu0 0
      %493 = vmatprep.mubr.bf16.mxu0 0
      %494 = vmatmul.mubr.bf16.gmra.mxu0 %v438
      %v495 = vpop.f32.mrf.mxu0
      %v496 = vadd.f32 %v382, %v495
      %v497 = vpop.f32.mrf.mxu0
      %v498 = vpop.f32.mrf.mxu0
      %v499 = vadd.f32 %v382, %v498
      %v500 = vpop.f32.mrf.mxu0
      %501 = vmatprep.mubr.bf16.mxu0 0
      %502 = vmatmul.mubr.bf16.gmra.mxu0 %v441
      %v503 = vpop.f32.mrf.mxu0
      %v504 = vadd.f32 %v382, %v503
      %v505 = vpop.f32.mrf.mxu0
      %v506 = vpop.f32.mrf.mxu0
      %v507 = vadd.f32 %v382, %v506
      %v508 = vpop.f32.mrf.mxu0
      %509 = vmatprep.mubr.bf16.mxu0 0
      %510 = vmatmul.mubr.bf16.gmra.mxu0 %v444
      %v511 = vpop.f32.mrf.mxu0
      %v512 = vadd.f32 %v382, %v511
      %v513 = vpop.f32.mrf.mxu0
      %v514 = vpop.f32.mrf.mxu0
      %v515 = vadd.f32 %v382, %v514
      %v516 = vpop.f32.mrf.mxu0
      %517 = vmatprep.mubr.bf16.mxu0 0
      %518 = vmatmul.mubr.bf16.gmra.mxu0 %v447
      %v519 = vpop.f32.mrf.mxu0
      %v520 = vadd.f32 %v382, %v519
      %v521 = vpop.f32.mrf.mxu0
      %v522 = vpop.f32.mrf.mxu0
      %v523 = vadd.f32 %v382, %v522
      %v524 = vpop.f32.mrf.mxu0
      %525 = vmatprep.mubr.bf16.mxu0 0
      %526 = vmatmul.mubr.bf16.gmra.mxu0 %v450
      %v527 = vpop.f32.mrf.mxu0
      %v528 = vadd.f32 %v382, %v527
      %v529 = vpop.f32.mrf.mxu0
      %v530 = vpop.f32.mrf.mxu0
      %v531 = vadd.f32 %v382, %v530
      %v532 = vpop.f32.mrf.mxu0
      %533 = vmatprep.mubr.bf16.mxu0 0
      %534 = vmatmul.mubr.bf16.gmra.mxu0 %v453
      %v535 = vpop.f32.mrf.mxu0
      %v536 = vadd.f32 %v382, %v535
      %v537 = vpop.f32.mrf.mxu0
      %v538 = vpop.f32.mrf.mxu0
      %v539 = vadd.f32 %v382, %v538
      %v540 = vpop.f32.mrf.mxu0
      %541 = vmatprep.mubr.bf16.mxu0 0
      %542 = vmatmul.mubr.bf16.gmra.mxu0 %v456
      %v543 = vpop.f32.mrf.mxu0
      %v544 = vadd.f32 %v382, %v543
      %v545 = vpop.f32.mrf.mxu0
      %v546 = vpop.f32.mrf.mxu0
      %v547 = vadd.f32 %v382, %v546
      %v548 = vpop.f32.mrf.mxu0
      %549 = vmatprep.mubr.bf16.mxu0 0
      %550 = vmatmul.mubr.bf16.gmra.mxu0 %v459
      %v551 = vpop.f32.mrf.mxu0
      %v552 = vadd.f32 %v382, %v551
      %v553 = vpop.f32.mrf.mxu0
      %v554 = vpop.f32.mrf.mxu0
      %v555 = vadd.f32 %v382, %v554
      %v556 = vpop.f32.mrf.mxu0
      %557 = vdwg.mxu0
      %558 = vxpose.xlu0.b32.start [1/16] %v496, 128
      %559 = vxpose.xlu0.b32.cont [2/16] %v499, 128
      %560 = vxpose.xlu0.b32.cont [3/16] %v504, 128
      %561 = vxpose.xlu0.b32.cont [4/16] %v507, 128
      %562 = vxpose.xlu0.b32.cont [5/16] %v512, 128
      %563 = vxpose.xlu0.b32.cont [6/16] %v515, 128
      %564 = vxpose.xlu0.b32.cont [7/16] %v520, 128
      %565 = vxpose.xlu0.b32.cont [8/16] %v523, 128
      %566 = vxpose.xlu0.b32.cont [9/16] %v528, 128
      %567 = vxpose.xlu0.b32.cont [10/16] %v531, 128
      %568 = vxpose.xlu0.b32.cont [11/16] %v536, 128
      %569 = vxpose.xlu0.b32.cont [12/16] %v539, 128
      %570 = vxpose.xlu0.b32.cont [13/16] %v544, 128
      %571 = vxpose.xlu0.b32.cont [14/16] %v547, 128
      %572 = vxpose.xlu0.b32.cont [15/16] %v552, 128
      %573 = vxpose.xlu0.b32.end [16/16] %v555, 128
      %v574 = vpop.trf.xlu0
      %v575 = vpop.trf.xlu0
      %v576 = vpop.trf.xlu0
      %v577 = vpop.trf.xlu0
      %v578 = vpop.trf.xlu0
      %v579 = vpop.trf.xlu0
      %v580 = vpop.trf.xlu0
      %v581 = vpop.trf.xlu0
      %v582 = vpop.trf.xlu0
      %v583 = vpop.trf.xlu0
      %v584 = vpop.trf.xlu0
      %v585 = vpop.trf.xlu0
      %v586 = vpop.trf.xlu0
      %v587 = vpop.trf.xlu0
      %v588 = vpop.trf.xlu0
      %v589 = vpop.trf.xlu0
      %v590 = vpack.c.bf16 %v575, %v574
      %v591 = vpack.c.bf16 %v577, %v576
      %v594 = vunpack.c.l.b16 %v590
      %v595 = vunpack.c.h.b16 %v590
      %v596 = vunpack.c.l.b16 %v591
      %v597 = vunpack.c.h.b16 %v591
      %v598 = vpack.c.b16 %v594, %v594
      %v599 = vpack.c.b16 %v595, %v595
      %v600 = vpack.c.b16 %v596, %v596
      %v601 = vpack.c.b16 %v597, %v597
      %606 = vst [vmem:[#allocation2] sm:$0xf] %v598
      %607 = vst [vmem:[#allocation2 + $0x4] sm:$0xf] %v599
      %608 = vst [vmem:[#allocation2 + $0x8] sm:$0xf] %v600
      %609 = vst [vmem:[#allocation2 + $0xc] sm:$0xf] %v601
      %v610 = vld [vmem:[%s5] sm:$0xf]
      %v611 = vld [vmem:[%s5 + $0x4] sm:$0xf]
      %v612 = vld [vmem:[%s5 + $0x8] sm:$0xf]
      %v613 = vld [vmem:[%s5 + $0xc] sm:$0xf]
      %v614 = vld [vmem:[%s6] sm:$0x1]
      %v616 = vlaneseq
      %v617 = vshrl.u32 %v616, 7
      %v618 = vsub.s32 0, %v617
      %v619 = vrot.slane %v614, %v618
      %v625 = vunpack.c.l.b16 %v610
      %v626 = vunpack.c.l.b16 %v611
      %v627 = vunpack.c.l.b16 %v612
      %v628 = vunpack.c.l.b16 %v613
      %v629 = vpack.c.b16 %v626, %v625
      %v630 = vpack.c.b16 %v628, %v627
      %633 = vmatprep.subr.bf16.mxu0 0
      %634 = vmatpush1.bf16.msra.mxu0 0
      %635 = vmatprep.subr.bf16.mxu0 0
      %636 = vmatpush1.bf16.msra.mxu0 0
      %637 = vmatprep.subr.bf16.mxu0 0
      %638 = vmatpush1.bf16.msra.mxu0 0
      %639 = vmatprep.subr.bf16.mxu0 0
      %640 = vmatpush1.bf16.msra.mxu0 0
      %641 = vmatprep.subr.bf16.mxu0 0
      %642 = vmatpush1.bf16.msra.mxu0 0
      %643 = vmatprep.subr.bf16.mxu0 0
      %644 = vmatpush1.bf16.msra.mxu0 0
      %645 = vmatprep.subr.bf16.mxu0 0
      %646 = vmatpush1.bf16.msra.mxu0 %v630
      %647 = vmatprep.subr.bf16.mxu0 0
      %648 = vmatpush1.bf16.msra.mxu0 %v629
      %649 = vmatprep.subr.bf16.mxu0 0
      %650 = vmatpush2.bf16.msra.mxu0 0
      %651 = vmatprep.subr.bf16.mxu0 0
      %652 = vmatpush2.bf16.msra.mxu0 0
      %653 = vmatprep.subr.bf16.mxu0 0
      %654 = vmatpush2.bf16.msra.mxu0 0
      %655 = vmatprep.subr.bf16.mxu0 0
      %656 = vmatpush2.bf16.msra.mxu0 0
      %657 = vmatprep.subr.bf16.mxu0 0
      %658 = vmatpush2.bf16.msra.mxu0 0
      %659 = vmatprep.subr.bf16.mxu0 0
      %660 = vmatpush2.bf16.msra.mxu0 0
      %661 = vmatprep.subr.bf16.mxu0 0
      %662 = vmatpush2.bf16.msra.mxu0 0
      %663 = vmatprep.subr.bf16.mxu0 0
      %664 = vmatpush2.bf16.msra.mxu0 0
      %665 = vmatprep.mubr.bf16.mxu0 0
      %666 = vmatmul.mubr.bf16.gmra.mxu0 %v438
      %v667 = vpop.f32.mrf.mxu0
      %v668 = vadd.f32 %v619, %v667
      %v669 = vpop.f32.mrf.mxu0
      %v670 = vpop.f32.mrf.mxu0
      %v671 = vadd.f32 %v619, %v670
      %v672 = vpop.f32.mrf.mxu0
      %673 = vmatprep.mubr.bf16.mxu0 0
      %674 = vmatmul.mubr.bf16.gmra.mxu0 %v441
      %v675 = vpop.f32.mrf.mxu0
      %v676 = vadd.f32 %v619, %v675
      %v677 = vpop.f32.mrf.mxu0
      %v678 = vpop.f32.mrf.mxu0
      %v679 = vadd.f32 %v619, %v678
      %v680 = vpop.f32.mrf.mxu0
      %681 = vmatprep.mubr.bf16.mxu0 0
      %682 = vmatmul.mubr.bf16.gmra.mxu0 %v444
      %v683 = vpop.f32.mrf.mxu0
      %v684 = vadd.f32 %v619, %v683
      %v685 = vpop.f32.mrf.mxu0
      %v686 = vpop.f32.mrf.mxu0
      %v687 = vadd.f32 %v619, %v686
      %v688 = vpop.f32.mrf.mxu0
      %689 = vmatprep.mubr.bf16.mxu0 0
      %690 = vmatmul.mubr.bf16.gmra.mxu0 %v447
      %v691 = vpop.f32.mrf.mxu0
      %v692 = vadd.f32 %v619, %v691
      %v693 = vpop.f32.mrf.mxu0
      %v694 = vpop.f32.mrf.mxu0
      %v695 = vadd.f32 %v619, %v694
      %v696 = vpop.f32.mrf.mxu0
      %697 = vmatprep.mubr.bf16.mxu0 0
      %698 = vmatmul.mubr.bf16.gmra.mxu0 %v450
      %v699 = vpop.f32.mrf.mxu0
      %v700 = vadd.f32 %v619, %v699
      %v701 = vpop.f32.mrf.mxu0
      %v702 = vpop.f32.mrf.mxu0
      %v703 = vadd.f32 %v619, %v702
      %v704 = vpop.f32.mrf.mxu0
      %705 = vmatprep.mubr.bf16.mxu0 0
      %706 = vmatmul.mubr.bf16.gmra.mxu0 %v453
      %v707 = vpop.f32.mrf.mxu0
      %v708 = vadd.f32 %v619, %v707
      %v709 = vpop.f32.mrf.mxu0
      %v710 = vpop.f32.mrf.mxu0
      %v711 = vadd.f32 %v619, %v710
      %v712 = vpop.f32.mrf.mxu0
      %713 = vmatprep.mubr.bf16.mxu0 0
      %714 = vmatmul.mubr.bf16.gmra.mxu0 %v456
      %v715 = vpop.f32.mrf.mxu0
      %v716 = vadd.f32 %v619, %v715
      %v717 = vpop.f32.mrf.mxu0
      %v718 = vpop.f32.mrf.mxu0
      %v719 = vadd.f32 %v619, %v718
      %v720 = vpop.f32.mrf.mxu0
      %721 = vmatprep.mubr.bf16.mxu0 0
      %722 = vmatmul.mubr.bf16.gmra.mxu0 %v459
      %v723 = vpop.f32.mrf.mxu0
      %v724 = vadd.f32 %v619, %v723
      %v725 = vpop.f32.mrf.mxu0
      %v726 = vpop.f32.mrf.mxu0
      %v727 = vadd.f32 %v619, %v726
      %v728 = vpop.f32.mrf.mxu0
      %729 = vdwg.mxu0
      %v730 = vpack.c.bf16 %v671, %v668
      %v731 = vpack.c.bf16 %v679, %v676
      %v732 = vpack.c.bf16 %v687, %v684
      %v733 = vpack.c.bf16 %v695, %v692
      %v734 = vpack.c.bf16 %v703, %v700
      %v735 = vpack.c.bf16 %v711, %v708
      %v736 = vpack.c.bf16 %v719, %v716
      %v737 = vpack.c.bf16 %v727, %v724
      %v746 = vunpack.c.l.b16 %v730
      %v747 = vunpack.c.h.b16 %v730
      %v748 = vunpack.c.l.b16 %v731
      %v749 = vunpack.c.h.b16 %v731
      %v750 = vunpack.c.l.b16 %v732
      %v751 = vunpack.c.h.b16 %v732
      %v752 = vunpack.c.l.b16 %v733
      %v753 = vunpack.c.h.b16 %v733
      %v754 = vunpack.c.l.b16 %v734
      %v755 = vunpack.c.h.b16 %v734
      %v756 = vunpack.c.l.b16 %v735
      %v757 = vunpack.c.h.b16 %v735
      %v758 = vunpack.c.l.b16 %v736
      %v759 = vunpack.c.h.b16 %v736
      %v760 = vunpack.c.l.b16 %v737
      %v761 = vunpack.c.h.b16 %v737
      %v762 = vpack.c.b16 %v746, %v746
      %v763 = vpack.c.b16 %v747, %v747
      %v764 = vpack.c.b16 %v748, %v748
      %v765 = vpack.c.b16 %v749, %v749
      %v766 = vpack.c.b16 %v750, %v750
      %v767 = vpack.c.b16 %v751, %v751
      %v768 = vpack.c.b16 %v752, %v752
      %v769 = vpack.c.b16 %v753, %v753
      %v770 = vpack.c.b16 %v754, %v754
      %v771 = vpack.c.b16 %v755, %v755
      %v772 = vpack.c.b16 %v756, %v756
      %v773 = vpack.c.b16 %v757, %v757
      %v774 = vpack.c.b16 %v758, %v758
      %v775 = vpack.c.b16 %v759, %v759
      %v776 = vpack.c.b16 %v760, %v760
      %v777 = vpack.c.b16 %v761, %v761
      %vm794 = vcmask 257024
      %795 = vst.msk [vmem:[#allocation3] sm:$0xf] %vm794, %v762
      %796 = vst.msk [vmem:[#allocation3 + $0x4] sm:$0xf] %vm794, %v763
      %797 = vst.msk [vmem:[#allocation3 + $0x8] sm:$0xf] %vm794, %v764
      %798 = vst.msk [vmem:[#allocation3 + $0xc] sm:$0xf] %vm794, %v765
      %799 = vst.msk [vmem:[#allocation3 + $0x10] sm:$0xf] %vm794, %v766
      %800 = vst.msk [vmem:[#allocation3 + $0x14] sm:$0xf] %vm794, %v767
      %801 = vst.msk [vmem:[#allocation3 + $0x18] sm:$0xf] %vm794, %v768
      %802 = vst.msk [vmem:[#allocation3 + $0x1c] sm:$0xf] %vm794, %v769
      %803 = vst.msk [vmem:[#allocation3 + $0x20] sm:$0xf] %vm794, %v770
      %804 = vst.msk [vmem:[#allocation3 + $0x24] sm:$0xf] %vm794, %v771
      %805 = vst.msk [vmem:[#allocation3 + $0x28] sm:$0xf] %vm794, %v772
      %806 = vst.msk [vmem:[#allocation3 + $0x2c] sm:$0xf] %vm794, %v773
      %807 = vst.msk [vmem:[#allocation3 + $0x30] sm:$0xf] %vm794, %v774
      %808 = vst.msk [vmem:[#allocation3 + $0x34] sm:$0xf] %vm794, %v775
      %809 = vst.msk [vmem:[#allocation3 + $0x38] sm:$0xf] %vm794, %v776
      %810 = vst.msk [vmem:[#allocation3 + $0x3c] sm:$0xf] %vm794, %v777
      %s811 = smul.u32 %s25, 128
      %s812 = sshra.s32 %s811, 3
      %s813 = sand.u32 %s811, 7
      %s814 = smul.addr %s812, 4
      %s815 = scalar_lea.vmem %s345, %s814
      %v816 = vld [vmem:[%s815] sm:$0xf]
      %v817 = vld [vmem:[%s815 + $0x4] sm:$0xf]
      %v818 = vld [vmem:[%s815 + $0x8] sm:$0xf]
      %v819 = vld [vmem:[%s815 + $0xc] sm:$0xf]
      %v820 = vld [vmem:[%s815 + $0x10] sm:$0xf]
      %v821 = vld [vmem:[%s815 + $0x14] sm:$0xf]
      %v822 = vld [vmem:[%s815 + $0x18] sm:$0xf]
      %v823 = vld [vmem:[%s815 + $0x1c] sm:$0xf]
      %v824 = vld [vmem:[%s815 + $0x20] sm:$0xf]
      %v825 = vld [vmem:[%s815 + $0x24] sm:$0xf]
      %v826 = vld [vmem:[%s815 + $0x28] sm:$0xf]
      %v827 = vld [vmem:[%s815 + $0x2c] sm:$0xf]
      %v828 = vld [vmem:[%s815 + $0x30] sm:$0xf]
      %v829 = vld [vmem:[%s815 + $0x34] sm:$0xf]
      %v830 = vld [vmem:[%s815 + $0x38] sm:$0xf]
      %v831 = vld [vmem:[%s815 + $0x3c] sm:$0xf]
      %v832 = vld [vmem:[%s1] sm:$0xf]
      %v833 = vld [vmem:[%s1 + $0x4] sm:$0xf]
      %v834 = vld [vmem:[%s1 + $0x8] sm:$0xf]
      %v835 = vld [vmem:[%s1 + $0xc] sm:$0xf]
      %v836 = vld [vmem:[%s2] sm:$0x1]
      %v838 = vlaneseq
      %v839 = vshrl.u32 %v838, 7
      %v840 = vsub.s32 0, %v839
      %v841 = vrot.slane %v836, %v840
      %v859 = vunpack.c.l.b16 %v816
      %v860 = vunpack.c.l.b16 %v817
      %v861 = vunpack.c.l.b16 %v818
      %v862 = vunpack.c.l.b16 %v819
      %v863 = vunpack.c.l.b16 %v820
      %v864 = vunpack.c.l.b16 %v821
      %v865 = vunpack.c.l.b16 %v822
      %v866 = vunpack.c.l.b16 %v823
      %v867 = vunpack.c.l.b16 %v824
      %v868 = vunpack.c.l.b16 %v825
      %v869 = vunpack.c.l.b16 %v826
      %v870 = vunpack.c.l.b16 %v827
      %v871 = vunpack.c.l.b16 %v828
      %v872 = vunpack.c.l.b16 %v829
      %v873 = vunpack.c.l.b16 %v830
      %v874 = vunpack.c.l.b16 %v831
      %v875 = vpack.c.b16 %v860, %v859
      %v876 = vpack.c.b16 %v862, %v861
      %v877 = vpack.c.b16 %v864, %v863
      %v878 = vpack.c.b16 %v866, %v865
      %v879 = vpack.c.b16 %v868, %v867
      %v880 = vpack.c.b16 %v870, %v869
      %v881 = vpack.c.b16 %v872, %v871
      %v882 = vpack.c.b16 %v874, %v873
      %v887 = vunpack.c.l.b16 %v832
      %v888 = vunpack.c.l.b16 %v833
      %v889 = vunpack.c.l.b16 %v834
      %v890 = vunpack.c.l.b16 %v835
      %v891 = vpack.c.b16 %v888, %v887
      %v892 = vpack.c.b16 %v890, %v889
      %v896 = vsel %vm436, %v875, 0
      %v899 = vsel %vm436, %v876, 0
      %v902 = vsel %vm436, %v877, 0
      %v905 = vsel %vm436, %v878, 0
      %v908 = vsel %vm436, %v879, 0
      %v911 = vsel %vm436, %v880, 0
      %v914 = vsel %vm436, %v881, 0
      %v917 = vsel %vm436, %v882, 0
      %919 = vmatprep.subr.bf16.mxu0 0
      %920 = vmatpush1.bf16.msra.mxu0 0
      %921 = vmatprep.subr.bf16.mxu0 0
      %922 = vmatpush1.bf16.msra.mxu0 0
      %923 = vmatprep.subr.bf16.mxu0 0
      %924 = vmatpush1.bf16.msra.mxu0 0
      %925 = vmatprep.subr.bf16.mxu0 0
      %926 = vmatpush1.bf16.msra.mxu0 0
      %927 = vmatprep.subr.bf16.mxu0 0
      %928 = vmatpush1.bf16.msra.mxu0 0
      %929 = vmatprep.subr.bf16.mxu0 0
      %930 = vmatpush1.bf16.msra.mxu0 0
      %931 = vmatprep.subr.bf16.mxu0 0
      %932 = vmatpush1.bf16.msra.mxu0 %v892
      %933 = vmatprep.subr.bf16.mxu0 0
      %934 = vmatpush1.bf16.msra.mxu0 %v891
      %935 = vmatprep.subr.bf16.mxu0 0
      %936 = vmatpush2.bf16.msra.mxu0 0
      %937 = vmatprep.subr.bf16.mxu0 0
      %938 = vmatpush2.bf16.msra.mxu0 0
      %939 = vmatprep.subr.bf16.mxu0 0
      %940 = vmatpush2.bf16.msra.mxu0 0
      %941 = vmatprep.subr.bf16.mxu0 0
      %942 = vmatpush2.bf16.msra.mxu0 0
      %943 = vmatprep.subr.bf16.mxu0 0
      %944 = vmatpush2.bf16.msra.mxu0 0
      %945 = vmatprep.subr.bf16.mxu0 0
      %946 = vmatpush2.bf16.msra.mxu0 0
      %947 = vmatprep.subr.bf16.mxu0 0
      %948 = vmatpush2.bf16.msra.mxu0 0
      %949 = vmatprep.subr.bf16.mxu0 0
      %950 = vmatpush2.bf16.msra.mxu0 0
      %951 = vmatprep.mubr.bf16.mxu0 0
      %952 = vmatmul.mubr.bf16.gmra.mxu0 %v896
      %v953 = vpop.f32.mrf.mxu0
      %v954 = vadd.f32 %v841, %v953
      %v955 = vpop.f32.mrf.mxu0
      %v956 = vpop.f32.mrf.mxu0
      %v957 = vadd.f32 %v841, %v956
      %v958 = vpop.f32.mrf.mxu0
      %959 = vmatprep.mubr.bf16.mxu0 0
      %960 = vmatmul.mubr.bf16.gmra.mxu0 %v899
      %v961 = vpop.f32.mrf.mxu0
      %v962 = vadd.f32 %v841, %v961
      %v963 = vpop.f32.mrf.mxu0
      %v964 = vpop.f32.mrf.mxu0
      %v965 = vadd.f32 %v841, %v964
      %v966 = vpop.f32.mrf.mxu0
      %967 = vmatprep.mubr.bf16.mxu0 0
      %968 = vmatmul.mubr.bf16.gmra.mxu0 %v902
      %v969 = vpop.f32.mrf.mxu0
      %v970 = vadd.f32 %v841, %v969
      %v971 = vpop.f32.mrf.mxu0
      %v972 = vpop.f32.mrf.mxu0
      %v973 = vadd.f32 %v841, %v972
      %v974 = vpop.f32.mrf.mxu0
      %975 = vmatprep.mubr.bf16.mxu0 0
      %976 = vmatmul.mubr.bf16.gmra.mxu0 %v905
      %v977 = vpop.f32.mrf.mxu0
      %v978 = vadd.f32 %v841, %v977
      %v979 = vpop.f32.mrf.mxu0
      %v980 = vpop.f32.mrf.mxu0
      %v981 = vadd.f32 %v841, %v980
      %v982 = vpop.f32.mrf.mxu0
      %983 = vmatprep.mubr.bf16.mxu0 0
      %984 = vmatmul.mubr.bf16.gmra.mxu0 %v908
      %v985 = vpop.f32.mrf.mxu0
      %v986 = vadd.f32 %v841, %v985
      %v987 = vpop.f32.mrf.mxu0
      %v988 = vpop.f32.mrf.mxu0
      %v989 = vadd.f32 %v841, %v988
      %v990 = vpop.f32.mrf.mxu0
      %991 = vmatprep.mubr.bf16.mxu0 0
      %992 = vmatmul.mubr.bf16.gmra.mxu0 %v911
      %v993 = vpop.f32.mrf.mxu0
      %v994 = vadd.f32 %v841, %v993
      %v995 = vpop.f32.mrf.mxu0
      %v996 = vpop.f32.mrf.mxu0
      %v997 = vadd.f32 %v841, %v996
      %v998 = vpop.f32.mrf.mxu0
      %999 = vmatprep.mubr.bf16.mxu0 0
      %1000 = vmatmul.mubr.bf16.gmra.mxu0 %v914
      %v1001 = vpop.f32.mrf.mxu0
      %v1002 = vadd.f32 %v841, %v1001
      %v1003 = vpop.f32.mrf.mxu0
      %v1004 = vpop.f32.mrf.mxu0
      %v1005 = vadd.f32 %v841, %v1004
      %v1006 = vpop.f32.mrf.mxu0
      %1007 = vmatprep.mubr.bf16.mxu0 0
      %1008 = vmatmul.mubr.bf16.gmra.mxu0 %v917
      %v1009 = vpop.f32.mrf.mxu0
      %v1010 = vadd.f32 %v841, %v1009
      %v1011 = vpop.f32.mrf.mxu0
      %v1012 = vpop.f32.mrf.mxu0
      %v1013 = vadd.f32 %v841, %v1012
      %v1014 = vpop.f32.mrf.mxu0
      %1015 = vdwg.mxu0
      %v1016 = vmul.f32 %v954, 0.35355338
      %v1017 = vmul.f32 %v957, 0.35355338
      %v1018 = vmul.f32 %v962, 0.35355338
      %v1019 = vmul.f32 %v965, 0.35355338
      %v1020 = vmul.f32 %v970, 0.35355338
      %v1021 = vmul.f32 %v973, 0.35355338
      %v1022 = vmul.f32 %v978, 0.35355338
      %v1023 = vmul.f32 %v981, 0.35355338
      %v1024 = vmul.f32 %v986, 0.35355338
      %v1025 = vmul.f32 %v989, 0.35355338
      %v1026 = vmul.f32 %v994, 0.35355338
      %v1027 = vmul.f32 %v997, 0.35355338
      %v1028 = vmul.f32 %v1002, 0.35355338
      %v1029 = vmul.f32 %v1005, 0.35355338
      %v1030 = vmul.f32 %v1010, 0.35355338
      %v1031 = vmul.f32 %v1013, 0.35355338
      %v1032 = vpack.c.bf16 %v1017, %v1016
      %v1033 = vpack.c.bf16 %v1019, %v1018
      %v1034 = vpack.c.bf16 %v1021, %v1020
      %v1035 = vpack.c.bf16 %v1023, %v1022
      %v1036 = vpack.c.bf16 %v1025, %v1024
      %v1037 = vpack.c.bf16 %v1027, %v1026
      %v1038 = vpack.c.bf16 %v1029, %v1028
      %v1039 = vpack.c.bf16 %v1031, %v1030
      %v1048 = vunpack.c.l.b16 %v1032
      %v1049 = vunpack.c.h.b16 %v1032
      %v1050 = vunpack.c.l.b16 %v1033
      %v1051 = vunpack.c.h.b16 %v1033
      %v1052 = vunpack.c.l.b16 %v1034
      %v1053 = vunpack.c.h.b16 %v1034
      %v1054 = vunpack.c.l.b16 %v1035
      %v1055 = vunpack.c.h.b16 %v1035
      %v1056 = vunpack.c.l.b16 %v1036
      %v1057 = vunpack.c.h.b16 %v1036
      %v1058 = vunpack.c.l.b16 %v1037
      %v1059 = vunpack.c.h.b16 %v1037
      %v1060 = vunpack.c.l.b16 %v1038
      %v1061 = vunpack.c.h.b16 %v1038
      %v1062 = vunpack.c.l.b16 %v1039
      %v1063 = vunpack.c.h.b16 %v1039
      %v1064 = vpack.c.b16 %v1048, %v1048
      %v1065 = vpack.c.b16 %v1049, %v1049
      %v1066 = vpack.c.b16 %v1050, %v1050
      %v1067 = vpack.c.b16 %v1051, %v1051
      %v1068 = vpack.c.b16 %v1052, %v1052
      %v1069 = vpack.c.b16 %v1053, %v1053
      %v1070 = vpack.c.b16 %v1054, %v1054
      %v1071 = vpack.c.b16 %v1055, %v1055
      %v1072 = vpack.c.b16 %v1056, %v1056
      %v1073 = vpack.c.b16 %v1057, %v1057
      %v1074 = vpack.c.b16 %v1058, %v1058
      %v1075 = vpack.c.b16 %v1059, %v1059
      %v1076 = vpack.c.b16 %v1060, %v1060
      %v1077 = vpack.c.b16 %v1061, %v1061
      %v1078 = vpack.c.b16 %v1062, %v1062
      %v1079 = vpack.c.b16 %v1063, %v1063
      %1096 = vst.msk [vmem:[#allocation4] sm:$0xf] %vm794, %v1064
      %1097 = vst.msk [vmem:[#allocation4 + $0x4] sm:$0xf] %vm794, %v1065
      %1098 = vst.msk [vmem:[#allocation4 + $0x8] sm:$0xf] %vm794, %v1066
      %1099 = vst.msk [vmem:[#allocation4 + $0xc] sm:$0xf] %vm794, %v1067
      %1100 = vst.msk [vmem:[#allocation4 + $0x10] sm:$0xf] %vm794, %v1068
      %1101 = vst.msk [vmem:[#allocation4 + $0x14] sm:$0xf] %vm794, %v1069
      %1102 = vst.msk [vmem:[#allocation4 + $0x18] sm:$0xf] %vm794, %v1070
      %1103 = vst.msk [vmem:[#allocation4 + $0x1c] sm:$0xf] %vm794, %v1071
      %1104 = vst.msk [vmem:[#allocation4 + $0x20] sm:$0xf] %vm794, %v1072
      %1105 = vst.msk [vmem:[#allocation4 + $0x24] sm:$0xf] %vm794, %v1073
      %1106 = vst.msk [vmem:[#allocation4 + $0x28] sm:$0xf] %vm794, %v1074
      %1107 = vst.msk [vmem:[#allocation4 + $0x2c] sm:$0xf] %vm794, %v1075
      %1108 = vst.msk [vmem:[#allocation4 + $0x30] sm:$0xf] %vm794, %v1076
      %1109 = vst.msk [vmem:[#allocation4 + $0x34] sm:$0xf] %vm794, %v1077
      %1110 = vst.msk [vmem:[#allocation4 + $0x38] sm:$0xf] %vm794, %v1078
      %1111 = vst.msk [vmem:[#allocation4 + $0x3c] sm:$0xf] %vm794, %v1079
      %v1112 = vlaneseq
      %v1113 = vand.u32 %v1112, 127
      %vm1114 = vcmp.ge.s32.totalorder %v1113, 8
      %v1115 = vld [vmem:[#allocation4] sm:$0xf]
      %v1116 = vld [vmem:[#allocation4 + $0x4] sm:$0xf]
      %v1117 = vld [vmem:[#allocation4 + $0x8] sm:$0xf]
      %v1118 = vld [vmem:[#allocation4 + $0xc] sm:$0xf]
      %v1119 = vld [vmem:[#allocation4 + $0x10] sm:$0xf]
      %v1120 = vld [vmem:[#allocation4 + $0x14] sm:$0xf]
      %v1121 = vld [vmem:[#allocation4 + $0x18] sm:$0xf]
      %v1122 = vld [vmem:[#allocation4 + $0x1c] sm:$0xf]
      %v1123 = vld [vmem:[#allocation4 + $0x20] sm:$0xf]
      %v1124 = vld [vmem:[#allocation4 + $0x24] sm:$0xf]
      %v1125 = vld [vmem:[#allocation4 + $0x28] sm:$0xf]
      %v1126 = vld [vmem:[#allocation4 + $0x2c] sm:$0xf]
      %v1127 = vld [vmem:[#allocation4 + $0x30] sm:$0xf]
      %v1128 = vld [vmem:[#allocation4 + $0x34] sm:$0xf]
      %v1129 = vld [vmem:[#allocation4 + $0x38] sm:$0xf]
      %v1130 = vld [vmem:[#allocation4 + $0x3c] sm:$0xf]
      %v1131 = vld [vmem:[#allocation2] sm:$0xf]
      %v1132 = vld [vmem:[#allocation3] sm:$0xf]
      %v1133 = vld [vmem:[#allocation3 + $0x4] sm:$0xf]
      %v1134 = vld [vmem:[#allocation3 + $0x8] sm:$0xf]
      %v1135 = vld [vmem:[#allocation3 + $0xc] sm:$0xf]
      %v1136 = vld [vmem:[#allocation3 + $0x10] sm:$0xf]
      %v1137 = vld [vmem:[#allocation3 + $0x14] sm:$0xf]
      %v1138 = vld [vmem:[#allocation3 + $0x18] sm:$0xf]
      %v1139 = vld [vmem:[#allocation3 + $0x1c] sm:$0xf]
      %v1140 = vld [vmem:[#allocation3 + $0x20] sm:$0xf]
      %v1141 = vld [vmem:[#allocation3 + $0x24] sm:$0xf]
      %v1142 = vld [vmem:[#allocation3 + $0x28] sm:$0xf]
      %v1143 = vld [vmem:[#allocation3 + $0x2c] sm:$0xf]
      %v1144 = vld [vmem:[#allocation3 + $0x30] sm:$0xf]
      %v1145 = vld [vmem:[#allocation3 + $0x34] sm:$0xf]
      %v1146 = vld [vmem:[#allocation3 + $0x38] sm:$0xf]
      %v1147 = vld [vmem:[#allocation3 + $0x3c] sm:$0xf]
      %v1164 = vunpack.c.l.b16 %v1115
      %v1165 = vunpack.c.l.b16 %v1116
      %v1166 = vunpack.c.l.b16 %v1117
      %v1167 = vunpack.c.l.b16 %v1118
      %v1168 = vunpack.c.l.b16 %v1119
      %v1169 = vunpack.c.l.b16 %v1120
      %v1170 = vunpack.c.l.b16 %v1121
      %v1171 = vunpack.c.l.b16 %v1122
      %v1172 = vunpack.c.l.b16 %v1123
      %v1173 = vunpack.c.l.b16 %v1124
      %v1174 = vunpack.c.l.b16 %v1125
      %v1175 = vunpack.c.l.b16 %v1126
      %v1176 = vunpack.c.l.b16 %v1127
      %v1177 = vunpack.c.l.b16 %v1128
      %v1178 = vunpack.c.l.b16 %v1129
      %v1179 = vunpack.c.l.b16 %v1130
      %v1180 = vpack.c.b16 %v1165, %v1164
      %v1181 = vpack.c.b16 %v1167, %v1166
      %v1182 = vpack.c.b16 %v1169, %v1168
      %v1183 = vpack.c.b16 %v1171, %v1170
      %v1184 = vpack.c.b16 %v1173, %v1172
      %v1185 = vpack.c.b16 %v1175, %v1174
      %v1186 = vpack.c.b16 %v1177, %v1176
      %v1187 = vpack.c.b16 %v1179, %v1178
      %vm1188 = vcmask 64512
      %v1190 = vsel %vm1188, %v1180, 0
      %v1193 = vsel %vm1188, %v1181, 0
      %v1196 = vsel %vm1188, %v1182, 0
      %v1199 = vsel %vm1188, %v1183, 0
      %v1202 = vsel %vm1188, %v1184, 0
      %v1205 = vsel %vm1188, %v1185, 0
      %v1208 = vsel %vm1188, %v1186, 0
      %v1211 = vsel %vm1188, %v1187, 0
      %vm1213 = vcmask 1043456
      %v1215 = vsel %vm1213, %v1131, 0
      %1217 = vmatprep.subr.bf16.mxu0 0
      %1218 = vmatpush1.bf16.msra.mxu0 0
      %1219 = vmatprep.subr.bf16.mxu0 0
      %1220 = vmatpush1.bf16.msra.mxu0 0
      %1221 = vmatprep.subr.bf16.mxu0 0
      %1222 = vmatpush1.bf16.msra.mxu0 0
      %1223 = vmatprep.subr.bf16.mxu0 0
      %1224 = vmatpush1.bf16.msra.mxu0 0
      %1225 = vmatprep.subr.bf16.mxu0 0
      %1226 = vmatpush1.bf16.msra.mxu0 0
      %1227 = vmatprep.subr.bf16.mxu0 0
      %1228 = vmatpush1.bf16.msra.mxu0 0
      %1229 = vmatprep.subr.bf16.mxu0 0
      %1230 = vmatpush1.bf16.msra.mxu0 0
      %1231 = vmatprep.subr.bf16.mxu0 0
      %1232 = vmatpush1.bf16.msra.mxu0 %v1215
      %1233 = vmatprep.subr.bf16.mxu0 0
      %1234 = vmatpush2.bf16.msra.mxu0 0
      %1235 = vmatprep.subr.bf16.mxu0 0
      %1236 = vmatpush2.bf16.msra.mxu0 0
      %1237 = vmatprep.subr.bf16.mxu0 0
      %1238 = vmatpush2.bf16.msra.mxu0 0
      %1239 = vmatprep.subr.bf16.mxu0 0
      %1240 = vmatpush2.bf16.msra.mxu0 0
      %1241 = vmatprep.subr.bf16.mxu0 0
      %1242 = vmatpush2.bf16.msra.mxu0 0
      %1243 = vmatprep.subr.bf16.mxu0 0
      %1244 = vmatpush2.bf16.msra.mxu0 0
      %1245 = vmatprep.subr.bf16.mxu0 0
      %1246 = vmatpush2.bf16.msra.mxu0 0
      %1247 = vmatprep.subr.bf16.mxu0 0
      %1248 = vmatpush2.bf16.msra.mxu0 0
      %1249 = vmatprep.mubr.bf16.mxu0 0
      %1250 = vmatmul.mubr.bf16.gmra.mxu0 %v1190
      %v1251 = vpop.f32.mrf.mxu0
      %v1252 = vadd.f32 0.0, %v1251
      %v1253 = vpop.f32.mrf.mxu0
      %v1254 = vpop.f32.mrf.mxu0
      %v1255 = vadd.f32 0.0, %v1254
      %v1256 = vpop.f32.mrf.mxu0
      %1257 = vmatprep.mubr.bf16.mxu0 0
      %1258 = vmatmul.mubr.bf16.gmra.mxu0 %v1193
      %v1259 = vpop.f32.mrf.mxu0
      %v1260 = vadd.f32 0.0, %v1259
      %v1261 = vpop.f32.mrf.mxu0
      %v1262 = vpop.f32.mrf.mxu0
      %v1263 = vadd.f32 0.0, %v1262
      %v1264 = vpop.f32.mrf.mxu0
      %1265 = vmatprep.mubr.bf16.mxu0 0
      %1266 = vmatmul.mubr.bf16.gmra.mxu0 %v1196
      %v1267 = vpop.f32.mrf.mxu0
      %v1268 = vadd.f32 0.0, %v1267
      %v1269 = vpop.f32.mrf.mxu0
      %v1270 = vpop.f32.mrf.mxu0
      %v1271 = vadd.f32 0.0, %v1270
      %v1272 = vpop.f32.mrf.mxu0
      %1273 = vmatprep.mubr.bf16.mxu0 0
      %1274 = vmatmul.mubr.bf16.gmra.mxu0 %v1199
      %v1275 = vpop.f32.mrf.mxu0
      %v1276 = vadd.f32 0.0, %v1275
      %v1277 = vpop.f32.mrf.mxu0
      %v1278 = vpop.f32.mrf.mxu0
      %v1279 = vadd.f32 0.0, %v1278
      %v1280 = vpop.f32.mrf.mxu0
      %1281 = vmatprep.mubr.bf16.mxu0 0
      %1282 = vmatmul.mubr.bf16.gmra.mxu0 %v1202
      %v1283 = vpop.f32.mrf.mxu0
      %v1284 = vadd.f32 0.0, %v1283
      %v1285 = vpop.f32.mrf.mxu0
      %v1286 = vpop.f32.mrf.mxu0
      %v1287 = vadd.f32 0.0, %v1286
      %v1288 = vpop.f32.mrf.mxu0
      %1289 = vmatprep.mubr.bf16.mxu0 0
      %1290 = vmatmul.mubr.bf16.gmra.mxu0 %v1205
      %v1291 = vpop.f32.mrf.mxu0
      %v1292 = vadd.f32 0.0, %v1291
      %v1293 = vpop.f32.mrf.mxu0
      %v1294 = vpop.f32.mrf.mxu0
      %v1295 = vadd.f32 0.0, %v1294
      %v1296 = vpop.f32.mrf.mxu0
      %1297 = vmatprep.mubr.bf16.mxu0 0
      %1298 = vmatmul.mubr.bf16.gmra.mxu0 %v1208
      %v1299 = vpop.f32.mrf.mxu0
      %v1300 = vadd.f32 0.0, %v1299
      %v1301 = vpop.f32.mrf.mxu0
      %v1302 = vpop.f32.mrf.mxu0
      %v1303 = vadd.f32 0.0, %v1302
      %v1304 = vpop.f32.mrf.mxu0
      %1305 = vmatprep.mubr.bf16.mxu0 0
      %1306 = vmatmul.mubr.bf16.gmra.mxu0 %v1211
      %v1307 = vpop.f32.mrf.mxu0
      %v1308 = vadd.f32 0.0, %v1307
      %v1309 = vpop.f32.mrf.mxu0
      %v1310 = vpop.f32.mrf.mxu0
      %v1311 = vadd.f32 0.0, %v1310
      %v1312 = vpop.f32.mrf.mxu0
      %1313 = vdwg.mxu0
      %v1314 = vsel %vm1114, -1e+30, %v1252
      %v1315 = vsel %vm1114, -1e+30, %v1255
      %v1316 = vsel %vm1114, -1e+30, %v1260
      %v1317 = vsel %vm1114, -1e+30, %v1263
      %v1318 = vsel %vm1114, -1e+30, %v1268
      %v1319 = vsel %vm1114, -1e+30, %v1271
      %v1320 = vsel %vm1114, -1e+30, %v1276
      %v1321 = vsel %vm1114, -1e+30, %v1279
      %v1322 = vsel %vm1114, -1e+30, %v1284
      %v1323 = vsel %vm1114, -1e+30, %v1287
      %v1324 = vsel %vm1114, -1e+30, %v1292
      %v1325 = vsel %vm1114, -1e+30, %v1295
      %v1326 = vsel %vm1114, -1e+30, %v1300
      %v1327 = vsel %vm1114, -1e+30, %v1303
      %v1328 = vsel %vm1114, -1e+30, %v1308
      %v1329 = vsel %vm1114, -1e+30, %v1311
      %1330 = vmax.xlane.f32.xlu0 %v1314
      %v1331 = vpop.xlane.xlu0 %1330
      %1332 = vmax.xlane.f32.xlu0 %v1315
      %v1333 = vpop.xlane.xlu0 %1332
      %1334 = vmax.xlane.f32.xlu0 %v1316
      %v1335 = vpop.xlane.xlu0 %1334
      %1336 = vmax.xlane.f32.xlu0 %v1317
      %v1337 = vpop.xlane.xlu0 %1336
      %1338 = vmax.xlane.f32.xlu0 %v1318
      %v1339 = vpop.xlane.xlu0 %1338
      %1340 = vmax.xlane.f32.xlu0 %v1319
      %v1341 = vpop.xlane.xlu0 %1340
      %1342 = vmax.xlane.f32.xlu0 %v1320
      %v1343 = vpop.xlane.xlu0 %1342
      %1344 = vmax.xlane.f32.xlu0 %v1321
      %v1345 = vpop.xlane.xlu0 %1344
      %1346 = vmax.xlane.f32.xlu0 %v1322
      %v1347 = vpop.xlane.xlu0 %1346
      %1348 = vmax.xlane.f32.xlu0 %v1323
      %v1349 = vpop.xlane.xlu0 %1348
      %1350 = vmax.xlane.f32.xlu0 %v1324
      %v1351 = vpop.xlane.xlu0 %1350
      %1352 = vmax.xlane.f32.xlu0 %v1325
      %v1353 = vpop.xlane.xlu0 %1352
      %1354 = vmax.xlane.f32.xlu0 %v1326
      %v1355 = vpop.xlane.xlu0 %1354
      %1356 = vmax.xlane.f32.xlu0 %v1327
      %v1357 = vpop.xlane.xlu0 %1356
      %1358 = vmax.xlane.f32.xlu0 %v1328
      %v1359 = vpop.xlane.xlu0 %1358
      %1360 = vmax.xlane.f32.xlu0 %v1329
      %v1361 = vpop.xlane.xlu0 %1360
      %v1362 = vsub.f32 %v1314, %v1331
      %v1363 = vsub.f32 %v1315, %v1333
      %v1364 = vsub.f32 %v1316, %v1335
      %v1365 = vsub.f32 %v1317, %v1337
      %v1366 = vsub.f32 %v1318, %v1339
      %v1367 = vsub.f32 %v1319, %v1341
      %v1368 = vsub.f32 %v1320, %v1343
      %v1369 = vsub.f32 %v1321, %v1345
      %v1370 = vsub.f32 %v1322, %v1347
      %v1371 = vsub.f32 %v1323, %v1349
      %v1372 = vsub.f32 %v1324, %v1351
      %v1373 = vsub.f32 %v1325, %v1353
      %v1374 = vsub.f32 %v1326, %v1355
      %v1375 = vsub.f32 %v1327, %v1357
      %v1376 = vsub.f32 %v1328, %v1359
      %v1377 = vsub.f32 %v1329, %v1361
      %v1378 = vmul.f32 %v1362, 1.442695
      %v1379 = vpow.pop %v1378
      %v1380 = vmul.f32 %v1363, 1.442695
      %v1381 = vpow.pop %v1380
      %v1382 = vmul.f32 %v1364, 1.442695
      %v1383 = vpow.pop %v1382
      %v1384 = vmul.f32 %v1365, 1.442695
      %v1385 = vpow.pop %v1384
      %v1386 = vmul.f32 %v1366, 1.442695
      %v1387 = vpow.pop %v1386
      %v1388 = vmul.f32 %v1367, 1.442695
      %v1389 = vpow.pop %v1388
      %v1390 = vmul.f32 %v1368, 1.442695
      %v1391 = vpow.pop %v1390
      %v1392 = vmul.f32 %v1369, 1.442695
      %v1393 = vpow.pop %v1392
      %v1394 = vmul.f32 %v1370, 1.442695
      %v1395 = vpow.pop %v1394
      %v1396 = vmul.f32 %v1371, 1.442695
      %v1397 = vpow.pop %v1396
      %v1398 = vmul.f32 %v1372, 1.442695
      %v1399 = vpow.pop %v1398
      %v1400 = vmul.f32 %v1373, 1.442695
      %v1401 = vpow.pop %v1400
      %v1402 = vmul.f32 %v1374, 1.442695
      %v1403 = vpow.pop %v1402
      %v1404 = vmul.f32 %v1375, 1.442695
      %v1405 = vpow.pop %v1404
      %v1406 = vmul.f32 %v1376, 1.442695
      %v1407 = vpow.pop %v1406
      %v1408 = vmul.f32 %v1377, 1.442695
      %v1409 = vpow.pop %v1408
      %1410 = vadd.xlane.f32.xlu0 %v1379
      %v1411 = vpop.xlane.xlu0 %1410
      %1412 = vadd.xlane.f32.xlu0 %v1381
      %v1413 = vpop.xlane.xlu0 %1412
      %1414 = vadd.xlane.f32.xlu0 %v1383
      %v1415 = vpop.xlane.xlu0 %1414
      %1416 = vadd.xlane.f32.xlu0 %v1385
      %v1417 = vpop.xlane.xlu0 %1416
      %1418 = vadd.xlane.f32.xlu0 %v1387
      %v1419 = vpop.xlane.xlu0 %1418
      %1420 = vadd.xlane.f32.xlu0 %v1389
      %v1421 = vpop.xlane.xlu0 %1420
      %1422 = vadd.xlane.f32.xlu0 %v1391
      %v1423 = vpop.xlane.xlu0 %1422
      %1424 = vadd.xlane.f32.xlu0 %v1393
      %v1425 = vpop.xlane.xlu0 %1424
      %1426 = vadd.xlane.f32.xlu0 %v1395
      %v1427 = vpop.xlane.xlu0 %1426
      %1428 = vadd.xlane.f32.xlu0 %v1397
      %v1429 = vpop.xlane.xlu0 %1428
      %1430 = vadd.xlane.f32.xlu0 %v1399
      %v1431 = vpop.xlane.xlu0 %1430
      %1432 = vadd.xlane.f32.xlu0 %v1401
      %v1433 = vpop.xlane.xlu0 %1432
      %1434 = vadd.xlane.f32.xlu0 %v1403
      %v1435 = vpop.xlane.xlu0 %1434
      %1436 = vadd.xlane.f32.xlu0 %v1405
      %v1437 = vpop.xlane.xlu0 %1436
      %1438 = vadd.xlane.f32.xlu0 %v1407
      %v1439 = vpop.xlane.xlu0 %1438
      %1440 = vadd.xlane.f32.xlu0 %v1409
      %v1441 = vpop.xlane.xlu0 %1440
      %v1442 = vpack.c.bf16 %v1381, %v1379
      %v1443 = vpack.c.bf16 %v1385, %v1383
      %v1444 = vpack.c.bf16 %v1389, %v1387
      %v1445 = vpack.c.bf16 %v1393, %v1391
      %v1446 = vpack.c.bf16 %v1397, %v1395
      %v1447 = vpack.c.bf16 %v1401, %v1399
      %v1448 = vpack.c.bf16 %v1405, %v1403
      %v1449 = vpack.c.bf16 %v1409, %v1407
      %v1466 = vunpack.c.l.b16 %v1132
      %v1467 = vunpack.c.l.b16 %v1133
      %v1468 = vunpack.c.l.b16 %v1134
      %v1469 = vunpack.c.l.b16 %v1135
      %v1470 = vunpack.c.l.b16 %v1136
      %v1471 = vunpack.c.l.b16 %v1137
      %v1472 = vunpack.c.l.b16 %v1138
      %v1473 = vunpack.c.l.b16 %v1139
      %v1474 = vunpack.c.l.b16 %v1140
      %v1475 = vunpack.c.l.b16 %v1141
      %v1476 = vunpack.c.l.b16 %v1142
      %v1477 = vunpack.c.l.b16 %v1143
      %v1478 = vunpack.c.l.b16 %v1144
      %v1479 = vunpack.c.l.b16 %v1145
      %v1480 = vunpack.c.l.b16 %v1146
      %v1481 = vunpack.c.l.b16 %v1147
      %v1482 = vpack.c.b16 %v1467, %v1466
      %v1483 = vpack.c.b16 %v1469, %v1468
      %v1484 = vpack.c.b16 %v1471, %v1470
      %v1485 = vpack.c.b16 %v1473, %v1472
      %v1486 = vpack.c.b16 %v1475, %v1474
      %v1487 = vpack.c.b16 %v1477, %v1476
      %v1488 = vpack.c.b16 %v1479, %v1478
      %v1489 = vpack.c.b16 %v1481, %v1480
      %1498 = vmatprep.subr.bf16.mxu0 0
      %1499 = vmatpush1.bf16.msra.mxu0 %v1489
      %1500 = vmatprep.subr.bf16.mxu0 0
      %1501 = vmatpush1.bf16.msra.mxu0 %v1488
      %1502 = vmatprep.subr.bf16.mxu0 0
      %1503 = vmatpush1.bf16.msra.mxu0 %v1487
      %1504 = vmatprep.subr.bf16.mxu0 0
      %1505 = vmatpush1.bf16.msra.mxu0 %v1486
      %1506 = vmatprep.subr.bf16.mxu0 0
      %1507 = vmatpush1.bf16.msra.mxu0 %v1485
      %1508 = vmatprep.subr.bf16.mxu0 0
      %1509 = vmatpush1.bf16.msra.mxu0 %v1484
      %1510 = vmatprep.subr.bf16.mxu0 0
      %1511 = vmatpush1.bf16.msra.mxu0 %v1483
      %1512 = vmatprep.subr.bf16.mxu0 0
      %1513 = vmatpush1.bf16.msra.mxu0 %v1482
      %1514 = vmatprep.subr.bf16.mxu0 0
      %1515 = vmatpush2.bf16.msra.mxu0 0
      %1516 = vmatprep.subr.bf16.mxu0 0
      %1517 = vmatpush2.bf16.msra.mxu0 0
      %1518 = vmatprep.subr.bf16.mxu0 0
      %1519 = vmatpush2.bf16.msra.mxu0 0
      %1520 = vmatprep.subr.bf16.mxu0 0
      %1521 = vmatpush2.bf16.msra.mxu0 0
      %1522 = vmatprep.subr.bf16.mxu0 0
      %1523 = vmatpush2.bf16.msra.mxu0 0
      %1524 = vmatprep.subr.bf16.mxu0 0
      %1525 = vmatpush2.bf16.msra.mxu0 0
      %1526 = vmatprep.subr.bf16.mxu0 0
      %1527 = vmatpush2.bf16.msra.mxu0 0
      %1528 = vmatprep.subr.bf16.mxu0 0
      %1529 = vmatpush2.bf16.msra.mxu0 0
      %1530 = vmatprep.mubr.bf16.mxu0 0
      %1531 = vmatmul.mubr.bf16.gmra.mxu0 %v1442
      %v1532 = vpop.f32.mrf.mxu0
      %v1533 = vadd.f32 0.0, %v1532
      %v1534 = vpop.f32.mrf.mxu0
      %v1535 = vpop.f32.mrf.mxu0
      %v1536 = vadd.f32 0.0, %v1535
      %v1537 = vpop.f32.mrf.mxu0
      %1538 = vmatprep.mubr.bf16.mxu0 0
      %1539 = vmatmul.mubr.bf16.gmra.mxu0 %v1443
      %v1540 = vpop.f32.mrf.mxu0
      %v1541 = vadd.f32 0.0, %v1540
      %v1542 = vpop.f32.mrf.mxu0
      %v1543 = vpop.f32.mrf.mxu0
      %v1544 = vadd.f32 0.0, %v1543
      %v1545 = vpop.f32.mrf.mxu0
      %1546 = vmatprep.mubr.bf16.mxu0 0
      %1547 = vmatmul.mubr.bf16.gmra.mxu0 %v1444
      %v1548 = vpop.f32.mrf.mxu0
      %v1549 = vadd.f32 0.0, %v1548
      %v1550 = vpop.f32.mrf.mxu0
      %v1551 = vpop.f32.mrf.mxu0
      %v1552 = vadd.f32 0.0, %v1551
      %v1553 = vpop.f32.mrf.mxu0
      %1554 = vmatprep.mubr.bf16.mxu0 0
      %1555 = vmatmul.mubr.bf16.gmra.mxu0 %v1445
      %v1556 = vpop.f32.mrf.mxu0
      %v1557 = vadd.f32 0.0, %v1556
      %v1558 = vpop.f32.mrf.mxu0
      %v1559 = vpop.f32.mrf.mxu0
      %v1560 = vadd.f32 0.0, %v1559
      %v1561 = vpop.f32.mrf.mxu0
      %1562 = vmatprep.mubr.bf16.mxu0 0
      %1563 = vmatmul.mubr.bf16.gmra.mxu0 %v1446
      %v1564 = vpop.f32.mrf.mxu0
      %v1565 = vadd.f32 0.0, %v1564
      %v1566 = vpop.f32.mrf.mxu0
      %v1567 = vpop.f32.mrf.mxu0
      %v1568 = vadd.f32 0.0, %v1567
      %v1569 = vpop.f32.mrf.mxu0
      %1570 = vmatprep.mubr.bf16.mxu0 0
      %1571 = vmatmul.mubr.bf16.gmra.mxu0 %v1447
      %v1572 = vpop.f32.mrf.mxu0
      %v1573 = vadd.f32 0.0, %v1572
      %v1574 = vpop.f32.mrf.mxu0
      %v1575 = vpop.f32.mrf.mxu0
      %v1576 = vadd.f32 0.0, %v1575
      %v1577 = vpop.f32.mrf.mxu0
      %1578 = vmatprep.mubr.bf16.mxu0 0
      %1579 = vmatmul.mubr.bf16.gmra.mxu0 %v1448
      %v1580 = vpop.f32.mrf.mxu0
      %v1581 = vadd.f32 0.0, %v1580
      %v1582 = vpop.f32.mrf.mxu0
      %v1583 = vpop.f32.mrf.mxu0
      %v1584 = vadd.f32 0.0, %v1583
      %v1585 = vpop.f32.mrf.mxu0
      %1586 = vmatprep.mubr.bf16.mxu0 0
      %1587 = vmatmul.mubr.bf16.gmra.mxu0 %v1449
      %v1588 = vpop.f32.mrf.mxu0
      %v1589 = vadd.f32 0.0, %v1588
      %v1590 = vpop.f32.mrf.mxu0
      %v1591 = vpop.f32.mrf.mxu0
      %v1592 = vadd.f32 0.0, %v1591
      %v1593 = vpop.f32.mrf.mxu0
      %1594 = vdwg.mxu0
      %v1595 = vrcp.pop %v1411
      %v1596 = vrcp.pop %v1413
      %v1597 = vrcp.pop %v1415
      %v1598 = vrcp.pop %v1417
      %v1599 = vrcp.pop %v1419
      %v1600 = vrcp.pop %v1421
      %v1601 = vrcp.pop %v1423
      %v1602 = vrcp.pop %v1425
      %v1603 = vrcp.pop %v1427
      %v1604 = vrcp.pop %v1429
      %v1605 = vrcp.pop %v1431
      %v1606 = vrcp.pop %v1433
      %v1607 = vrcp.pop %v1435
      %v1608 = vrcp.pop %v1437
      %v1609 = vrcp.pop %v1439
      %v1610 = vrcp.pop %v1441
      %v1611 = vmul.f32 %v1533, %v1595
      %v1612 = vmul.f32 %v1536, %v1596
      %v1613 = vmul.f32 %v1541, %v1597
      %v1614 = vmul.f32 %v1544, %v1598
      %v1615 = vmul.f32 %v1549, %v1599
      %v1616 = vmul.f32 %v1552, %v1600
      %v1617 = vmul.f32 %v1557, %v1601
      %v1618 = vmul.f32 %v1560, %v1602
      %v1619 = vmul.f32 %v1565, %v1603
      %v1620 = vmul.f32 %v1568, %v1604
      %v1621 = vmul.f32 %v1573, %v1605
      %v1622 = vmul.f32 %v1576, %v1606
      %v1623 = vmul.f32 %v1581, %v1607
      %v1624 = vmul.f32 %v1584, %v1608
      %v1625 = vmul.f32 %v1589, %v1609
      %v1626 = vmul.f32 %v1592, %v1610
      %v1627 = vpack.c.bf16 %v1612, %v1611
      %v1628 = vpack.c.bf16 %v1614, %v1613
      %v1629 = vpack.c.bf16 %v1616, %v1615
      %v1630 = vpack.c.bf16 %v1618, %v1617
      %v1631 = vpack.c.bf16 %v1620, %v1619
      %v1632 = vpack.c.bf16 %v1622, %v1621
      %v1633 = vpack.c.bf16 %v1624, %v1623
      %v1634 = vpack.c.bf16 %v1626, %v1625
      %v1643 = vunpack.c.l.b16 %v1627
      %v1644 = vunpack.c.h.b16 %v1627
      %v1645 = vunpack.c.l.b16 %v1628
      %v1646 = vunpack.c.h.b16 %v1628
      %v1647 = vunpack.c.l.b16 %v1629
      %v1648 = vunpack.c.h.b16 %v1629
      %v1649 = vunpack.c.l.b16 %v1630
      %v1650 = vunpack.c.h.b16 %v1630
      %v1651 = vunpack.c.l.b16 %v1631
      %v1652 = vunpack.c.h.b16 %v1631
      %v1653 = vunpack.c.l.b16 %v1632
      %v1654 = vunpack.c.h.b16 %v1632
      %v1655 = vunpack.c.l.b16 %v1633
      %v1656 = vunpack.c.h.b16 %v1633
      %v1657 = vunpack.c.l.b16 %v1634
      %v1658 = vunpack.c.h.b16 %v1634
      %v1659 = vpack.c.b16 %v1643, %v1643
      %v1660 = vpack.c.b16 %v1644, %v1644
      %v1661 = vpack.c.b16 %v1645, %v1645
      %v1662 = vpack.c.b16 %v1646, %v1646
      %v1663 = vpack.c.b16 %v1647, %v1647
      %v1664 = vpack.c.b16 %v1648, %v1648
      %v1665 = vpack.c.b16 %v1649, %v1649
      %v1666 = vpack.c.b16 %v1650, %v1650
      %v1667 = vpack.c.b16 %v1651, %v1651
      %v1668 = vpack.c.b16 %v1652, %v1652
      %v1669 = vpack.c.b16 %v1653, %v1653
      %v1670 = vpack.c.b16 %v1654, %v1654
      %v1671 = vpack.c.b16 %v1655, %v1655
      %v1672 = vpack.c.b16 %v1656, %v1656
      %v1673 = vpack.c.b16 %v1657, %v1657
      %v1674 = vpack.c.b16 %v1658, %v1658
      %vm1691 = vcmask 60416
      %1692 = vst.msk [vmem:[#allocation5] sm:$0xf] %vm1691, %v1659
      %1693 = vst.msk [vmem:[#allocation5 + $0x4] sm:$0xf] %vm1691, %v1660
      %1694 = vst.msk [vmem:[#allocation5 + $0x8] sm:$0xf] %vm1691, %v1661
      %1695 = vst.msk [vmem:[#allocation5 + $0xc] sm:$0xf] %vm1691, %v1662
      %1696 = vst.msk [vmem:[#allocation5 + $0x10] sm:$0xf] %vm1691, %v1663
      %1697 = vst.msk [vmem:[#allocation5 + $0x14] sm:$0xf] %vm1691, %v1664
      %1698 = vst.msk [vmem:[#allocation5 + $0x18] sm:$0xf] %vm1691, %v1665
      %1699 = vst.msk [vmem:[#allocation5 + $0x1c] sm:$0xf] %vm1691, %v1666
      %1700 = vst.msk [vmem:[#allocation5 + $0x20] sm:$0xf] %vm1691, %v1667
      %1701 = vst.msk [vmem:[#allocation5 + $0x24] sm:$0xf] %vm1691, %v1668
      %1702 = vst.msk [vmem:[#allocation5 + $0x28] sm:$0xf] %vm1691, %v1669
      %1703 = vst.msk [vmem:[#allocation5 + $0x2c] sm:$0xf] %vm1691, %v1670
      %1704 = vst.msk [vmem:[#allocation5 + $0x30] sm:$0xf] %vm1691, %v1671
      %1705 = vst.msk [vmem:[#allocation5 + $0x34] sm:$0xf] %vm1691, %v1672
      %1706 = vst.msk [vmem:[#allocation5 + $0x38] sm:$0xf] %vm1691, %v1673
      %1707 = vst.msk [vmem:[#allocation5 + $0x3c] sm:$0xf] %vm1691, %v1674
      %v1708 = vld [vmem:[#allocation4] sm:$0xf]
      %v1709 = vld [vmem:[#allocation4 + $0x4] sm:$0xf]
      %v1710 = vld [vmem:[#allocation4 + $0x8] sm:$0xf]
      %v1711 = vld [vmem:[#allocation4 + $0xc] sm:$0xf]
      %v1712 = vld [vmem:[#allocation4 + $0x10] sm:$0xf]
      %v1713 = vld [vmem:[#allocation4 + $0x14] sm:$0xf]
      %v1714 = vld [vmem:[#allocation4 + $0x18] sm:$0xf]
      %v1715 = vld [vmem:[#allocation4 + $0x1c] sm:$0xf]
      %v1716 = vld [vmem:[#allocation4 + $0x20] sm:$0xf]
      %v1717 = vld [vmem:[#allocation4 + $0x24] sm:$0xf]
      %v1718 = vld [vmem:[#allocation4 + $0x28] sm:$0xf]
      %v1719 = vld [vmem:[#allocation4 + $0x2c] sm:$0xf]
      %v1720 = vld [vmem:[#allocation4 + $0x30] sm:$0xf]
      %v1721 = vld [vmem:[#allocation4 + $0x34] sm:$0xf]
      %v1722 = vld [vmem:[#allocation4 + $0x38] sm:$0xf]
      %v1723 = vld [vmem:[#allocation4 + $0x3c] sm:$0xf]
      %v1724 = vld [vmem:[#allocation2 + $0x4] sm:$0xf]
      %v1725 = vld [vmem:[#allocation3] sm:$0xf]
      %v1726 = vld [vmem:[#allocation3 + $0x4] sm:$0xf]
      %v1727 = vld [vmem:[#allocation3 + $0x8] sm:$0xf]
      %v1728 = vld [vmem:[#allocation3 + $0xc] sm:$0xf]
      %v1729 = vld [vmem:[#allocation3 + $0x10] sm:$0xf]
      %v1730 = vld [vmem:[#allocation3 + $0x14] sm:$0xf]
      %v1731 = vld [vmem:[#allocation3 + $0x18] sm:$0xf]
      %v1732 = vld [vmem:[#allocation3 + $0x1c] sm:$0xf]
      %v1733 = vld [vmem:[#allocation3 + $0x20] sm:$0xf]
      %v1734 = vld [vmem:[#allocation3 + $0x24] sm:$0xf]
      %v1735 = vld [vmem:[#allocation3 + $0x28] sm:$0xf]
      %v1736 = vld [vmem:[#allocation3 + $0x2c] sm:$0xf]
      %v1737 = vld [vmem:[#allocation3 + $0x30] sm:$0xf]
      %v1738 = vld [vmem:[#allocation3 + $0x34] sm:$0xf]
      %v1739 = vld [vmem:[#allocation3 + $0x38] sm:$0xf]
      %v1740 = vld [vmem:[#allocation3 + $0x3c] sm:$0xf]
      %v1757 = vunpack.c.l.b16 %v1708
      %v1758 = vunpack.c.l.b16 %v1709
      %v1759 = vunpack.c.l.b16 %v1710
      %v1760 = vunpack.c.l.b16 %v1711
      %v1761 = vunpack.c.l.b16 %v1712
      %v1762 = vunpack.c.l.b16 %v1713
      %v1763 = vunpack.c.l.b16 %v1714
      %v1764 = vunpack.c.l.b16 %v1715
      %v1765 = vunpack.c.l.b16 %v1716
      %v1766 = vunpack.c.l.b16 %v1717
      %v1767 = vunpack.c.l.b16 %v1718
      %v1768 = vunpack.c.l.b16 %v1719
      %v1769 = vunpack.c.l.b16 %v1720
      %v1770 = vunpack.c.l.b16 %v1721
      %v1771 = vunpack.c.l.b16 %v1722
      %v1772 = vunpack.c.l.b16 %v1723
      %v1773 = vpack.c.b16 %v1758, %v1757
      %v1774 = vpack.c.b16 %v1760, %v1759
      %v1775 = vpack.c.b16 %v1762, %v1761
      %v1776 = vpack.c.b16 %v1764, %v1763
      %v1777 = vpack.c.b16 %v1766, %v1765
      %v1778 = vpack.c.b16 %v1768, %v1767
      %v1779 = vpack.c.b16 %v1770, %v1769
      %v1780 = vpack.c.b16 %v1772, %v1771
      %1781 = vrot.lane.b32.xlu0 %v1773, 120
      %v1782 = vpop.permute.xlu0 %1781
      %1783 = vrot.lane.b32.xlu0 %v1774, 120
      %v1784 = vpop.permute.xlu0 %1783
      %1785 = vrot.lane.b32.xlu0 %v1775, 120
      %v1786 = vpop.permute.xlu0 %1785
      %1787 = vrot.lane.b32.xlu0 %v1776, 120
      %v1788 = vpop.permute.xlu0 %1787
      %1789 = vrot.lane.b32.xlu0 %v1777, 120
      %v1790 = vpop.permute.xlu0 %1789
      %1791 = vrot.lane.b32.xlu0 %v1778, 120
      %v1792 = vpop.permute.xlu0 %1791
      %1793 = vrot.lane.b32.xlu0 %v1779, 120
      %v1794 = vpop.permute.xlu0 %1793
      %1795 = vrot.lane.b32.xlu0 %v1780, 120
      %v1796 = vpop.permute.xlu0 %1795
      %v1798 = vsel %vm1188, %v1782, 0
      %v1801 = vsel %vm1188, %v1784, 0
      %v1804 = vsel %vm1188, %v1786, 0
      %v1807 = vsel %vm1188, %v1788, 0
      %v1810 = vsel %vm1188, %v1790, 0
      %v1813 = vsel %vm1188, %v1792, 0
      %v1816 = vsel %vm1188, %v1794, 0
      %v1819 = vsel %vm1188, %v1796, 0
      %v1822 = vsel %vm1213, %v1724, 0
      %1824 = vmatprep.subr.bf16.mxu0 0
      %1825 = vmatpush1.bf16.msra.mxu0 0
      %1826 = vmatprep.subr.bf16.mxu0 0
      %1827 = vmatpush1.bf16.msra.mxu0 0
      %1828 = vmatprep.subr.bf16.mxu0 0
      %1829 = vmatpush1.bf16.msra.mxu0 0
      %1830 = vmatprep.subr.bf16.mxu0 0
      %1831 = vmatpush1.bf16.msra.mxu0 0
      %1832 = vmatprep.subr.bf16.mxu0 0
      %1833 = vmatpush1.bf16.msra.mxu0 0
      %1834 = vmatprep.subr.bf16.mxu0 0
      %1835 = vmatpush1.bf16.msra.mxu0 0
      %1836 = vmatprep.subr.bf16.mxu0 0
      %1837 = vmatpush1.bf16.msra.mxu0 0
      %1838 = vmatprep.subr.bf16.mxu0 0
      %1839 = vmatpush1.bf16.msra.mxu0 %v1822
      %1840 = vmatprep.subr.bf16.mxu0 0
      %1841 = vmatpush2.bf16.msra.mxu0 0
      %1842 = vmatprep.subr.bf16.mxu0 0
      %1843 = vmatpush2.bf16.msra.mxu0 0
      %1844 = vmatprep.subr.bf16.mxu0 0
      %1845 = vmatpush2.bf16.msra.mxu0 0
      %1846 = vmatprep.subr.bf16.mxu0 0
      %1847 = vmatpush2.bf16.msra.mxu0 0
      %1848 = vmatprep.subr.bf16.mxu0 0
      %1849 = vmatpush2.bf16.msra.mxu0 0
      %1850 = vmatprep.subr.bf16.mxu0 0
      %1851 = vmatpush2.bf16.msra.mxu0 0
      %1852 = vmatprep.subr.bf16.mxu0 0
      %1853 = vmatpush2.bf16.msra.mxu0 0
      %1854 = vmatprep.subr.bf16.mxu0 0
      %1855 = vmatpush2.bf16.msra.mxu0 0
      %1856 = vmatprep.mubr.bf16.mxu0 0
      %1857 = vmatmul.mubr.bf16.gmra.mxu0 %v1798
      %v1858 = vpop.f32.mrf.mxu0
      %v1859 = vadd.f32 0.0, %v1858
      %v1860 = vpop.f32.mrf.mxu0
      %v1861 = vpop.f32.mrf.mxu0
      %v1862 = vadd.f32 0.0, %v1861
      %v1863 = vpop.f32.mrf.mxu0
      %1864 = vmatprep.mubr.bf16.mxu0 0
      %1865 = vmatmul.mubr.bf16.gmra.mxu0 %v1801
      %v1866 = vpop.f32.mrf.mxu0
      %v1867 = vadd.f32 0.0, %v1866
      %v1868 = vpop.f32.mrf.mxu0
      %v1869 = vpop.f32.mrf.mxu0
      %v1870 = vadd.f32 0.0, %v1869
      %v1871 = vpop.f32.mrf.mxu0
      %1872 = vmatprep.mubr.bf16.mxu0 0
      %1873 = vmatmul.mubr.bf16.gmra.mxu0 %v1804
      %v1874 = vpop.f32.mrf.mxu0
      %v1875 = vadd.f32 0.0, %v1874
      %v1876 = vpop.f32.mrf.mxu0
      %v1877 = vpop.f32.mrf.mxu0
      %v1878 = vadd.f32 0.0, %v1877
      %v1879 = vpop.f32.mrf.mxu0
      %1880 = vmatprep.mubr.bf16.mxu0 0
      %1881 = vmatmul.mubr.bf16.gmra.mxu0 %v1807
      %v1882 = vpop.f32.mrf.mxu0
      %v1883 = vadd.f32 0.0, %v1882
      %v1884 = vpop.f32.mrf.mxu0
      %v1885 = vpop.f32.mrf.mxu0
      %v1886 = vadd.f32 0.0, %v1885
      %v1887 = vpop.f32.mrf.mxu0
      %1888 = vmatprep.mubr.bf16.mxu0 0
      %1889 = vmatmul.mubr.bf16.gmra.mxu0 %v1810
      %v1890 = vpop.f32.mrf.mxu0
      %v1891 = vadd.f32 0.0, %v1890
      %v1892 = vpop.f32.mrf.mxu0
      %v1893 = vpop.f32.mrf.mxu0
      %v1894 = vadd.f32 0.0, %v1893
      %v1895 = vpop.f32.mrf.mxu0
      %1896 = vmatprep.mubr.bf16.mxu0 0
      %1897 = vmatmul.mubr.bf16.gmra.mxu0 %v1813
      %v1898 = vpop.f32.mrf.mxu0
      %v1899 = vadd.f32 0.0, %v1898
      %v1900 = vpop.f32.mrf.mxu0
      %v1901 = vpop.f32.mrf.mxu0
      %v1902 = vadd.f32 0.0, %v1901
      %v1903 = vpop.f32.mrf.mxu0
      %1904 = vmatprep.mubr.bf16.mxu0 0
      %1905 = vmatmul.mubr.bf16.gmra.mxu0 %v1816
      %v1906 = vpop.f32.mrf.mxu0
      %v1907 = vadd.f32 0.0, %v1906
      %v1908 = vpop.f32.mrf.mxu0
      %v1909 = vpop.f32.mrf.mxu0
      %v1910 = vadd.f32 0.0, %v1909
      %v1911 = vpop.f32.mrf.mxu0
      %1912 = vmatprep.mubr.bf16.mxu0 0
      %1913 = vmatmul.mubr.bf16.gmra.mxu0 %v1819
      %v1914 = vpop.f32.mrf.mxu0
      %v1915 = vadd.f32 0.0, %v1914
      %v1916 = vpop.f32.mrf.mxu0
      %v1917 = vpop.f32.mrf.mxu0
      %v1918 = vadd.f32 0.0, %v1917
      %v1919 = vpop.f32.mrf.mxu0
      %1920 = vdwg.mxu0
      %v1921 = vsel %vm1114, -1e+30, %v1859
      %v1922 = vsel %vm1114, -1e+30, %v1862
      %v1923 = vsel %vm1114, -1e+30, %v1867
      %v1924 = vsel %vm1114, -1e+30, %v1870
      %v1925 = vsel %vm1114, -1e+30, %v1875
      %v1926 = vsel %vm1114, -1e+30, %v1878
      %v1927 = vsel %vm1114, -1e+30, %v1883
      %v1928 = vsel %vm1114, -1e+30, %v1886
      %v1929 = vsel %vm1114, -1e+30, %v1891
      %v1930 = vsel %vm1114, -1e+30, %v1894
      %v1931 = vsel %vm1114, -1e+30, %v1899
      %v1932 = vsel %vm1114, -1e+30, %v1902
      %v1933 = vsel %vm1114, -1e+30, %v1907
      %v1934 = vsel %vm1114, -1e+30, %v1910
      %v1935 = vsel %vm1114, -1e+30, %v1915
      %v1936 = vsel %vm1114, -1e+30, %v1918
      %1937 = vmax.xlane.f32.xlu0 %v1921
      %v1938 = vpop.xlane.xlu0 %1937
      %1939 = vmax.xlane.f32.xlu0 %v1922
      %v1940 = vpop.xlane.xlu0 %1939
      %1941 = vmax.xlane.f32.xlu0 %v1923
      %v1942 = vpop.xlane.xlu0 %1941
      %1943 = vmax.xlane.f32.xlu0 %v1924
      %v1944 = vpop.xlane.xlu0 %1943
      %1945 = vmax.xlane.f32.xlu0 %v1925
      %v1946 = vpop.xlane.xlu0 %1945
      %1947 = vmax.xlane.f32.xlu0 %v1926
      %v1948 = vpop.xlane.xlu0 %1947
      %1949 = vmax.xlane.f32.xlu0 %v1927
      %v1950 = vpop.xlane.xlu0 %1949
      %1951 = vmax.xlane.f32.xlu0 %v1928
      %v1952 = vpop.xlane.xlu0 %1951
      %1953 = vmax.xlane.f32.xlu0 %v1929
      %v1954 = vpop.xlane.xlu0 %1953
      %1955 = vmax.xlane.f32.xlu0 %v1930
      %v1956 = vpop.xlane.xlu0 %1955
      %1957 = vmax.xlane.f32.xlu0 %v1931
      %v1958 = vpop.xlane.xlu0 %1957
      %1959 = vmax.xlane.f32.xlu0 %v1932
      %v1960 = vpop.xlane.xlu0 %1959
      %1961 = vmax.xlane.f32.xlu0 %v1933
      %v1962 = vpop.xlane.xlu0 %1961
      %1963 = vmax.xlane.f32.xlu0 %v1934
      %v1964 = vpop.xlane.xlu0 %1963
      %1965 = vmax.xlane.f32.xlu0 %v1935
      %v1966 = vpop.xlane.xlu0 %1965
      %1967 = vmax.xlane.f32.xlu0 %v1936
      %v1968 = vpop.xlane.xlu0 %1967
      %v1969 = vsub.f32 %v1921, %v1938
      %v1970 = vsub.f32 %v1922, %v1940
      %v1971 = vsub.f32 %v1923, %v1942
      %v1972 = vsub.f32 %v1924, %v1944
      %v1973 = vsub.f32 %v1925, %v1946
      %v1974 = vsub.f32 %v1926, %v1948
      %v1975 = vsub.f32 %v1927, %v1950
      %v1976 = vsub.f32 %v1928, %v1952
      %v1977 = vsub.f32 %v1929, %v1954
      %v1978 = vsub.f32 %v1930, %v1956
      %v1979 = vsub.f32 %v1931, %v1958
      %v1980 = vsub.f32 %v1932, %v1960
      %v1981 = vsub.f32 %v1933, %v1962
      %v1982 = vsub.f32 %v1934, %v1964
      %v1983 = vsub.f32 %v1935, %v1966
      %v1984 = vsub.f32 %v1936, %v1968
      %v1985 = vmul.f32 %v1969, 1.442695
      %v1986 = vpow.pop %v1985
      %v1987 = vmul.f32 %v1970, 1.442695
      %v1988 = vpow.pop %v1987
      %v1989 = vmul.f32 %v1971, 1.442695
      %v1990 = vpow.pop %v1989
      %v1991 = vmul.f32 %v1972, 1.442695
      %v1992 = vpow.pop %v1991
      %v1993 = vmul.f32 %v1973, 1.442695
      %v1994 = vpow.pop %v1993
      %v1995 = vmul.f32 %v1974, 1.442695
      %v1996 = vpow.pop %v1995
      %v1997 = vmul.f32 %v1975, 1.442695
      %v1998 = vpow.pop %v1997
      %v1999 = vmul.f32 %v1976, 1.442695
      %v2000 = vpow.pop %v1999
      %v2001 = vmul.f32 %v1977, 1.442695
      %v2002 = vpow.pop %v2001
      %v2003 = vmul.f32 %v1978, 1.442695
      %v2004 = vpow.pop %v2003
      %v2005 = vmul.f32 %v1979, 1.442695
      %v2006 = vpow.pop %v2005
      %v2007 = vmul.f32 %v1980, 1.442695
      %v2008 = vpow.pop %v2007
      %v2009 = vmul.f32 %v1981, 1.442695
      %v2010 = vpow.pop %v2009
      %v2011 = vmul.f32 %v1982, 1.442695
      %v2012 = vpow.pop %v2011
      %v2013 = vmul.f32 %v1983, 1.442695
      %v2014 = vpow.pop %v2013
      %v2015 = vmul.f32 %v1984, 1.442695
      %v2016 = vpow.pop %v2015
      %2017 = vadd.xlane.f32.xlu0 %v1986
      %v2018 = vpop.xlane.xlu0 %2017
      %2019 = vadd.xlane.f32.xlu0 %v1988
      %v2020 = vpop.xlane.xlu0 %2019
      %2021 = vadd.xlane.f32.xlu0 %v1990
      %v2022 = vpop.xlane.xlu0 %2021
      %2023 = vadd.xlane.f32.xlu0 %v1992
      %v2024 = vpop.xlane.xlu0 %2023
      %2025 = vadd.xlane.f32.xlu0 %v1994
      %v2026 = vpop.xlane.xlu0 %2025
      %2027 = vadd.xlane.f32.xlu0 %v1996
      %v2028 = vpop.xlane.xlu0 %2027
      %2029 = vadd.xlane.f32.xlu0 %v1998
      %v2030 = vpop.xlane.xlu0 %2029
      %2031 = vadd.xlane.f32.xlu0 %v2000
      %v2032 = vpop.xlane.xlu0 %2031
      %2033 = vadd.xlane.f32.xlu0 %v2002
      %v2034 = vpop.xlane.xlu0 %2033
      %2035 = vadd.xlane.f32.xlu0 %v2004
      %v2036 = vpop.xlane.xlu0 %2035
      %2037 = vadd.xlane.f32.xlu0 %v2006
      %v2038 = vpop.xlane.xlu0 %2037
      %2039 = vadd.xlane.f32.xlu0 %v2008
      %v2040 = vpop.xlane.xlu0 %2039
      %2041 = vadd.xlane.f32.xlu0 %v2010
      %v2042 = vpop.xlane.xlu0 %2041
      %2043 = vadd.xlane.f32.xlu0 %v2012
      %v2044 = vpop.xlane.xlu0 %2043
      %2045 = vadd.xlane.f32.xlu0 %v2014
      %v2046 = vpop.xlane.xlu0 %2045
      %2047 = vadd.xlane.f32.xlu0 %v2016
      %v2048 = vpop.xlane.xlu0 %2047
      %v2049 = vpack.c.bf16 %v1988, %v1986
      %v2050 = vpack.c.bf16 %v1992, %v1990
      %v2051 = vpack.c.bf16 %v1996, %v1994
      %v2052 = vpack.c.bf16 %v2000, %v1998
      %v2053 = vpack.c.bf16 %v2004, %v2002
      %v2054 = vpack.c.bf16 %v2008, %v2006
      %v2055 = vpack.c.bf16 %v2012, %v2010
      %v2056 = vpack.c.bf16 %v2016, %v2014
      %v2073 = vunpack.c.l.b16 %v1725
      %v2074 = vunpack.c.l.b16 %v1726
      %v2075 = vunpack.c.l.b16 %v1727
      %v2076 = vunpack.c.l.b16 %v1728
      %v2077 = vunpack.c.l.b16 %v1729
      %v2078 = vunpack.c.l.b16 %v1730
      %v2079 = vunpack.c.l.b16 %v1731
      %v2080 = vunpack.c.l.b16 %v1732
      %v2081 = vunpack.c.l.b16 %v1733
      %v2082 = vunpack.c.l.b16 %v1734
      %v2083 = vunpack.c.l.b16 %v1735
      %v2084 = vunpack.c.l.b16 %v1736
      %v2085 = vunpack.c.l.b16 %v1737
      %v2086 = vunpack.c.l.b16 %v1738
      %v2087 = vunpack.c.l.b16 %v1739
      %v2088 = vunpack.c.l.b16 %v1740
      %v2089 = vpack.c.b16 %v2074, %v2073
      %v2090 = vpack.c.b16 %v2076, %v2075
      %v2091 = vpack.c.b16 %v2078, %v2077
      %v2092 = vpack.c.b16 %v2080, %v2079
      %v2093 = vpack.c.b16 %v2082, %v2081
      %v2094 = vpack.c.b16 %v2084, %v2083
      %v2095 = vpack.c.b16 %v2086, %v2085
      %v2096 = vpack.c.b16 %v2088, %v2087
      %2097 = vrot.lane.b32.xlu0 %v2089, 120
      %v2098 = vpop.permute.xlu0 %2097
      %2099 = vrot.lane.b32.xlu0 %v2090, 120
      %v2100 = vpop.permute.xlu0 %2099
      %2101 = vrot.lane.b32.xlu0 %v2091, 120
      %v2102 = vpop.permute.xlu0 %2101
      %2103 = vrot.lane.b32.xlu0 %v2092, 120
      %v2104 = vpop.permute.xlu0 %2103
      %2105 = vrot.lane.b32.xlu0 %v2093, 120
      %v2106 = vpop.permute.xlu0 %2105
      %2107 = vrot.lane.b32.xlu0 %v2094, 120
      %v2108 = vpop.permute.xlu0 %2107
      %2109 = vrot.lane.b32.xlu0 %v2095, 120
      %v2110 = vpop.permute.xlu0 %2109
      %2111 = vrot.lane.b32.xlu0 %v2096, 120
      %v2112 = vpop.permute.xlu0 %2111
      %2121 = vmatprep.subr.bf16.mxu0 0
      %2122 = vmatpush1.bf16.msra.mxu0 %v2112
      %2123 = vmatprep.subr.bf16.mxu0 0
      %2124 = vmatpush1.bf16.msra.mxu0 %v2110
      %2125 = vmatprep.subr.bf16.mxu0 0
      %2126 = vmatpush1.bf16.msra.mxu0 %v2108
      %2127 = vmatprep.subr.bf16.mxu0 0
      %2128 = vmatpush1.bf16.msra.mxu0 %v2106
      %2129 = vmatprep.subr.bf16.mxu0 0
      %2130 = vmatpush1.bf16.msra.mxu0 %v2104
      %2131 = vmatprep.subr.bf16.mxu0 0
      %2132 = vmatpush1.bf16.msra.mxu0 %v2102
      %2133 = vmatprep.subr.bf16.mxu0 0
      %2134 = vmatpush1.bf16.msra.mxu0 %v2100
      %2135 = vmatprep.subr.bf16.mxu0 0
      %2136 = vmatpush1.bf16.msra.mxu0 %v2098
      %2137 = vmatprep.subr.bf16.mxu0 0
      %2138 = vmatpush2.bf16.msra.mxu0 0
      %2139 = vmatprep.subr.bf16.mxu0 0
      %2140 = vmatpush2.bf16.msra.mxu0 0
      %2141 = vmatprep.subr.bf16.mxu0 0
      %2142 = vmatpush2.bf16.msra.mxu0 0
      %2143 = vmatprep.subr.bf16.mxu0 0
      %2144 = vmatpush2.bf16.msra.mxu0 0
      %2145 = vmatprep.subr.bf16.mxu0 0
      %2146 = vmatpush2.bf16.msra.mxu0 0
      %2147 = vmatprep.subr.bf16.mxu0 0
      %2148 = vmatpush2.bf16.msra.mxu0 0
      %2149 = vmatprep.subr.bf16.mxu0 0
      %2150 = vmatpush2.bf16.msra.mxu0 0
      %2151 = vmatprep.subr.bf16.mxu0 0
      %2152 = vmatpush2.bf16.msra.mxu0 0
      %2153 = vmatprep.mubr.bf16.mxu0 0
      %2154 = vmatmul.mubr.bf16.gmra.mxu0 %v2049
      %v2155 = vpop.f32.mrf.mxu0
      %v2156 = vadd.f32 0.0, %v2155
      %v2157 = vpop.f32.mrf.mxu0
      %v2158 = vpop.f32.mrf.mxu0
      %v2159 = vadd.f32 0.0, %v2158
      %v2160 = vpop.f32.mrf.mxu0
      %2161 = vmatprep.mubr.bf16.mxu0 0
      %2162 = vmatmul.mubr.bf16.gmra.mxu0 %v2050
      %v2163 = vpop.f32.mrf.mxu0
      %v2164 = vadd.f32 0.0, %v2163
      %v2165 = vpop.f32.mrf.mxu0
      %v2166 = vpop.f32.mrf.mxu0
      %v2167 = vadd.f32 0.0, %v2166
      %v2168 = vpop.f32.mrf.mxu0
      %2169 = vmatprep.mubr.bf16.mxu0 0
      %2170 = vmatmul.mubr.bf16.gmra.mxu0 %v2051
      %v2171 = vpop.f32.mrf.mxu0
      %v2172 = vadd.f32 0.0, %v2171
      %v2173 = vpop.f32.mrf.mxu0
      %v2174 = vpop.f32.mrf.mxu0
      %v2175 = vadd.f32 0.0, %v2174
      %v2176 = vpop.f32.mrf.mxu0
      %2177 = vmatprep.mubr.bf16.mxu0 0
      %2178 = vmatmul.mubr.bf16.gmra.mxu0 %v2052
      %v2179 = vpop.f32.mrf.mxu0
      %v2180 = vadd.f32 0.0, %v2179
      %v2181 = vpop.f32.mrf.mxu0
      %v2182 = vpop.f32.mrf.mxu0
      %v2183 = vadd.f32 0.0, %v2182
      %v2184 = vpop.f32.mrf.mxu0
      %2185 = vmatprep.mubr.bf16.mxu0 0
      %2186 = vmatmul.mubr.bf16.gmra.mxu0 %v2053
      %v2187 = vpop.f32.mrf.mxu0
      %v2188 = vadd.f32 0.0, %v2187
      %v2189 = vpop.f32.mrf.mxu0
      %v2190 = vpop.f32.mrf.mxu0
      %v2191 = vadd.f32 0.0, %v2190
      %v2192 = vpop.f32.mrf.mxu0
      %2193 = vmatprep.mubr.bf16.mxu0 0
      %2194 = vmatmul.mubr.bf16.gmra.mxu0 %v2054
      %v2195 = vpop.f32.mrf.mxu0
      %v2196 = vadd.f32 0.0, %v2195
      %v2197 = vpop.f32.mrf.mxu0
      %v2198 = vpop.f32.mrf.mxu0
      %v2199 = vadd.f32 0.0, %v2198
      %v2200 = vpop.f32.mrf.mxu0
      %2201 = vmatprep.mubr.bf16.mxu0 0
      %2202 = vmatmul.mubr.bf16.gmra.mxu0 %v2055
      %v2203 = vpop.f32.mrf.mxu0
      %v2204 = vadd.f32 0.0, %v2203
      %v2205 = vpop.f32.mrf.mxu0
      %v2206 = vpop.f32.mrf.mxu0
      %v2207 = vadd.f32 0.0, %v2206
      %v2208 = vpop.f32.mrf.mxu0
      %2209 = vmatprep.mubr.bf16.mxu0 0
      %2210 = vmatmul.mubr.bf16.gmra.mxu0 %v2056
      %v2211 = vpop.f32.mrf.mxu0
      %v2212 = vadd.f32 0.0, %v2211
      %v2213 = vpop.f32.mrf.mxu0
      %v2214 = vpop.f32.mrf.mxu0
      %v2215 = vadd.f32 0.0, %v2214
      %v2216 = vpop.f32.mrf.mxu0
      %2217 = vdwg.mxu0
      %v2218 = vrcp.pop %v2018
      %v2219 = vrcp.pop %v2020
      %v2220 = vrcp.pop %v2022
      %v2221 = vrcp.pop %v2024
      %v2222 = vrcp.pop %v2026
      %v2223 = vrcp.pop %v2028
      %v2224 = vrcp.pop %v2030
      %v2225 = vrcp.pop %v2032
      %v2226 = vrcp.pop %v2034
      %v2227 = vrcp.pop %v2036
      %v2228 = vrcp.pop %v2038
      %v2229 = vrcp.pop %v2040
      %v2230 = vrcp.pop %v2042
      %v2231 = vrcp.pop %v2044
      %v2232 = vrcp.pop %v2046
      %v2233 = vrcp.pop %v2048
      %v2234 = vmul.f32 %v2156, %v2218
      %v2235 = vmul.f32 %v2159, %v2219
      %v2236 = vmul.f32 %v2164, %v2220
      %v2237 = vmul.f32 %v2167, %v2221
      %v2238 = vmul.f32 %v2172, %v2222
      %v2239 = vmul.f32 %v2175, %v2223
      %v2240 = vmul.f32 %v2180, %v2224
      %v2241 = vmul.f32 %v2183, %v2225
      %v2242 = vmul.f32 %v2188, %v2226
      %v2243 = vmul.f32 %v2191, %v2227
      %v2244 = vmul.f32 %v2196, %v2228
      %v2245 = vmul.f32 %v2199, %v2229
      %v2246 = vmul.f32 %v2204, %v2230
      %v2247 = vmul.f32 %v2207, %v2231
      %v2248 = vmul.f32 %v2212, %v2232
      %v2249 = vmul.f32 %v2215, %v2233
      %v2250 = vpack.c.bf16 %v2235, %v2234
      %v2251 = vpack.c.bf16 %v2237, %v2236
      %v2252 = vpack.c.bf16 %v2239, %v2238
      %v2253 = vpack.c.bf16 %v2241, %v2240
      %v2254 = vpack.c.bf16 %v2243, %v2242
      %v2255 = vpack.c.bf16 %v2245, %v2244
      %v2256 = vpack.c.bf16 %v2247, %v2246
      %v2257 = vpack.c.bf16 %v2249, %v2248
      %v2266 = vunpack.c.l.b16 %v2250
      %v2267 = vunpack.c.h.b16 %v2250
      %v2268 = vunpack.c.l.b16 %v2251
      %v2269 = vunpack.c.h.b16 %v2251
      %v2270 = vunpack.c.l.b16 %v2252
      %v2271 = vunpack.c.h.b16 %v2252
      %v2272 = vunpack.c.l.b16 %v2253
      %v2273 = vunpack.c.h.b16 %v2253
      %v2274 = vunpack.c.l.b16 %v2254
      %v2275 = vunpack.c.h.b16 %v2254
      %v2276 = vunpack.c.l.b16 %v2255
      %v2277 = vunpack.c.h.b16 %v2255
      %v2278 = vunpack.c.l.b16 %v2256
      %v2279 = vunpack.c.h.b16 %v2256
      %v2280 = vunpack.c.l.b16 %v2257
      %v2281 = vunpack.c.h.b16 %v2257
      %v2282 = vpack.c.b16 %v2266, %v2266
      %v2283 = vpack.c.b16 %v2267, %v2267
      %v2284 = vpack.c.b16 %v2268, %v2268
      %v2285 = vpack.c.b16 %v2269, %v2269
      %v2286 = vpack.c.b16 %v2270, %v2270
      %v2287 = vpack.c.b16 %v2271, %v2271
      %v2288 = vpack.c.b16 %v2272, %v2272
      %v2289 = vpack.c.b16 %v2273, %v2273
      %v2290 = vpack.c.b16 %v2274, %v2274
      %v2291 = vpack.c.b16 %v2275, %v2275
      %v2292 = vpack.c.b16 %v2276, %v2276
      %v2293 = vpack.c.b16 %v2277, %v2277
      %v2294 = vpack.c.b16 %v2278, %v2278
      %v2295 = vpack.c.b16 %v2279, %v2279
      %v2296 = vpack.c.b16 %v2280, %v2280
      %v2297 = vpack.c.b16 %v2281, %v2281
      %2298 = vrot.lane.b32.xlu0 %v2282, 8
      %v2299 = vpop.permute.xlu0 %2298
      %2300 = vrot.lane.b32.xlu0 %v2283, 8
      %v2301 = vpop.permute.xlu0 %2300
      %2302 = vrot.lane.b32.xlu0 %v2284, 8
      %v2303 = vpop.permute.xlu0 %2302
      %2304 = vrot.lane.b32.xlu0 %v2285, 8
      %v2305 = vpop.permute.xlu0 %2304
      %2306 = vrot.lane.b32.xlu0 %v2286, 8
      %v2307 = vpop.permute.xlu0 %2306
      %2308 = vrot.lane.b32.xlu0 %v2287, 8
      %v2309 = vpop.permute.xlu0 %2308
      %2310 = vrot.lane.b32.xlu0 %v2288, 8
      %v2311 = vpop.permute.xlu0 %2310
      %2312 = vrot.lane.b32.xlu0 %v2289, 8
      %v2313 = vpop.permute.xlu0 %2312
      %2314 = vrot.lane.b32.xlu0 %v2290, 8
      %v2315 = vpop.permute.xlu0 %2314
      %2316 = vrot.lane.b32.xlu0 %v2291, 8
      %v2317 = vpop.permute.xlu0 %2316
      %2318 = vrot.lane.b32.xlu0 %v2292, 8
      %v2319 = vpop.permute.xlu0 %2318
      %2320 = vrot.lane.b32.xlu0 %v2293, 8
      %v2321 = vpop.permute.xlu0 %2320
      %2322 = vrot.lane.b32.xlu0 %v2294, 8
      %v2323 = vpop.permute.xlu0 %2322
      %2324 = vrot.lane.b32.xlu0 %v2295, 8
      %v2325 = vpop.permute.xlu0 %2324
      %2326 = vrot.lane.b32.xlu0 %v2296, 8
      %v2327 = vpop.permute.xlu0 %2326
      %2328 = vrot.lane.b32.xlu0 %v2297, 8
      %v2329 = vpop.permute.xlu0 %2328
      %vm2346 = vcmask 126016
      %2347 = vst.msk [vmem:[#allocation5] sm:$0xf] %vm2346, %v2299
      %2348 = vst.msk [vmem:[#allocation5 + $0x4] sm:$0xf] %vm2346, %v2301
      %2349 = vst.msk [vmem:[#allocation5 + $0x8] sm:$0xf] %vm2346, %v2303
      %2350 = vst.msk [vmem:[#allocation5 + $0xc] sm:$0xf] %vm2346, %v2305
      %2351 = vst.msk [vmem:[#allocation5 + $0x10] sm:$0xf] %vm2346, %v2307
      %2352 = vst.msk [vmem:[#allocation5 + $0x14] sm:$0xf] %vm2346, %v2309
      %2353 = vst.msk [vmem:[#allocation5 + $0x18] sm:$0xf] %vm2346, %v2311
      %2354 = vst.msk [vmem:[#allocation5 + $0x1c] sm:$0xf] %vm2346, %v2313
      %2355 = vst.msk [vmem:[#allocation5 + $0x20] sm:$0xf] %vm2346, %v2315
      %2356 = vst.msk [vmem:[#allocation5 + $0x24] sm:$0xf] %vm2346, %v2317
      %2357 = vst.msk [vmem:[#allocation5 + $0x28] sm:$0xf] %vm2346, %v2319
      %2358 = vst.msk [vmem:[#allocation5 + $0x2c] sm:$0xf] %vm2346, %v2321
      %2359 = vst.msk [vmem:[#allocation5 + $0x30] sm:$0xf] %vm2346, %v2323
      %2360 = vst.msk [vmem:[#allocation5 + $0x34] sm:$0xf] %vm2346, %v2325
      %2361 = vst.msk [vmem:[#allocation5 + $0x38] sm:$0xf] %vm2346, %v2327
      %2362 = vst.msk [vmem:[#allocation5 + $0x3c] sm:$0xf] %vm2346, %v2329
      %v2363 = vld [vmem:[#allocation4] sm:$0xf]
      %v2364 = vld [vmem:[#allocation4 + $0x4] sm:$0xf]
      %v2365 = vld [vmem:[#allocation4 + $0x8] sm:$0xf]
      %v2366 = vld [vmem:[#allocation4 + $0xc] sm:$0xf]
      %v2367 = vld [vmem:[#allocation4 + $0x10] sm:$0xf]
      %v2368 = vld [vmem:[#allocation4 + $0x14] sm:$0xf]
      %v2369 = vld [vmem:[#allocation4 + $0x18] sm:$0xf]
      %v2370 = vld [vmem:[#allocation4 + $0x1c] sm:$0xf]
      %v2371 = vld [vmem:[#allocation4 + $0x20] sm:$0xf]
      %v2372 = vld [vmem:[#allocation4 + $0x24] sm:$0xf]
      %v2373 = vld [vmem:[#allocation4 + $0x28] sm:$0xf]
      %v2374 = vld [vmem:[#allocation4 + $0x2c] sm:$0xf]
      %v2375 = vld [vmem:[#allocation4 + $0x30] sm:$0xf]
      %v2376 = vld [vmem:[#allocation4 + $0x34] sm:$0xf]
      %v2377 = vld [vmem:[#allocation4 + $0x38] sm:$0xf]
      %v2378 = vld [vmem:[#allocation4 + $0x3c] sm:$0xf]
      %v2379 = vld [vmem:[#allocation2 + $0x8] sm:$0xf]
      %v2380 = vld [vmem:[#allocation3] sm:$0xf]
      %v2381 = vld [vmem:[#allocation3 + $0x4] sm:$0xf]
      %v2382 = vld [vmem:[#allocation3 + $0x8] sm:$0xf]
      %v2383 = vld [vmem:[#allocation3 + $0xc] sm:$0xf]
      %v2384 = vld [vmem:[#allocation3 + $0x10] sm:$0xf]
      %v2385 = vld [vmem:[#allocation3 + $0x14] sm:$0xf]
      %v2386 = vld [vmem:[#allocation3 + $0x18] sm:$0xf]
      %v2387 = vld [vmem:[#allocation3 + $0x1c] sm:$0xf]
      %v2388 = vld [vmem:[#allocation3 + $0x20] sm:$0xf]
      %v2389 = vld [vmem:[#allocation3 + $0x24] sm:$0xf]
      %v2390 = vld [vmem:[#allocation3 + $0x28] sm:$0xf]
      %v2391 = vld [vmem:[#allocation3 + $0x2c] sm:$0xf]
      %v2392 = vld [vmem:[#allocation3 + $0x30] sm:$0xf]
      %v2393 = vld [vmem:[#allocation3 + $0x34] sm:$0xf]
      %v2394 = vld [vmem:[#allocation3 + $0x38] sm:$0xf]
      %v2395 = vld [vmem:[#allocation3 + $0x3c] sm:$0xf]
      %v2412 = vunpack.c.l.b16 %v2363
      %v2413 = vunpack.c.l.b16 %v2364
      %v2414 = vunpack.c.l.b16 %v2365
      %v2415 = vunpack.c.l.b16 %v2366
      %v2416 = vunpack.c.l.b16 %v2367
      %v2417 = vunpack.c.l.b16 %v2368
      %v2418 = vunpack.c.l.b16 %v2369
      %v2419 = vunpack.c.l.b16 %v2370
      %v2420 = vunpack.c.l.b16 %v2371
      %v2421 = vunpack.c.l.b16 %v2372
      %v2422 = vunpack.c.l.b16 %v2373
      %v2423 = vunpack.c.l.b16 %v2374
      %v2424 = vunpack.c.l.b16 %v2375
      %v2425 = vunpack.c.l.b16 %v2376
      %v2426 = vunpack.c.l.b16 %v2377
      %v2427 = vunpack.c.l.b16 %v2378
      %v2428 = vpack.c.b16 %v2413, %v2412
      %v2429 = vpack.c.b16 %v2415, %v2414
      %v2430 = vpack.c.b16 %v2417, %v2416
      %v2431 = vpack.c.b16 %v2419, %v2418
      %v2432 = vpack.c.b16 %v2421, %v2420
      %v2433 = vpack.c.b16 %v2423, %v2422
      %v2434 = vpack.c.b16 %v2425, %v2424
      %v2435 = vpack.c.b16 %v2427, %v2426
      %2436 = vrot.lane.b32.xlu0 %v2428, 112
      %v2437 = vpop.permute.xlu0 %2436
      %2438 = vrot.lane.b32.xlu0 %v2429, 112
      %v2439 = vpop.permute.xlu0 %2438
      %2440 = vrot.lane.b32.xlu0 %v2430, 112
      %v2441 = vpop.permute.xlu0 %2440
      %2442 = vrot.lane.b32.xlu0 %v2431, 112
      %v2443 = vpop.permute.xlu0 %2442
      %2444 = vrot.lane.b32.xlu0 %v2432, 112
      %v2445 = vpop.permute.xlu0 %2444
      %2446 = vrot.lane.b32.xlu0 %v2433, 112
      %v2447 = vpop.permute.xlu0 %2446
      %2448 = vrot.lane.b32.xlu0 %v2434, 112
      %v2449 = vpop.permute.xlu0 %2448
      %2450 = vrot.lane.b32.xlu0 %v2435, 112
      %v2451 = vpop.permute.xlu0 %2450
      %v2453 = vsel %vm1188, %v2437, 0
      %v2456 = vsel %vm1188, %v2439, 0
      %v2459 = vsel %vm1188, %v2441, 0
      %v2462 = vsel %vm1188, %v2443, 0
      %v2465 = vsel %vm1188, %v2445, 0
      %v2468 = vsel %vm1188, %v2447, 0
      %v2471 = vsel %vm1188, %v2449, 0
      %v2474 = vsel %vm1188, %v2451, 0
      %v2477 = vsel %vm1213, %v2379, 0
      %2479 = vmatprep.subr.bf16.mxu0 0
      %2480 = vmatpush1.bf16.msra.mxu0 0
      %2481 = vmatprep.subr.bf16.mxu0 0
      %2482 = vmatpush1.bf16.msra.mxu0 0
      %2483 = vmatprep.subr.bf16.mxu0 0
      %2484 = vmatpush1.bf16.msra.mxu0 0
      %2485 = vmatprep.subr.bf16.mxu0 0
      %2486 = vmatpush1.bf16.msra.mxu0 0
      %2487 = vmatprep.subr.bf16.mxu0 0
      %2488 = vmatpush1.bf16.msra.mxu0 0
      %2489 = vmatprep.subr.bf16.mxu0 0
      %2490 = vmatpush1.bf16.msra.mxu0 0
      %2491 = vmatprep.subr.bf16.mxu0 0
      %2492 = vmatpush1.bf16.msra.mxu0 0
      %2493 = vmatprep.subr.bf16.mxu0 0
      %2494 = vmatpush1.bf16.msra.mxu0 %v2477
      %2495 = vmatprep.subr.bf16.mxu0 0
      %2496 = vmatpush2.bf16.msra.mxu0 0
      %2497 = vmatprep.subr.bf16.mxu0 0
      %2498 = vmatpush2.bf16.msra.mxu0 0
      %2499 = vmatprep.subr.bf16.mxu0 0
      %2500 = vmatpush2.bf16.msra.mxu0 0
      %2501 = vmatprep.subr.bf16.mxu0 0
      %2502 = vmatpush2.bf16.msra.mxu0 0
      %2503 = vmatprep.subr.bf16.mxu0 0
      %2504 = vmatpush2.bf16.msra.mxu0 0
      %2505 = vmatprep.subr.bf16.mxu0 0
      %2506 = vmatpush2.bf16.msra.mxu0 0
      %2507 = vmatprep.subr.bf16.mxu0 0
      %2508 = vmatpush2.bf16.msra.mxu0 0
      %2509 = vmatprep.subr.bf16.mxu0 0
      %2510 = vmatpush2.bf16.msra.mxu0 0
      %2511 = vmatprep.mubr.bf16.mxu0 0
      %2512 = vmatmul.mubr.bf16.gmra.mxu0 %v2453
      %v2513 = vpop.f32.mrf.mxu0
      %v2514 = vadd.f32 0.0, %v2513
      %v2515 = vpop.f32.mrf.mxu0
      %v2516 = vpop.f32.mrf.mxu0
      %v2517 = vadd.f32 0.0, %v2516
      %v2518 = vpop.f32.mrf.mxu0
      %2519 = vmatprep.mubr.bf16.mxu0 0
      %2520 = vmatmul.mubr.bf16.gmra.mxu0 %v2456
      %v2521 = vpop.f32.mrf.mxu0
      %v2522 = vadd.f32 0.0, %v2521
      %v2523 = vpop.f32.mrf.mxu0
      %v2524 = vpop.f32.mrf.mxu0
      %v2525 = vadd.f32 0.0, %v2524
      %v2526 = vpop.f32.mrf.mxu0
      %2527 = vmatprep.mubr.bf16.mxu0 0
      %2528 = vmatmul.mubr.bf16.gmra.mxu0 %v2459
      %v2529 = vpop.f32.mrf.mxu0
      %v2530 = vadd.f32 0.0, %v2529
      %v2531 = vpop.f32.mrf.mxu0
      %v2532 = vpop.f32.mrf.mxu0
      %v2533 = vadd.f32 0.0, %v2532
      %v2534 = vpop.f32.mrf.mxu0
      %2535 = vmatprep.mubr.bf16.mxu0 0
      %2536 = vmatmul.mubr.bf16.gmra.mxu0 %v2462
      %v2537 = vpop.f32.mrf.mxu0
      %v2538 = vadd.f32 0.0, %v2537
      %v2539 = vpop.f32.mrf.mxu0
      %v2540 = vpop.f32.mrf.mxu0
      %v2541 = vadd.f32 0.0, %v2540
      %v2542 = vpop.f32.mrf.mxu0
      %2543 = vmatprep.mubr.bf16.mxu0 0
      %2544 = vmatmul.mubr.bf16.gmra.mxu0 %v2465
      %v2545 = vpop.f32.mrf.mxu0
      %v2546 = vadd.f32 0.0, %v2545
      %v2547 = vpop.f32.mrf.mxu0
      %v2548 = vpop.f32.mrf.mxu0
      %v2549 = vadd.f32 0.0, %v2548
      %v2550 = vpop.f32.mrf.mxu0
      %2551 = vmatprep.mubr.bf16.mxu0 0
      %2552 = vmatmul.mubr.bf16.gmra.mxu0 %v2468
      %v2553 = vpop.f32.mrf.mxu0
      %v2554 = vadd.f32 0.0, %v2553
      %v2555 = vpop.f32.mrf.mxu0
      %v2556 = vpop.f32.mrf.mxu0
      %v2557 = vadd.f32 0.0, %v2556
      %v2558 = vpop.f32.mrf.mxu0
      %2559 = vmatprep.mubr.bf16.mxu0 0
      %2560 = vmatmul.mubr.bf16.gmra.mxu0 %v2471
      %v2561 = vpop.f32.mrf.mxu0
      %v2562 = vadd.f32 0.0, %v2561
      %v2563 = vpop.f32.mrf.mxu0
      %v2564 = vpop.f32.mrf.mxu0
      %v2565 = vadd.f32 0.0, %v2564
      %v2566 = vpop.f32.mrf.mxu0
      %2567 = vmatprep.mubr.bf16.mxu0 0
      %2568 = vmatmul.mubr.bf16.gmra.mxu0 %v2474
      %v2569 = vpop.f32.mrf.mxu0
      %v2570 = vadd.f32 0.0, %v2569
      %v2571 = vpop.f32.mrf.mxu0
      %v2572 = vpop.f32.mrf.mxu0
      %v2573 = vadd.f32 0.0, %v2572
      %v2574 = vpop.f32.mrf.mxu0
      %2575 = vdwg.mxu0
      %v2576 = vsel %vm1114, -1e+30, %v2514
      %v2577 = vsel %vm1114, -1e+30, %v2517
      %v2578 = vsel %vm1114, -1e+30, %v2522
      %v2579 = vsel %vm1114, -1e+30, %v2525
      %v2580 = vsel %vm1114, -1e+30, %v2530
      %v2581 = vsel %vm1114, -1e+30, %v2533
      %v2582 = vsel %vm1114, -1e+30, %v2538
      %v2583 = vsel %vm1114, -1e+30, %v2541
      %v2584 = vsel %vm1114, -1e+30, %v2546
      %v2585 = vsel %vm1114, -1e+30, %v2549
      %v2586 = vsel %vm1114, -1e+30, %v2554
      %v2587 = vsel %vm1114, -1e+30, %v2557
      %v2588 = vsel %vm1114, -1e+30, %v2562
      %v2589 = vsel %vm1114, -1e+30, %v2565
      %v2590 = vsel %vm1114, -1e+30, %v2570
      %v2591 = vsel %vm1114, -1e+30, %v2573
      %2592 = vmax.xlane.f32.xlu0 %v2576
      %v2593 = vpop.xlane.xlu0 %2592
      %2594 = vmax.xlane.f32.xlu0 %v2577
      %v2595 = vpop.xlane.xlu0 %2594
      %2596 = vmax.xlane.f32.xlu0 %v2578
      %v2597 = vpop.xlane.xlu0 %2596
      %2598 = vmax.xlane.f32.xlu0 %v2579
      %v2599 = vpop.xlane.xlu0 %2598
      %2600 = vmax.xlane.f32.xlu0 %v2580
      %v2601 = vpop.xlane.xlu0 %2600
      %2602 = vmax.xlane.f32.xlu0 %v2581
      %v2603 = vpop.xlane.xlu0 %2602
      %2604 = vmax.xlane.f32.xlu0 %v2582
      %v2605 = vpop.xlane.xlu0 %2604
      %2606 = vmax.xlane.f32.xlu0 %v2583
      %v2607 = vpop.xlane.xlu0 %2606
      %2608 = vmax.xlane.f32.xlu0 %v2584
      %v2609 = vpop.xlane.xlu0 %2608
      %2610 = vmax.xlane.f32.xlu0 %v2585
      %v2611 = vpop.xlane.xlu0 %2610
      %2612 = vmax.xlane.f32.xlu0 %v2586
      %v2613 = vpop.xlane.xlu0 %2612
      %2614 = vmax.xlane.f32.xlu0 %v2587
      %v2615 = vpop.xlane.xlu0 %2614
      %2616 = vmax.xlane.f32.xlu0 %v2588
      %v2617 = vpop.xlane.xlu0 %2616
      %2618 = vmax.xlane.f32.xlu0 %v2589
      %v2619 = vpop.xlane.xlu0 %2618
      %2620 = vmax.xlane.f32.xlu0 %v2590
      %v2621 = vpop.xlane.xlu0 %2620
      %2622 = vmax.xlane.f32.xlu0 %v2591
      %v2623 = vpop.xlane.xlu0 %2622
      %v2624 = vsub.f32 %v2576, %v2593
      %v2625 = vsub.f32 %v2577, %v2595
      %v2626 = vsub.f32 %v2578, %v2597
      %v2627 = vsub.f32 %v2579, %v2599
      %v2628 = vsub.f32 %v2580, %v2601
      %v2629 = vsub.f32 %v2581, %v2603
      %v2630 = vsub.f32 %v2582, %v2605
      %v2631 = vsub.f32 %v2583, %v2607
      %v2632 = vsub.f32 %v2584, %v2609
      %v2633 = vsub.f32 %v2585, %v2611
      %v2634 = vsub.f32 %v2586, %v2613
      %v2635 = vsub.f32 %v2587, %v2615
      %v2636 = vsub.f32 %v2588, %v2617
      %v2637 = vsub.f32 %v2589, %v2619
      %v2638 = vsub.f32 %v2590, %v2621
      %v2639 = vsub.f32 %v2591, %v2623
      %v2640 = vmul.f32 %v2624, 1.442695
      %v2641 = vpow.pop %v2640
      %v2642 = vmul.f32 %v2625, 1.442695
      %v2643 = vpow.pop %v2642
      %v2644 = vmul.f32 %v2626, 1.442695
      %v2645 = vpow.pop %v2644
      %v2646 = vmul.f32 %v2627, 1.442695
      %v2647 = vpow.pop %v2646
      %v2648 = vmul.f32 %v2628, 1.442695
      %v2649 = vpow.pop %v2648
      %v2650 = vmul.f32 %v2629, 1.442695
      %v2651 = vpow.pop %v2650
      %v2652 = vmul.f32 %v2630, 1.442695
      %v2653 = vpow.pop %v2652
      %v2654 = vmul.f32 %v2631, 1.442695
      %v2655 = vpow.pop %v2654
      %v2656 = vmul.f32 %v2632, 1.442695
      %v2657 = vpow.pop %v2656
      %v2658 = vmul.f32 %v2633, 1.442695
      %v2659 = vpow.pop %v2658
      %v2660 = vmul.f32 %v2634, 1.442695
      %v2661 = vpow.pop %v2660
      %v2662 = vmul.f32 %v2635, 1.442695
      %v2663 = vpow.pop %v2662
      %v2664 = vmul.f32 %v2636, 1.442695
      %v2665 = vpow.pop %v2664
      %v2666 = vmul.f32 %v2637, 1.442695
      %v2667 = vpow.pop %v2666
      %v2668 = vmul.f32 %v2638, 1.442695
      %v2669 = vpow.pop %v2668
      %v2670 = vmul.f32 %v2639, 1.442695
      %v2671 = vpow.pop %v2670
      %2672 = vadd.xlane.f32.xlu0 %v2641
      %v2673 = vpop.xlane.xlu0 %2672
      %2674 = vadd.xlane.f32.xlu0 %v2643
      %v2675 = vpop.xlane.xlu0 %2674
      %2676 = vadd.xlane.f32.xlu0 %v2645
      %v2677 = vpop.xlane.xlu0 %2676
      %2678 = vadd.xlane.f32.xlu0 %v2647
      %v2679 = vpop.xlane.xlu0 %2678
      %2680 = vadd.xlane.f32.xlu0 %v2649
      %v2681 = vpop.xlane.xlu0 %2680
      %2682 = vadd.xlane.f32.xlu0 %v2651
      %v2683 = vpop.xlane.xlu0 %2682
      %2684 = vadd.xlane.f32.xlu0 %v2653
      %v2685 = vpop.xlane.xlu0 %2684
      %2686 = vadd.xlane.f32.xlu0 %v2655
      %v2687 = vpop.xlane.xlu0 %2686
      %2688 = vadd.xlane.f32.xlu0 %v2657
      %v2689 = vpop.xlane.xlu0 %2688
      %2690 = vadd.xlane.f32.xlu0 %v2659
      %v2691 = vpop.xlane.xlu0 %2690
      %2692 = vadd.xlane.f32.xlu0 %v2661
      %v2693 = vpop.xlane.xlu0 %2692
      %2694 = vadd.xlane.f32.xlu0 %v2663
      %v2695 = vpop.xlane.xlu0 %2694
      %2696 = vadd.xlane.f32.xlu0 %v2665
      %v2697 = vpop.xlane.xlu0 %2696
      %2698 = vadd.xlane.f32.xlu0 %v2667
      %v2699 = vpop.xlane.xlu0 %2698
      %2700 = vadd.xlane.f32.xlu0 %v2669
      %v2701 = vpop.xlane.xlu0 %2700
      %2702 = vadd.xlane.f32.xlu0 %v2671
      %v2703 = vpop.xlane.xlu0 %2702
      %v2704 = vpack.c.bf16 %v2643, %v2641
      %v2705 = vpack.c.bf16 %v2647, %v2645
      %v2706 = vpack.c.bf16 %v2651, %v2649
      %v2707 = vpack.c.bf16 %v2655, %v2653
      %v2708 = vpack.c.bf16 %v2659, %v2657
      %v2709 = vpack.c.bf16 %v2663, %v2661
      %v2710 = vpack.c.bf16 %v2667, %v2665
      %v2711 = vpack.c.bf16 %v2671, %v2669
      %v2728 = vunpack.c.l.b16 %v2380
      %v2729 = vunpack.c.l.b16 %v2381
      %v2730 = vunpack.c.l.b16 %v2382
      %v2731 = vunpack.c.l.b16 %v2383
      %v2732 = vunpack.c.l.b16 %v2384
      %v2733 = vunpack.c.l.b16 %v2385
      %v2734 = vunpack.c.l.b16 %v2386
      %v2735 = vunpack.c.l.b16 %v2387
      %v2736 = vunpack.c.l.b16 %v2388
      %v2737 = vunpack.c.l.b16 %v2389
      %v2738 = vunpack.c.l.b16 %v2390
      %v2739 = vunpack.c.l.b16 %v2391
      %v2740 = vunpack.c.l.b16 %v2392
      %v2741 = vunpack.c.l.b16 %v2393
      %v2742 = vunpack.c.l.b16 %v2394
      %v2743 = vunpack.c.l.b16 %v2395
      %v2744 = vpack.c.b16 %v2729, %v2728
      %v2745 = vpack.c.b16 %v2731, %v2730
      %v2746 = vpack.c.b16 %v2733, %v2732
      %v2747 = vpack.c.b16 %v2735, %v2734
      %v2748 = vpack.c.b16 %v2737, %v2736
      %v2749 = vpack.c.b16 %v2739, %v2738
      %v2750 = vpack.c.b16 %v2741, %v2740
      %v2751 = vpack.c.b16 %v2743, %v2742
      %2752 = vrot.lane.b32.xlu0 %v2744, 112
      %v2753 = vpop.permute.xlu0 %2752
      %2754 = vrot.lane.b32.xlu0 %v2745, 112
      %v2755 = vpop.permute.xlu0 %2754
      %2756 = vrot.lane.b32.xlu0 %v2746, 112
      %v2757 = vpop.permute.xlu0 %2756
      %2758 = vrot.lane.b32.xlu0 %v2747, 112
      %v2759 = vpop.permute.xlu0 %2758
      %2760 = vrot.lane.b32.xlu0 %v2748, 112
      %v2761 = vpop.permute.xlu0 %2760
      %2762 = vrot.lane.b32.xlu0 %v2749, 112
      %v2763 = vpop.permute.xlu0 %2762
      %2764 = vrot.lane.b32.xlu0 %v2750, 112
      %v2765 = vpop.permute.xlu0 %2764
      %2766 = vrot.lane.b32.xlu0 %v2751, 112
      %v2767 = vpop.permute.xlu0 %2766
      %2776 = vmatprep.subr.bf16.mxu0 0
      %2777 = vmatpush1.bf16.msra.mxu0 %v2767
      %2778 = vmatprep.subr.bf16.mxu0 0
      %2779 = vmatpush1.bf16.msra.mxu0 %v2765
      %2780 = vmatprep.subr.bf16.mxu0 0
      %2781 = vmatpush1.bf16.msra.mxu0 %v2763
      %2782 = vmatprep.subr.bf16.mxu0 0
      %2783 = vmatpush1.bf16.msra.mxu0 %v2761
      %2784 = vmatprep.subr.bf16.mxu0 0
      %2785 = vmatpush1.bf16.msra.mxu0 %v2759
      %2786 = vmatprep.subr.bf16.mxu0 0
      %2787 = vmatpush1.bf16.msra.mxu0 %v2757
      %2788 = vmatprep.subr.bf16.mxu0 0
      %2789 = vmatpush1.bf16.msra.mxu0 %v2755
      %2790 = vmatprep.subr.bf16.mxu0 0
      %2791 = vmatpush1.bf16.msra.mxu0 %v2753
      %2792 = vmatprep.subr.bf16.mxu0 0
      %2793 = vmatpush2.bf16.msra.mxu0 0
      %2794 = vmatprep.subr.bf16.mxu0 0
      %2795 = vmatpush2.bf16.msra.mxu0 0
      %2796 = vmatprep.subr.bf16.mxu0 0
      %2797 = vmatpush2.bf16.msra.mxu0 0
      %2798 = vmatprep.subr.bf16.mxu0 0
      %2799 = vmatpush2.bf16.msra.mxu0 0
      %2800 = vmatprep.subr.bf16.mxu0 0
      %2801 = vmatpush2.bf16.msra.mxu0 0
      %2802 = vmatprep.subr.bf16.mxu0 0
      %2803 = vmatpush2.bf16.msra.mxu0 0
      %2804 = vmatprep.subr.bf16.mxu0 0
      %2805 = vmatpush2.bf16.msra.mxu0 0
      %2806 = vmatprep.subr.bf16.mxu0 0
      %2807 = vmatpush2.bf16.msra.mxu0 0
      %2808 = vmatprep.mubr.bf16.mxu0 0
      %2809 = vmatmul.mubr.bf16.gmra.mxu0 %v2704
      %v2810 = vpop.f32.mrf.mxu0
      %v2811 = vadd.f32 0.0, %v2810
      %v2812 = vpop.f32.mrf.mxu0
      %v2813 = vpop.f32.mrf.mxu0
      %v2814 = vadd.f32 0.0, %v2813
      %v2815 = vpop.f32.mrf.mxu0
      %2816 = vmatprep.mubr.bf16.mxu0 0
      %2817 = vmatmul.mubr.bf16.gmra.mxu0 %v2705
      %v2818 = vpop.f32.mrf.mxu0
      %v2819 = vadd.f32 0.0, %v2818
      %v2820 = vpop.f32.mrf.mxu0
      %v2821 = vpop.f32.mrf.mxu0
      %v2822 = vadd.f32 0.0, %v2821
      %v2823 = vpop.f32.mrf.mxu0
      %2824 = vmatprep.mubr.bf16.mxu0 0
      %2825 = vmatmul.mubr.bf16.gmra.mxu0 %v2706
      %v2826 = vpop.f32.mrf.mxu0
      %v2827 = vadd.f32 0.0, %v2826
      %v2828 = vpop.f32.mrf.mxu0
      %v2829 = vpop.f32.mrf.mxu0
      %v2830 = vadd.f32 0.0, %v2829
      %v2831 = vpop.f32.mrf.mxu0
      %2832 = vmatprep.mubr.bf16.mxu0 0
      %2833 = vmatmul.mubr.bf16.gmra.mxu0 %v2707
      %v2834 = vpop.f32.mrf.mxu0
      %v2835 = vadd.f32 0.0, %v2834
      %v2836 = vpop.f32.mrf.mxu0
      %v2837 = vpop.f32.mrf.mxu0
      %v2838 = vadd.f32 0.0, %v2837
      %v2839 = vpop.f32.mrf.mxu0
      %2840 = vmatprep.mubr.bf16.mxu0 0
      %2841 = vmatmul.mubr.bf16.gmra.mxu0 %v2708
      %v2842 = vpop.f32.mrf.mxu0
      %v2843 = vadd.f32 0.0, %v2842
      %v2844 = vpop.f32.mrf.mxu0
      %v2845 = vpop.f32.mrf.mxu0
      %v2846 = vadd.f32 0.0, %v2845
      %v2847 = vpop.f32.mrf.mxu0
      %2848 = vmatprep.mubr.bf16.mxu0 0
      %2849 = vmatmul.mubr.bf16.gmra.mxu0 %v2709
      %v2850 = vpop.f32.mrf.mxu0
      %v2851 = vadd.f32 0.0, %v2850
      %v2852 = vpop.f32.mrf.mxu0
      %v2853 = vpop.f32.mrf.mxu0
      %v2854 = vadd.f32 0.0, %v2853
      %v2855 = vpop.f32.mrf.mxu0
      %2856 = vmatprep.mubr.bf16.mxu0 0
      %2857 = vmatmul.mubr.bf16.gmra.mxu0 %v2710
      %v2858 = vpop.f32.mrf.mxu0
      %v2859 = vadd.f32 0.0, %v2858
      %v2860 = vpop.f32.mrf.mxu0
      %v2861 = vpop.f32.mrf.mxu0
      %v2862 = vadd.f32 0.0, %v2861
      %v2863 = vpop.f32.mrf.mxu0
      %2864 = vmatprep.mubr.bf16.mxu0 0
      %2865 = vmatmul.mubr.bf16.gmra.mxu0 %v2711
      %v2866 = vpop.f32.mrf.mxu0
      %v2867 = vadd.f32 0.0, %v2866
      %v2868 = vpop.f32.mrf.mxu0
      %v2869 = vpop.f32.mrf.mxu0
      %v2870 = vadd.f32 0.0, %v2869
      %v2871 = vpop.f32.mrf.mxu0
      %2872 = vdwg.mxu0
      %v2873 = vrcp.pop %v2673
      %v2874 = vrcp.pop %v2675
      %v2875 = vrcp.pop %v2677
      %v2876 = vrcp.pop %v2679
      %v2877 = vrcp.pop %v2681
      %v2878 = vrcp.pop %v2683
      %v2879 = vrcp.pop %v2685
      %v2880 = vrcp.pop %v2687
      %v2881 = vrcp.pop %v2689
      %v2882 = vrcp.pop %v2691
      %v2883 = vrcp.pop %v2693
      %v2884 = vrcp.pop %v2695
      %v2885 = vrcp.pop %v2697
      %v2886 = vrcp.pop %v2699
      %v2887 = vrcp.pop %v2701
      %v2888 = vrcp.pop %v2703
      %v2889 = vmul.f32 %v2811, %v2873
      %v2890 = vmul.f32 %v2814, %v2874
      %v2891 = vmul.f32 %v2819, %v2875
      %v2892 = vmul.f32 %v2822, %v2876
      %v2893 = vmul.f32 %v2827, %v2877
      %v2894 = vmul.f32 %v2830, %v2878
      %v2895 = vmul.f32 %v2835, %v2879
      %v2896 = vmul.f32 %v2838, %v2880
      %v2897 = vmul.f32 %v2843, %v2881
      %v2898 = vmul.f32 %v2846, %v2882
      %v2899 = vmul.f32 %v2851, %v2883
      %v2900 = vmul.f32 %v2854, %v2884
      %v2901 = vmul.f32 %v2859, %v2885
      %v2902 = vmul.f32 %v2862, %v2886
      %v2903 = vmul.f32 %v2867, %v2887
      %v2904 = vmul.f32 %v2870, %v2888
      %v2905 = vpack.c.bf16 %v2890, %v2889
      %v2906 = vpack.c.bf16 %v2892, %v2891
      %v2907 = vpack.c.bf16 %v2894, %v2893
      %v2908 = vpack.c.bf16 %v2896, %v2895
      %v2909 = vpack.c.bf16 %v2898, %v2897
      %v2910 = vpack.c.bf16 %v2900, %v2899
      %v2911 = vpack.c.bf16 %v2902, %v2901
      %v2912 = vpack.c.bf16 %v2904, %v2903
      %v2921 = vunpack.c.l.b16 %v2905
      %v2922 = vunpack.c.h.b16 %v2905
      %v2923 = vunpack.c.l.b16 %v2906
      %v2924 = vunpack.c.h.b16 %v2906
      %v2925 = vunpack.c.l.b16 %v2907
      %v2926 = vunpack.c.h.b16 %v2907
      %v2927 = vunpack.c.l.b16 %v2908
      %v2928 = vunpack.c.h.b16 %v2908
      %v2929 = vunpack.c.l.b16 %v2909
      %v2930 = vunpack.c.h.b16 %v2909
      %v2931 = vunpack.c.l.b16 %v2910
      %v2932 = vunpack.c.h.b16 %v2910
      %v2933 = vunpack.c.l.b16 %v2911
      %v2934 = vunpack.c.h.b16 %v2911
      %v2935 = vunpack.c.l.b16 %v2912
      %v2936 = vunpack.c.h.b16 %v2912
      %v2937 = vpack.c.b16 %v2921, %v2921
      %v2938 = vpack.c.b16 %v2922, %v2922
      %v2939 = vpack.c.b16 %v2923, %v2923
      %v2940 = vpack.c.b16 %v2924, %v2924
      %v2941 = vpack.c.b16 %v2925, %v2925
      %v2942 = vpack.c.b16 %v2926, %v2926
      %v2943 = vpack.c.b16 %v2927, %v2927
      %v2944 = vpack.c.b16 %v2928, %v2928
      %v2945 = vpack.c.b16 %v2929, %v2929
      %v2946 = vpack.c.b16 %v2930, %v2930
      %v2947 = vpack.c.b16 %v2931, %v2931
      %v2948 = vpack.c.b16 %v2932, %v2932
      %v2949 = vpack.c.b16 %v2933, %v2933
      %v2950 = vpack.c.b16 %v2934, %v2934
      %v2951 = vpack.c.b16 %v2935, %v2935
      %v2952 = vpack.c.b16 %v2936, %v2936
      %2953 = vrot.lane.b32.xlu0 %v2937, 16
      %v2954 = vpop.permute.xlu0 %2953
      %2955 = vrot.lane.b32.xlu0 %v2938, 16
      %v2956 = vpop.permute.xlu0 %2955
      %2957 = vrot.lane.b32.xlu0 %v2939, 16
      %v2958 = vpop.permute.xlu0 %2957
      %2959 = vrot.lane.b32.xlu0 %v2940, 16
      %v2960 = vpop.permute.xlu0 %2959
      %2961 = vrot.lane.b32.xlu0 %v2941, 16
      %v2962 = vpop.permute.xlu0 %2961
      %2963 = vrot.lane.b32.xlu0 %v2942, 16
      %v2964 = vpop.permute.xlu0 %2963
      %2965 = vrot.lane.b32.xlu0 %v2943, 16
      %v2966 = vpop.permute.xlu0 %2965
      %2967 = vrot.lane.b32.xlu0 %v2944, 16
      %v2968 = vpop.permute.xlu0 %2967
      %2969 = vrot.lane.b32.xlu0 %v2945, 16
      %v2970 = vpop.permute.xlu0 %2969
      %2971 = vrot.lane.b32.xlu0 %v2946, 16
      %v2972 = vpop.permute.xlu0 %2971
      %2973 = vrot.lane.b32.xlu0 %v2947, 16
      %v2974 = vpop.permute.xlu0 %2973
      %2975 = vrot.lane.b32.xlu0 %v2948, 16
      %v2976 = vpop.permute.xlu0 %2975
      %2977 = vrot.lane.b32.xlu0 %v2949, 16
      %v2978 = vpop.permute.xlu0 %2977
      %2979 = vrot.lane.b32.xlu0 %v2950, 16
      %v2980 = vpop.permute.xlu0 %2979
      %2981 = vrot.lane.b32.xlu0 %v2951, 16
      %v2982 = vpop.permute.xlu0 %2981
      %2983 = vrot.lane.b32.xlu0 %v2952, 16
      %v2984 = vpop.permute.xlu0 %2983
      %vm3001 = vcmask 191616
      %3002 = vst.msk [vmem:[#allocation5] sm:$0xf] %vm3001, %v2954
      %3003 = vst.msk [vmem:[#allocation5 + $0x4] sm:$0xf] %vm3001, %v2956
      %3004 = vst.msk [vmem:[#allocation5 + $0x8] sm:$0xf] %vm3001, %v2958
      %3005 = vst.msk [vmem:[#allocation5 + $0xc] sm:$0xf] %vm3001, %v2960
      %3006 = vst.msk [vmem:[#allocation5 + $0x10] sm:$0xf] %vm3001, %v2962
      %3007 = vst.msk [vmem:[#allocation5 + $0x14] sm:$0xf] %vm3001, %v2964
      %3008 = vst.msk [vmem:[#allocation5 + $0x18] sm:$0xf] %vm3001, %v2966
      %3009 = vst.msk [vmem:[#allocation5 + $0x1c] sm:$0xf] %vm3001, %v2968
      %3010 = vst.msk [vmem:[#allocation5 + $0x20] sm:$0xf] %vm3001, %v2970
      %3011 = vst.msk [vmem:[#allocation5 + $0x24] sm:$0xf] %vm3001, %v2972
      %3012 = vst.msk [vmem:[#allocation5 + $0x28] sm:$0xf] %vm3001, %v2974
      %3013 = vst.msk [vmem:[#allocation5 + $0x2c] sm:$0xf] %vm3001, %v2976
      %3014 = vst.msk [vmem:[#allocation5 + $0x30] sm:$0xf] %vm3001, %v2978
      %3015 = vst.msk [vmem:[#allocation5 + $0x34] sm:$0xf] %vm3001, %v2980
      %3016 = vst.msk [vmem:[#allocation5 + $0x38] sm:$0xf] %vm3001, %v2982
      %3017 = vst.msk [vmem:[#allocation5 + $0x3c] sm:$0xf] %vm3001, %v2984
      %v3018 = vld [vmem:[#allocation4] sm:$0xf]
      %v3019 = vld [vmem:[#allocation4 + $0x4] sm:$0xf]
      %v3020 = vld [vmem:[#allocation4 + $0x8] sm:$0xf]
      %v3021 = vld [vmem:[#allocation4 + $0xc] sm:$0xf]
      %v3022 = vld [vmem:[#allocation4 + $0x10] sm:$0xf]
      %v3023 = vld [vmem:[#allocation4 + $0x14] sm:$0xf]
      %v3024 = vld [vmem:[#allocation4 + $0x18] sm:$0xf]
      %v3025 = vld [vmem:[#allocation4 + $0x1c] sm:$0xf]
      %v3026 = vld [vmem:[#allocation4 + $0x20] sm:$0xf]
      %v3027 = vld [vmem:[#allocation4 + $0x24] sm:$0xf]
      %v3028 = vld [vmem:[#allocation4 + $0x28] sm:$0xf]
      %v3029 = vld [vmem:[#allocation4 + $0x2c] sm:$0xf]
      %v3030 = vld [vmem:[#allocation4 + $0x30] sm:$0xf]
      %v3031 = vld [vmem:[#allocation4 + $0x34] sm:$0xf]
      %v3032 = vld [vmem:[#allocation4 + $0x38] sm:$0xf]
      %v3033 = vld [vmem:[#allocation4 + $0x3c] sm:$0xf]
      %v3034 = vld [vmem:[#allocation2 + $0xc] sm:$0xf]
      %v3035 = vld [vmem:[#allocation3] sm:$0xf]
      %v3036 = vld [vmem:[#allocation3 + $0x4] sm:$0xf]
      %v3037 = vld [vmem:[#allocation3 + $0x8] sm:$0xf]
      %v3038 = vld [vmem:[#allocation3 + $0xc] sm:$0xf]
      %v3039 = vld [vmem:[#allocation3 + $0x10] sm:$0xf]
      %v3040 = vld [vmem:[#allocation3 + $0x14] sm:$0xf]
      %v3041 = vld [vmem:[#allocation3 + $0x18] sm:$0xf]
      %v3042 = vld [vmem:[#allocation3 + $0x1c] sm:$0xf]
      %v3043 = vld [vmem:[#allocation3 + $0x20] sm:$0xf]
      %v3044 = vld [vmem:[#allocation3 + $0x24] sm:$0xf]
      %v3045 = vld [vmem:[#allocation3 + $0x28] sm:$0xf]
      %v3046 = vld [vmem:[#allocation3 + $0x2c] sm:$0xf]
      %v3047 = vld [vmem:[#allocation3 + $0x30] sm:$0xf]
      %v3048 = vld [vmem:[#allocation3 + $0x34] sm:$0xf]
      %v3049 = vld [vmem:[#allocation3 + $0x38] sm:$0xf]
      %v3050 = vld [vmem:[#allocation3 + $0x3c] sm:$0xf]
      %v3067 = vunpack.c.l.b16 %v3018
      %v3068 = vunpack.c.l.b16 %v3019
      %v3069 = vunpack.c.l.b16 %v3020
      %v3070 = vunpack.c.l.b16 %v3021
      %v3071 = vunpack.c.l.b16 %v3022
      %v3072 = vunpack.c.l.b16 %v3023
      %v3073 = vunpack.c.l.b16 %v3024
      %v3074 = vunpack.c.l.b16 %v3025
      %v3075 = vunpack.c.l.b16 %v3026
      %v3076 = vunpack.c.l.b16 %v3027
      %v3077 = vunpack.c.l.b16 %v3028
      %v3078 = vunpack.c.l.b16 %v3029
      %v3079 = vunpack.c.l.b16 %v3030
      %v3080 = vunpack.c.l.b16 %v3031
      %v3081 = vunpack.c.l.b16 %v3032
      %v3082 = vunpack.c.l.b16 %v3033
      %v3083 = vpack.c.b16 %v3068, %v3067
      %v3084 = vpack.c.b16 %v3070, %v3069
      %v3085 = vpack.c.b16 %v3072, %v3071
      %v3086 = vpack.c.b16 %v3074, %v3073
      %v3087 = vpack.c.b16 %v3076, %v3075
      %v3088 = vpack.c.b16 %v3078, %v3077
      %v3089 = vpack.c.b16 %v3080, %v3079
      %v3090 = vpack.c.b16 %v3082, %v3081
      %3091 = vrot.lane.b32.xlu0 %v3083, 104
      %v3092 = vpop.permute.xlu0 %3091
      %3093 = vrot.lane.b32.xlu0 %v3084, 104
      %v3094 = vpop.permute.xlu0 %3093
      %3095 = vrot.lane.b32.xlu0 %v3085, 104
      %v3096 = vpop.permute.xlu0 %3095
      %3097 = vrot.lane.b32.xlu0 %v3086, 104
      %v3098 = vpop.permute.xlu0 %3097
      %3099 = vrot.lane.b32.xlu0 %v3087, 104
      %v3100 = vpop.permute.xlu0 %3099
      %3101 = vrot.lane.b32.xlu0 %v3088, 104
      %v3102 = vpop.permute.xlu0 %3101
      %3103 = vrot.lane.b32.xlu0 %v3089, 104
      %v3104 = vpop.permute.xlu0 %3103
      %3105 = vrot.lane.b32.xlu0 %v3090, 104
      %v3106 = vpop.permute.xlu0 %3105
      %v3108 = vsel %vm1188, %v3092, 0
      %v3111 = vsel %vm1188, %v3094, 0
      %v3114 = vsel %vm1188, %v3096, 0
      %v3117 = vsel %vm1188, %v3098, 0
      %v3120 = vsel %vm1188, %v3100, 0
      %v3123 = vsel %vm1188, %v3102, 0
      %v3126 = vsel %vm1188, %v3104, 0
      %v3129 = vsel %vm1188, %v3106, 0
      %v3132 = vsel %vm1213, %v3034, 0
      %3134 = vmatprep.subr.bf16.mxu0 0
      %3135 = vmatpush1.bf16.msra.mxu0 0
      %3136 = vmatprep.subr.bf16.mxu0 0
      %3137 = vmatpush1.bf16.msra.mxu0 0
      %3138 = vmatprep.subr.bf16.mxu0 0
      %3139 = vmatpush1.bf16.msra.mxu0 0
      %3140 = vmatprep.subr.bf16.mxu0 0
      %3141 = vmatpush1.bf16.msra.mxu0 0
      %3142 = vmatprep.subr.bf16.mxu0 0
      %3143 = vmatpush1.bf16.msra.mxu0 0
      %3144 = vmatprep.subr.bf16.mxu0 0
      %3145 = vmatpush1.bf16.msra.mxu0 0
      %3146 = vmatprep.subr.bf16.mxu0 0
      %3147 = vmatpush1.bf16.msra.mxu0 0
      %3148 = vmatprep.subr.bf16.mxu0 0
      %3149 = vmatpush1.bf16.msra.mxu0 %v3132
      %3150 = vmatprep.subr.bf16.mxu0 0
      %3151 = vmatpush2.bf16.msra.mxu0 0
      %3152 = vmatprep.subr.bf16.mxu0 0
      %3153 = vmatpush2.bf16.msra.mxu0 0
      %3154 = vmatprep.subr.bf16.mxu0 0
      %3155 = vmatpush2.bf16.msra.mxu0 0
      %3156 = vmatprep.subr.bf16.mxu0 0
      %3157 = vmatpush2.bf16.msra.mxu0 0
      %3158 = vmatprep.subr.bf16.mxu0 0
      %3159 = vmatpush2.bf16.msra.mxu0 0
      %3160 = vmatprep.subr.bf16.mxu0 0
      %3161 = vmatpush2.bf16.msra.mxu0 0
      %3162 = vmatprep.subr.bf16.mxu0 0
      %3163 = vmatpush2.bf16.msra.mxu0 0
      %3164 = vmatprep.subr.bf16.mxu0 0
      %3165 = vmatpush2.bf16.msra.mxu0 0
      %3166 = vmatprep.mubr.bf16.mxu0 0
      %3167 = vmatmul.mubr.bf16.gmra.mxu0 %v3108
      %v3168 = vpop.f32.mrf.mxu0
      %v3169 = vadd.f32 0.0, %v3168
      %v3170 = vpop.f32.mrf.mxu0
      %v3171 = vpop.f32.mrf.mxu0
      %v3172 = vadd.f32 0.0, %v3171
      %v3173 = vpop.f32.mrf.mxu0
      %3174 = vmatprep.mubr.bf16.mxu0 0
      %3175 = vmatmul.mubr.bf16.gmra.mxu0 %v3111
      %v3176 = vpop.f32.mrf.mxu0
      %v3177 = vadd.f32 0.0, %v3176
      %v3178 = vpop.f32.mrf.mxu0
      %v3179 = vpop.f32.mrf.mxu0
      %v3180 = vadd.f32 0.0, %v3179
      %v3181 = vpop.f32.mrf.mxu0
      %3182 = vmatprep.mubr.bf16.mxu0 0
      %3183 = vmatmul.mubr.bf16.gmra.mxu0 %v3114
      %v3184 = vpop.f32.mrf.mxu0
      %v3185 = vadd.f32 0.0, %v3184
      %v3186 = vpop.f32.mrf.mxu0
      %v3187 = vpop.f32.mrf.mxu0
      %v3188 = vadd.f32 0.0, %v3187
      %v3189 = vpop.f32.mrf.mxu0
      %3190 = vmatprep.mubr.bf16.mxu0 0
      %3191 = vmatmul.mubr.bf16.gmra.mxu0 %v3117
      %v3192 = vpop.f32.mrf.mxu0
      %v3193 = vadd.f32 0.0, %v3192
      %v3194 = vpop.f32.mrf.mxu0
      %v3195 = vpop.f32.mrf.mxu0
      %v3196 = vadd.f32 0.0, %v3195
      %v3197 = vpop.f32.mrf.mxu0
      %3198 = vmatprep.mubr.bf16.mxu0 0
      %3199 = vmatmul.mubr.bf16.gmra.mxu0 %v3120
      %v3200 = vpop.f32.mrf.mxu0
      %v3201 = vadd.f32 0.0, %v3200
      %v3202 = vpop.f32.mrf.mxu0
      %v3203 = vpop.f32.mrf.mxu0
      %v3204 = vadd.f32 0.0, %v3203
      %v3205 = vpop.f32.mrf.mxu0
      %3206 = vmatprep.mubr.bf16.mxu0 0
      %3207 = vmatmul.mubr.bf16.gmra.mxu0 %v3123
      %v3208 = vpop.f32.mrf.mxu0
      %v3209 = vadd.f32 0.0, %v3208
      %v3210 = vpop.f32.mrf.mxu0
      %v3211 = vpop.f32.mrf.mxu0
      %v3212 = vadd.f32 0.0, %v3211
      %v3213 = vpop.f32.mrf.mxu0
      %3214 = vmatprep.mubr.bf16.mxu0 0
      %3215 = vmatmul.mubr.bf16.gmra.mxu0 %v3126
      %v3216 = vpop.f32.mrf.mxu0
      %v3217 = vadd.f32 0.0, %v3216
      %v3218 = vpop.f32.mrf.mxu0
      %v3219 = vpop.f32.mrf.mxu0
      %v3220 = vadd.f32 0.0, %v3219
      %v3221 = vpop.f32.mrf.mxu0
      %3222 = vmatprep.mubr.bf16.mxu0 0
      %3223 = vmatmul.mubr.bf16.gmra.mxu0 %v3129
      %v3224 = vpop.f32.mrf.mxu0
      %v3225 = vadd.f32 0.0, %v3224
      %v3226 = vpop.f32.mrf.mxu0
      %v3227 = vpop.f32.mrf.mxu0
      %v3228 = vadd.f32 0.0, %v3227
      %v3229 = vpop.f32.mrf.mxu0
      %3230 = vdwg.mxu0
      %v3231 = vsel %vm1114, -1e+30, %v3169
      %v3232 = vsel %vm1114, -1e+30, %v3172
      %v3233 = vsel %vm1114, -1e+30, %v3177
      %v3234 = vsel %vm1114, -1e+30, %v3180
      %v3235 = vsel %vm1114, -1e+30, %v3185
      %v3236 = vsel %vm1114, -1e+30, %v3188
      %v3237 = vsel %vm1114, -1e+30, %v3193
      %v3238 = vsel %vm1114, -1e+30, %v3196
      %v3239 = vsel %vm1114, -1e+30, %v3201
      %v3240 = vsel %vm1114, -1e+30, %v3204
      %v3241 = vsel %vm1114, -1e+30, %v3209
      %v3242 = vsel %vm1114, -1e+30, %v3212
      %v3243 = vsel %vm1114, -1e+30, %v3217
      %v3244 = vsel %vm1114, -1e+30, %v3220
      %v3245 = vsel %vm1114, -1e+30, %v3225
      %v3246 = vsel %vm1114, -1e+30, %v3228
      %3247 = vmax.xlane.f32.xlu0 %v3231
      %v3248 = vpop.xlane.xlu0 %3247
      %3249 = vmax.xlane.f32.xlu0 %v3232
      %v3250 = vpop.xlane.xlu0 %3249
      %3251 = vmax.xlane.f32.xlu0 %v3233
      %v3252 = vpop.xlane.xlu0 %3251
      %3253 = vmax.xlane.f32.xlu0 %v3234
      %v3254 = vpop.xlane.xlu0 %3253
      %3255 = vmax.xlane.f32.xlu0 %v3235
      %v3256 = vpop.xlane.xlu0 %3255
      %3257 = vmax.xlane.f32.xlu0 %v3236
      %v3258 = vpop.xlane.xlu0 %3257
      %3259 = vmax.xlane.f32.xlu0 %v3237
      %v3260 = vpop.xlane.xlu0 %3259
      %3261 = vmax.xlane.f32.xlu0 %v3238
      %v3262 = vpop.xlane.xlu0 %3261
      %3263 = vmax.xlane.f32.xlu0 %v3239
      %v3264 = vpop.xlane.xlu0 %3263
      %3265 = vmax.xlane.f32.xlu0 %v3240
      %v3266 = vpop.xlane.xlu0 %3265
      %3267 = vmax.xlane.f32.xlu0 %v3241
      %v3268 = vpop.xlane.xlu0 %3267
      %3269 = vmax.xlane.f32.xlu0 %v3242
      %v3270 = vpop.xlane.xlu0 %3269
      %3271 = vmax.xlane.f32.xlu0 %v3243
      %v3272 = vpop.xlane.xlu0 %3271
      %3273 = vmax.xlane.f32.xlu0 %v3244
      %v3274 = vpop.xlane.xlu0 %3273
      %3275 = vmax.xlane.f32.xlu0 %v3245
      %v3276 = vpop.xlane.xlu0 %3275
      %3277 = vmax.xlane.f32.xlu0 %v3246
      %v3278 = vpop.xlane.xlu0 %3277
      %v3279 = vsub.f32 %v3231, %v3248
      %v3280 = vsub.f32 %v3232, %v3250
      %v3281 = vsub.f32 %v3233, %v3252
      %v3282 = vsub.f32 %v3234, %v3254
      %v3283 = vsub.f32 %v3235, %v3256
      %v3284 = vsub.f32 %v3236, %v3258
      %v3285 = vsub.f32 %v3237, %v3260
      %v3286 = vsub.f32 %v3238, %v3262
      %v3287 = vsub.f32 %v3239, %v3264
      %v3288 = vsub.f32 %v3240, %v3266
      %v3289 = vsub.f32 %v3241, %v3268
      %v3290 = vsub.f32 %v3242, %v3270
      %v3291 = vsub.f32 %v3243, %v3272
      %v3292 = vsub.f32 %v3244, %v3274
      %v3293 = vsub.f32 %v3245, %v3276
      %v3294 = vsub.f32 %v3246, %v3278
      %v3295 = vmul.f32 %v3279, 1.442695
      %v3296 = vpow.pop %v3295
      %v3297 = vmul.f32 %v3280, 1.442695
      %v3298 = vpow.pop %v3297
      %v3299 = vmul.f32 %v3281, 1.442695
      %v3300 = vpow.pop %v3299
      %v3301 = vmul.f32 %v3282, 1.442695
      %v3302 = vpow.pop %v3301
      %v3303 = vmul.f32 %v3283, 1.442695
      %v3304 = vpow.pop %v3303
      %v3305 = vmul.f32 %v3284, 1.442695
      %v3306 = vpow.pop %v3305
      %v3307 = vmul.f32 %v3285, 1.442695
      %v3308 = vpow.pop %v3307
      %v3309 = vmul.f32 %v3286, 1.442695
      %v3310 = vpow.pop %v3309
      %v3311 = vmul.f32 %v3287, 1.442695
      %v3312 = vpow.pop %v3311
      %v3313 = vmul.f32 %v3288, 1.442695
      %v3314 = vpow.pop %v3313
      %v3315 = vmul.f32 %v3289, 1.442695
      %v3316 = vpow.pop %v3315
      %v3317 = vmul.f32 %v3290, 1.442695
      %v3318 = vpow.pop %v3317
      %v3319 = vmul.f32 %v3291, 1.442695
      %v3320 = vpow.pop %v3319
      %v3321 = vmul.f32 %v3292, 1.442695
      %v3322 = vpow.pop %v3321
      %v3323 = vmul.f32 %v3293, 1.442695
      %v3324 = vpow.pop %v3323
      %v3325 = vmul.f32 %v3294, 1.442695
      %v3326 = vpow.pop %v3325
      %3327 = vadd.xlane.f32.xlu0 %v3296
      %v3328 = vpop.xlane.xlu0 %3327
      %3329 = vadd.xlane.f32.xlu0 %v3298
      %v3330 = vpop.xlane.xlu0 %3329
      %3331 = vadd.xlane.f32.xlu0 %v3300
      %v3332 = vpop.xlane.xlu0 %3331
      %3333 = vadd.xlane.f32.xlu0 %v3302
      %v3334 = vpop.xlane.xlu0 %3333
      %3335 = vadd.xlane.f32.xlu0 %v3304
      %v3336 = vpop.xlane.xlu0 %3335
      %3337 = vadd.xlane.f32.xlu0 %v3306
      %v3338 = vpop.xlane.xlu0 %3337
      %3339 = vadd.xlane.f32.xlu0 %v3308
      %v3340 = vpop.xlane.xlu0 %3339
      %3341 = vadd.xlane.f32.xlu0 %v3310
      %v3342 = vpop.xlane.xlu0 %3341
      %3343 = vadd.xlane.f32.xlu0 %v3312
      %v3344 = vpop.xlane.xlu0 %3343
      %3345 = vadd.xlane.f32.xlu0 %v3314
      %v3346 = vpop.xlane.xlu0 %3345
      %3347 = vadd.xlane.f32.xlu0 %v3316
      %v3348 = vpop.xlane.xlu0 %3347
      %3349 = vadd.xlane.f32.xlu0 %v3318
      %v3350 = vpop.xlane.xlu0 %3349
      %3351 = vadd.xlane.f32.xlu0 %v3320
      %v3352 = vpop.xlane.xlu0 %3351
      %3353 = vadd.xlane.f32.xlu0 %v3322
      %v3354 = vpop.xlane.xlu0 %3353
      %3355 = vadd.xlane.f32.xlu0 %v3324
      %v3356 = vpop.xlane.xlu0 %3355
      %3357 = vadd.xlane.f32.xlu0 %v3326
      %v3358 = vpop.xlane.xlu0 %3357
      %v3359 = vpack.c.bf16 %v3298, %v3296
      %v3360 = vpack.c.bf16 %v3302, %v3300
      %v3361 = vpack.c.bf16 %v3306, %v3304
      %v3362 = vpack.c.bf16 %v3310, %v3308
      %v3363 = vpack.c.bf16 %v3314, %v3312
      %v3364 = vpack.c.bf16 %v3318, %v3316
      %v3365 = vpack.c.bf16 %v3322, %v3320
      %v3366 = vpack.c.bf16 %v3326, %v3324
      %v3383 = vunpack.c.l.b16 %v3035
      %v3384 = vunpack.c.l.b16 %v3036
      %v3385 = vunpack.c.l.b16 %v3037
      %v3386 = vunpack.c.l.b16 %v3038
      %v3387 = vunpack.c.l.b16 %v3039
      %v3388 = vunpack.c.l.b16 %v3040
      %v3389 = vunpack.c.l.b16 %v3041
      %v3390 = vunpack.c.l.b16 %v3042
      %v3391 = vunpack.c.l.b16 %v3043
      %v3392 = vunpack.c.l.b16 %v3044
      %v3393 = vunpack.c.l.b16 %v3045
      %v3394 = vunpack.c.l.b16 %v3046
      %v3395 = vunpack.c.l.b16 %v3047
      %v3396 = vunpack.c.l.b16 %v3048
      %v3397 = vunpack.c.l.b16 %v3049
      %v3398 = vunpack.c.l.b16 %v3050
      %v3399 = vpack.c.b16 %v3384, %v3383
      %v3400 = vpack.c.b16 %v3386, %v3385
      %v3401 = vpack.c.b16 %v3388, %v3387
      %v3402 = vpack.c.b16 %v3390, %v3389
      %v3403 = vpack.c.b16 %v3392, %v3391
      %v3404 = vpack.c.b16 %v3394, %v3393
      %v3405 = vpack.c.b16 %v3396, %v3395
      %v3406 = vpack.c.b16 %v3398, %v3397
      %3407 = vrot.lane.b32.xlu0 %v3399, 104
      %v3408 = vpop.permute.xlu0 %3407
      %3409 = vrot.lane.b32.xlu0 %v3400, 104
      %v3410 = vpop.permute.xlu0 %3409
      %3411 = vrot.lane.b32.xlu0 %v3401, 104
      %v3412 = vpop.permute.xlu0 %3411
      %3413 = vrot.lane.b32.xlu0 %v3402, 104
      %v3414 = vpop.permute.xlu0 %3413
      %3415 = vrot.lane.b32.xlu0 %v3403, 104
      %v3416 = vpop.permute.xlu0 %3415
      %3417 = vrot.lane.b32.xlu0 %v3404, 104
      %v3418 = vpop.permute.xlu0 %3417
      %3419 = vrot.lane.b32.xlu0 %v3405, 104
      %v3420 = vpop.permute.xlu0 %3419
      %3421 = vrot.lane.b32.xlu0 %v3406, 104
      %v3422 = vpop.permute.xlu0 %3421
      %3431 = vmatprep.subr.bf16.mxu0 0
      %3432 = vmatpush1.bf16.msra.mxu0 %v3422
      %3433 = vmatprep.subr.bf16.mxu0 0
      %3434 = vmatpush1.bf16.msra.mxu0 %v3420
      %3435 = vmatprep.subr.bf16.mxu0 0
      %3436 = vmatpush1.bf16.msra.mxu0 %v3418
      %3437 = vmatprep.subr.bf16.mxu0 0
      %3438 = vmatpush1.bf16.msra.mxu0 %v3416
      %3439 = vmatprep.subr.bf16.mxu0 0
      %3440 = vmatpush1.bf16.msra.mxu0 %v3414
      %3441 = vmatprep.subr.bf16.mxu0 0
      %3442 = vmatpush1.bf16.msra.mxu0 %v3412
      %3443 = vmatprep.subr.bf16.mxu0 0
      %3444 = vmatpush1.bf16.msra.mxu0 %v3410
      %3445 = vmatprep.subr.bf16.mxu0 0
      %3446 = vmatpush1.bf16.msra.mxu0 %v3408
      %3447 = vmatprep.subr.bf16.mxu0 0
      %3448 = vmatpush2.bf16.msra.mxu0 0
      %3449 = vmatprep.subr.bf16.mxu0 0
      %3450 = vmatpush2.bf16.msra.mxu0 0
      %3451 = vmatprep.subr.bf16.mxu0 0
      %3452 = vmatpush2.bf16.msra.mxu0 0
      %3453 = vmatprep.subr.bf16.mxu0 0
      %3454 = vmatpush2.bf16.msra.mxu0 0
      %3455 = vmatprep.subr.bf16.mxu0 0
      %3456 = vmatpush2.bf16.msra.mxu0 0
      %3457 = vmatprep.subr.bf16.mxu0 0
      %3458 = vmatpush2.bf16.msra.mxu0 0
      %3459 = vmatprep.subr.bf16.mxu0 0
      %3460 = vmatpush2.bf16.msra.mxu0 0
      %3461 = vmatprep.subr.bf16.mxu0 0
      %3462 = vmatpush2.bf16.msra.mxu0 0
      %3463 = vmatprep.mubr.bf16.mxu0 0
      %3464 = vmatmul.mubr.bf16.gmra.mxu0 %v3359
      %v3465 = vpop.f32.mrf.mxu0
      %v3466 = vadd.f32 0.0, %v3465
      %v3467 = vpop.f32.mrf.mxu0
      %v3468 = vpop.f32.mrf.mxu0
      %v3469 = vadd.f32 0.0, %v3468
      %v3470 = vpop.f32.mrf.mxu0
      %3471 = vmatprep.mubr.bf16.mxu0 0
      %3472 = vmatmul.mubr.bf16.gmra.mxu0 %v3360
      %v3473 = vpop.f32.mrf.mxu0
      %v3474 = vadd.f32 0.0, %v3473
      %v3475 = vpop.f32.mrf.mxu0
      %v3476 = vpop.f32.mrf.mxu0
      %v3477 = vadd.f32 0.0, %v3476
      %v3478 = vpop.f32.mrf.mxu0
      %3479 = vmatprep.mubr.bf16.mxu0 0
      %3480 = vmatmul.mubr.bf16.gmra.mxu0 %v3361
      %v3481 = vpop.f32.mrf.mxu0
      %v3482 = vadd.f32 0.0, %v3481
      %v3483 = vpop.f32.mrf.mxu0
      %v3484 = vpop.f32.mrf.mxu0
      %v3485 = vadd.f32 0.0, %v3484
      %v3486 = vpop.f32.mrf.mxu0
      %3487 = vmatprep.mubr.bf16.mxu0 0
      %3488 = vmatmul.mubr.bf16.gmra.mxu0 %v3362
      %v3489 = vpop.f32.mrf.mxu0
      %v3490 = vadd.f32 0.0, %v3489
      %v3491 = vpop.f32.mrf.mxu0
      %v3492 = vpop.f32.mrf.mxu0
      %v3493 = vadd.f32 0.0, %v3492
      %v3494 = vpop.f32.mrf.mxu0
      %3495 = vmatprep.mubr.bf16.mxu0 0
      %3496 = vmatmul.mubr.bf16.gmra.mxu0 %v3363
      %v3497 = vpop.f32.mrf.mxu0
      %v3498 = vadd.f32 0.0, %v3497
      %v3499 = vpop.f32.mrf.mxu0
      %v3500 = vpop.f32.mrf.mxu0
      %v3501 = vadd.f32 0.0, %v3500
      %v3502 = vpop.f32.mrf.mxu0
      %3503 = vmatprep.mubr.bf16.mxu0 0
      %3504 = vmatmul.mubr.bf16.gmra.mxu0 %v3364
      %v3505 = vpop.f32.mrf.mxu0
      %v3506 = vadd.f32 0.0, %v3505
      %v3507 = vpop.f32.mrf.mxu0
      %v3508 = vpop.f32.mrf.mxu0
      %v3509 = vadd.f32 0.0, %v3508
      %v3510 = vpop.f32.mrf.mxu0
      %3511 = vmatprep.mubr.bf16.mxu0 0
      %3512 = vmatmul.mubr.bf16.gmra.mxu0 %v3365
      %v3513 = vpop.f32.mrf.mxu0
      %v3514 = vadd.f32 0.0, %v3513
      %v3515 = vpop.f32.mrf.mxu0
      %v3516 = vpop.f32.mrf.mxu0
      %v3517 = vadd.f32 0.0, %v3516
      %v3518 = vpop.f32.mrf.mxu0
      %3519 = vmatprep.mubr.bf16.mxu0 0
      %3520 = vmatmul.mubr.bf16.gmra.mxu0 %v3366
      %v3521 = vpop.f32.mrf.mxu0
      %v3522 = vadd.f32 0.0, %v3521
      %v3523 = vpop.f32.mrf.mxu0
      %v3524 = vpop.f32.mrf.mxu0
      %v3525 = vadd.f32 0.0, %v3524
      %v3526 = vpop.f32.mrf.mxu0
      %3527 = vdwg.mxu0
      %v3528 = vrcp.pop %v3328
      %v3529 = vrcp.pop %v3330
      %v3530 = vrcp.pop %v3332
      %v3531 = vrcp.pop %v3334
      %v3532 = vrcp.pop %v3336
      %v3533 = vrcp.pop %v3338
      %v3534 = vrcp.pop %v3340
      %v3535 = vrcp.pop %v3342
      %v3536 = vrcp.pop %v3344
      %v3537 = vrcp.pop %v3346
      %v3538 = vrcp.pop %v3348
      %v3539 = vrcp.pop %v3350
      %v3540 = vrcp.pop %v3352
      %v3541 = vrcp.pop %v3354
      %v3542 = vrcp.pop %v3356
      %v3543 = vrcp.pop %v3358
      %v3544 = vmul.f32 %v3466, %v3528
      %v3545 = vmul.f32 %v3469, %v3529
      %v3546 = vmul.f32 %v3474, %v3530
      %v3547 = vmul.f32 %v3477, %v3531
      %v3548 = vmul.f32 %v3482, %v3532
      %v3549 = vmul.f32 %v3485, %v3533
      %v3550 = vmul.f32 %v3490, %v3534
      %v3551 = vmul.f32 %v3493, %v3535
      %v3552 = vmul.f32 %v3498, %v3536
      %v3553 = vmul.f32 %v3501, %v3537
      %v3554 = vmul.f32 %v3506, %v3538
      %v3555 = vmul.f32 %v3509, %v3539
      %v3556 = vmul.f32 %v3514, %v3540
      %v3557 = vmul.f32 %v3517, %v3541
      %v3558 = vmul.f32 %v3522, %v3542
      %v3559 = vmul.f32 %v3525, %v3543
      %v3560 = vpack.c.bf16 %v3545, %v3544
      %v3561 = vpack.c.bf16 %v3547, %v3546
      %v3562 = vpack.c.bf16 %v3549, %v3548
      %v3563 = vpack.c.bf16 %v3551, %v3550
      %v3564 = vpack.c.bf16 %v3553, %v3552
      %v3565 = vpack.c.bf16 %v3555, %v3554
      %v3566 = vpack.c.bf16 %v3557, %v3556
      %v3567 = vpack.c.bf16 %v3559, %v3558
      %v3576 = vunpack.c.l.b16 %v3560
      %v3577 = vunpack.c.h.b16 %v3560
      %v3578 = vunpack.c.l.b16 %v3561
      %v3579 = vunpack.c.h.b16 %v3561
      %v3580 = vunpack.c.l.b16 %v3562
      %v3581 = vunpack.c.h.b16 %v3562
      %v3582 = vunpack.c.l.b16 %v3563
      %v3583 = vunpack.c.h.b16 %v3563
      %v3584 = vunpack.c.l.b16 %v3564
      %v3585 = vunpack.c.h.b16 %v3564
      %v3586 = vunpack.c.l.b16 %v3565
      %v3587 = vunpack.c.h.b16 %v3565
      %v3588 = vunpack.c.l.b16 %v3566
      %v3589 = vunpack.c.h.b16 %v3566
      %v3590 = vunpack.c.l.b16 %v3567
      %v3591 = vunpack.c.h.b16 %v3567
      %v3592 = vpack.c.b16 %v3576, %v3576
      %v3593 = vpack.c.b16 %v3577, %v3577
      %v3594 = vpack.c.b16 %v3578, %v3578
      %v3595 = vpack.c.b16 %v3579, %v3579
      %v3596 = vpack.c.b16 %v3580, %v3580
      %v3597 = vpack.c.b16 %v3581, %v3581
      %v3598 = vpack.c.b16 %v3582, %v3582
      %v3599 = vpack.c.b16 %v3583, %v3583
      %v3600 = vpack.c.b16 %v3584, %v3584
      %v3601 = vpack.c.b16 %v3585, %v3585
      %v3602 = vpack.c.b16 %v3586, %v3586
      %v3603 = vpack.c.b16 %v3587, %v3587
      %v3604 = vpack.c.b16 %v3588, %v3588
      %v3605 = vpack.c.b16 %v3589, %v3589
      %v3606 = vpack.c.b16 %v3590, %v3590
      %v3607 = vpack.c.b16 %v3591, %v3591
      %3608 = vrot.lane.b32.xlu0 %v3592, 24
      %v3609 = vpop.permute.xlu0 %3608
      %3610 = vrot.lane.b32.xlu0 %v3593, 24
      %v3611 = vpop.permute.xlu0 %3610
      %3612 = vrot.lane.b32.xlu0 %v3594, 24
      %v3613 = vpop.permute.xlu0 %3612
      %3614 = vrot.lane.b32.xlu0 %v3595, 24
      %v3615 = vpop.permute.xlu0 %3614
      %3616 = vrot.lane.b32.xlu0 %v3596, 24
      %v3617 = vpop.permute.xlu0 %3616
      %3618 = vrot.lane.b32.xlu0 %v3597, 24
      %v3619 = vpop.permute.xlu0 %3618
      %3620 = vrot.lane.b32.xlu0 %v3598, 24
      %v3621 = vpop.permute.xlu0 %3620
      %3622 = vrot.lane.b32.xlu0 %v3599, 24
      %v3623 = vpop.permute.xlu0 %3622
      %3624 = vrot.lane.b32.xlu0 %v3600, 24
      %v3625 = vpop.permute.xlu0 %3624
      %3626 = vrot.lane.b32.xlu0 %v3601, 24
      %v3627 = vpop.permute.xlu0 %3626
      %3628 = vrot.lane.b32.xlu0 %v3602, 24
      %v3629 = vpop.permute.xlu0 %3628
      %3630 = vrot.lane.b32.xlu0 %v3603, 24
      %v3631 = vpop.permute.xlu0 %3630
      %3632 = vrot.lane.b32.xlu0 %v3604, 24
      %v3633 = vpop.permute.xlu0 %3632
      %3634 = vrot.lane.b32.xlu0 %v3605, 24
      %v3635 = vpop.permute.xlu0 %3634
      %3636 = vrot.lane.b32.xlu0 %v3606, 24
      %v3637 = vpop.permute.xlu0 %3636
      %3638 = vrot.lane.b32.xlu0 %v3607, 24
      %v3639 = vpop.permute.xlu0 %3638
      %vm3656 = vcmask 257216
      %3657 = vst.msk [vmem:[#allocation5] sm:$0xf] %vm3656, %v3609
      %3658 = vst.msk [vmem:[#allocation5 + $0x4] sm:$0xf] %vm3656, %v3611
      %3659 = vst.msk [vmem:[#allocation5 + $0x8] sm:$0xf] %vm3656, %v3613
      %3660 = vst.msk [vmem:[#allocation5 + $0xc] sm:$0xf] %vm3656, %v3615
      %3661 = vst.msk [vmem:[#allocation5 + $0x10] sm:$0xf] %vm3656, %v3617
      %3662 = vst.msk [vmem:[#allocation5 + $0x14] sm:$0xf] %vm3656, %v3619
      %3663 = vst.msk [vmem:[#allocation5 + $0x18] sm:$0xf] %vm3656, %v3621
      %3664 = vst.msk [vmem:[#allocation5 + $0x1c] sm:$0xf] %vm3656, %v3623
      %3665 = vst.msk [vmem:[#allocation5 + $0x20] sm:$0xf] %vm3656, %v3625
      %3666 = vst.msk [vmem:[#allocation5 + $0x24] sm:$0xf] %vm3656, %v3627
      %3667 = vst.msk [vmem:[#allocation5 + $0x28] sm:$0xf] %vm3656, %v3629
      %3668 = vst.msk [vmem:[#allocation5 + $0x2c] sm:$0xf] %vm3656, %v3631
      %3669 = vst.msk [vmem:[#allocation5 + $0x30] sm:$0xf] %vm3656, %v3633
      %3670 = vst.msk [vmem:[#allocation5 + $0x34] sm:$0xf] %vm3656, %v3635
      %3671 = vst.msk [vmem:[#allocation5 + $0x38] sm:$0xf] %vm3656, %v3637
      %3672 = vst.msk [vmem:[#allocation5 + $0x3c] sm:$0xf] %vm3656, %v3639
      %v3673 = vld [vmem:[#allocation5] sm:$0xf]
      %v3674 = vld [vmem:[#allocation5 + $0x4] sm:$0xf]
      %v3675 = vld [vmem:[#allocation5 + $0x8] sm:$0xf]
      %v3676 = vld [vmem:[#allocation5 + $0xc] sm:$0xf]
      %v3677 = vld [vmem:[#allocation5 + $0x10] sm:$0xf]
      %v3678 = vld [vmem:[#allocation5 + $0x14] sm:$0xf]
      %v3679 = vld [vmem:[#allocation5 + $0x18] sm:$0xf]
      %v3680 = vld [vmem:[#allocation5 + $0x1c] sm:$0xf]
      %v3681 = vld [vmem:[#allocation5 + $0x20] sm:$0xf]
      %v3682 = vld [vmem:[#allocation5 + $0x24] sm:$0xf]
      %v3683 = vld [vmem:[#allocation5 + $0x28] sm:$0xf]
      %v3684 = vld [vmem:[#allocation5 + $0x2c] sm:$0xf]
      %v3685 = vld [vmem:[#allocation5 + $0x30] sm:$0xf]
      %v3686 = vld [vmem:[#allocation5 + $0x34] sm:$0xf]
      %v3687 = vld [vmem:[#allocation5 + $0x38] sm:$0xf]
      %v3688 = vld [vmem:[#allocation5 + $0x3c] sm:$0xf]
      %v3689 = vld [vmem:[%s7] sm:$0xf]
      %v3690 = vld [vmem:[%s7 + $0x4] sm:$0xf]
      %v3691 = vld [vmem:[%s7 + $0x8] sm:$0xf]
      %v3692 = vld [vmem:[%s7 + $0xc] sm:$0xf]
      %v3693 = vld [vmem:[%s8] sm:$0x1]
      %v3695 = vlaneseq
      %v3696 = vshrl.u32 %v3695, 7
      %v3697 = vsub.s32 0, %v3696
      %v3698 = vrot.slane %v3693, %v3697
      %v3716 = vunpack.c.l.b16 %v3673
      %v3717 = vunpack.c.l.b16 %v3674
      %v3718 = vunpack.c.l.b16 %v3675
      %v3719 = vunpack.c.l.b16 %v3676
      %v3720 = vunpack.c.l.b16 %v3677
      %v3721 = vunpack.c.l.b16 %v3678
      %v3722 = vunpack.c.l.b16 %v3679
      %v3723 = vunpack.c.l.b16 %v3680
      %v3724 = vunpack.c.l.b16 %v3681
      %v3725 = vunpack.c.l.b16 %v3682
      %v3726 = vunpack.c.l.b16 %v3683
      %v3727 = vunpack.c.l.b16 %v3684
      %v3728 = vunpack.c.l.b16 %v3685
      %v3729 = vunpack.c.l.b16 %v3686
      %v3730 = vunpack.c.l.b16 %v3687
      %v3731 = vunpack.c.l.b16 %v3688
      %v3732 = vpack.c.b16 %v3717, %v3716
      %v3733 = vpack.c.b16 %v3719, %v3718
      %v3734 = vpack.c.b16 %v3721, %v3720
      %v3735 = vpack.c.b16 %v3723, %v3722
      %v3736 = vpack.c.b16 %v3725, %v3724
      %v3737 = vpack.c.b16 %v3727, %v3726
      %v3738 = vpack.c.b16 %v3729, %v3728
      %v3739 = vpack.c.b16 %v3731, %v3730
      %v3744 = vunpack.c.l.b16 %v3689
      %v3745 = vunpack.c.l.b16 %v3690
      %v3746 = vunpack.c.l.b16 %v3691
      %v3747 = vunpack.c.l.b16 %v3692
      %v3748 = vpack.c.b16 %v3745, %v3744
      %v3749 = vpack.c.b16 %v3747, %v3746
      %v3753 = vsel %vm436, %v3732, 0
      %v3756 = vsel %vm436, %v3733, 0
      %v3759 = vsel %vm436, %v3734, 0
      %v3762 = vsel %vm436, %v3735, 0
      %v3765 = vsel %vm436, %v3736, 0
      %v3768 = vsel %vm436, %v3737, 0
      %v3771 = vsel %vm436, %v3738, 0
      %v3774 = vsel %vm436, %v3739, 0
      %3776 = vmatprep.subr.bf16.mxu0 0
      %3777 = vmatpush1.bf16.msra.mxu0 0
      %3778 = vmatprep.subr.bf16.mxu0 0
      %3779 = vmatpush1.bf16.msra.mxu0 0
      %3780 = vmatprep.subr.bf16.mxu0 0
      %3781 = vmatpush1.bf16.msra.mxu0 0
      %3782 = vmatprep.subr.bf16.mxu0 0
      %3783 = vmatpush1.bf16.msra.mxu0 0
      %3784 = vmatprep.subr.bf16.mxu0 0
      %3785 = vmatpush1.bf16.msra.mxu0 0
      %3786 = vmatprep.subr.bf16.mxu0 0
      %3787 = vmatpush1.bf16.msra.mxu0 0
      %3788 = vmatprep.subr.bf16.mxu0 0
      %3789 = vmatpush1.bf16.msra.mxu0 %v3749
      %3790 = vmatprep.subr.bf16.mxu0 0
      %3791 = vmatpush1.bf16.msra.mxu0 %v3748
      %3792 = vmatprep.subr.bf16.mxu0 0
      %3793 = vmatpush2.bf16.msra.mxu0 0
      %3794 = vmatprep.subr.bf16.mxu0 0
      %3795 = vmatpush2.bf16.msra.mxu0 0
      %3796 = vmatprep.subr.bf16.mxu0 0
      %3797 = vmatpush2.bf16.msra.mxu0 0
      %3798 = vmatprep.subr.bf16.mxu0 0
      %3799 = vmatpush2.bf16.msra.mxu0 0
      %3800 = vmatprep.subr.bf16.mxu0 0
      %3801 = vmatpush2.bf16.msra.mxu0 0
      %3802 = vmatprep.subr.bf16.mxu0 0
      %3803 = vmatpush2.bf16.msra.mxu0 0
      %3804 = vmatprep.subr.bf16.mxu0 0
      %3805 = vmatpush2.bf16.msra.mxu0 0
      %3806 = vmatprep.subr.bf16.mxu0 0
      %3807 = vmatpush2.bf16.msra.mxu0 0
      %3808 = vmatprep.mubr.bf16.mxu0 0
      %3809 = vmatmul.mubr.bf16.gmra.mxu0 %v3753
      %v3810 = vpop.f32.mrf.mxu0
      %v3811 = vadd.f32 %v3698, %v3810
      %v3812 = vpop.f32.mrf.mxu0
      %v3813 = vpop.f32.mrf.mxu0
      %v3814 = vadd.f32 %v3698, %v3813
      %v3815 = vpop.f32.mrf.mxu0
      %3816 = vmatprep.mubr.bf16.mxu0 0
      %3817 = vmatmul.mubr.bf16.gmra.mxu0 %v3756
      %v3818 = vpop.f32.mrf.mxu0
      %v3819 = vadd.f32 %v3698, %v3818
      %v3820 = vpop.f32.mrf.mxu0
      %v3821 = vpop.f32.mrf.mxu0
      %v3822 = vadd.f32 %v3698, %v3821
      %v3823 = vpop.f32.mrf.mxu0
      %3824 = vmatprep.mubr.bf16.mxu0 0
      %3825 = vmatmul.mubr.bf16.gmra.mxu0 %v3759
      %v3826 = vpop.f32.mrf.mxu0
      %v3827 = vadd.f32 %v3698, %v3826
      %v3828 = vpop.f32.mrf.mxu0
      %v3829 = vpop.f32.mrf.mxu0
      %v3830 = vadd.f32 %v3698, %v3829
      %v3831 = vpop.f32.mrf.mxu0
      %3832 = vmatprep.mubr.bf16.mxu0 0
      %3833 = vmatmul.mubr.bf16.gmra.mxu0 %v3762
      %v3834 = vpop.f32.mrf.mxu0
      %v3835 = vadd.f32 %v3698, %v3834
      %v3836 = vpop.f32.mrf.mxu0
      %v3837 = vpop.f32.mrf.mxu0
      %v3838 = vadd.f32 %v3698, %v3837
      %v3839 = vpop.f32.mrf.mxu0
      %3840 = vmatprep.mubr.bf16.mxu0 0
      %3841 = vmatmul.mubr.bf16.gmra.mxu0 %v3765
      %v3842 = vpop.f32.mrf.mxu0
      %v3843 = vadd.f32 %v3698, %v3842
      %v3844 = vpop.f32.mrf.mxu0
      %v3845 = vpop.f32.mrf.mxu0
      %v3846 = vadd.f32 %v3698, %v3845
      %v3847 = vpop.f32.mrf.mxu0
      %3848 = vmatprep.mubr.bf16.mxu0 0
      %3849 = vmatmul.mubr.bf16.gmra.mxu0 %v3768
      %v3850 = vpop.f32.mrf.mxu0
      %v3851 = vadd.f32 %v3698, %v3850
      %v3852 = vpop.f32.mrf.mxu0
      %v3853 = vpop.f32.mrf.mxu0
      %v3854 = vadd.f32 %v3698, %v3853
      %v3855 = vpop.f32.mrf.mxu0
      %3856 = vmatprep.mubr.bf16.mxu0 0
      %3857 = vmatmul.mubr.bf16.gmra.mxu0 %v3771
      %v3858 = vpop.f32.mrf.mxu0
      %v3859 = vadd.f32 %v3698, %v3858
      %v3860 = vpop.f32.mrf.mxu0
      %v3861 = vpop.f32.mrf.mxu0
      %v3862 = vadd.f32 %v3698, %v3861
      %v3863 = vpop.f32.mrf.mxu0
      %3864 = vmatprep.mubr.bf16.mxu0 0
      %3865 = vmatmul.mubr.bf16.gmra.mxu0 %v3774
      %v3866 = vpop.f32.mrf.mxu0
      %v3867 = vadd.f32 %v3698, %v3866
      %v3868 = vpop.f32.mrf.mxu0
      %v3869 = vpop.f32.mrf.mxu0
      %v3870 = vadd.f32 %v3698, %v3869
      %v3871 = vpop.f32.mrf.mxu0
      %3872 = vdwg.mxu0
      %3873 = vst.msk [vmem:[%s354] sm:$0xff] %vm436, %v3811
      %3874 = vst.msk [vmem:[%s354 + $0x8] sm:$0xff] %vm436, %v3814
      %3875 = vst.msk [vmem:[%s354 + $0x10] sm:$0xff] %vm436, %v3819
      %3876 = vst.msk [vmem:[%s354 + $0x18] sm:$0xff] %vm436, %v3822
      %3877 = vst.msk [vmem:[%s354 + $0x20] sm:$0xff] %vm436, %v3827
      %3878 = vst.msk [vmem:[%s354 + $0x28] sm:$0xff] %vm436, %v3830
      %3879 = vst.msk [vmem:[%s354 + $0x30] sm:$0xff] %vm436, %v3835
      %3880 = vst.msk [vmem:[%s354 + $0x38] sm:$0xff] %vm436, %v3838
      %3881 = vst.msk [vmem:[%s354 + $0x40] sm:$0xff] %vm436, %v3843
      %3882 = vst.msk [vmem:[%s354 + $0x48] sm:$0xff] %vm436, %v3846
      %3883 = vst.msk [vmem:[%s354 + $0x50] sm:$0xff] %vm436, %v3851
      %3884 = vst.msk [vmem:[%s354 + $0x58] sm:$0xff] %vm436, %v3854
      %3885 = vst.msk [vmem:[%s354 + $0x60] sm:$0xff] %vm436, %v3859
      %3886 = vst.msk [vmem:[%s354 + $0x68] sm:$0xff] %vm436, %v3862
      %3887 = vst.msk [vmem:[%s354 + $0x70] sm:$0xff] %vm436, %v3867
      %3888 = vst.msk [vmem:[%s354 + $0x78] sm:$0xff] %vm436, %v3870
      %s3889 = smul.u32 16, %s25
      %p3890 = scmp.lt.s32.totalorder %s24, 1
      %s3891 = scalar_select %p3890, %s24, 1
      %p3892 = scmp.lt.s32.totalorder %s3889, 15
      %s3893 = scalar_select %p3892, %s3889, 15
      %s3894 = smul.addr %s3891, 16
      %s3895 = sadd.s32 %s3893, %s3894
      %s3896 = smul.addr %s3895, 8
      %s3897 = scalar_lea.vmem %s9, %s3896
      // Predicated region
      $region57: #{pvt_attention.1} parent=55 // pred_check
        %p3898 = pneg %p246
      $region58: #{pvt_attention.1} parent=55 // pred_check_branch
        %3900 = sbr.rel (%p3898) target = $region60
      $region59: #{pvt_attention.1} parent=55 // pred_region
        %s3901 = smul.u32 16, %s25
      $region60: #{pvt_attention.1} parent=55 // pred_fallthru
        _
    $region56: #{pvt_attention.1} parent=5 // pred_fallthru
      _
    %p3902 = scmp.le.s32.totalorder 2, %s15
    // Predicated region
    $region61: #{pvt_attention.1} parent=5 // pred_check
      %p3903 = pneg %p3902
    $region62: #{pvt_attention.1} parent=5 // pred_check_branch
      %3905 = sbr.rel (%p3903) target = $region64
    $region63: #{pvt_attention.1} parent=5 // pred_region
      %s3906 = ssub.s32 %s15, 2
      // Predicated region
      $region65: #{pvt_attention.1} parent=63 // pred_check
        %p3907 = pneg %p252
      $region66: #{pvt_attention.1} parent=63 // pred_check_branch
        %3909 = sbr.rel (%p3907) target = $region68
      $region67: #{pvt_attention.1} parent=63 // pred_region
        %s3910 = smul.u32 16, %s27
        %p3911 = scmp.lt.s32.totalorder %s26, 1
        %s3912 = scalar_select %p3911, %s26, 1
        %p3913 = scmp.lt.s32.totalorder %s3910, 15
        %s3914 = scalar_select %p3913, %s3910, 15
        %s3915 = smul.addr %s3912, 16
        %s3916 = sadd.s32 %s3914, %s3915
        %s3917 = smul.addr %s3916, 8
        %s3918 = scalar_lea.vmem %s9, %s3917
      $region68: #{pvt_attention.1} parent=63 // pred_fallthru
        _
    $region64: #{pvt_attention.1} parent=5 // pred_fallthru
      _
  $region6: #{pvt_attention.1} parent=0 // loop_footer
    %s19 = sadd.s32 1, %s15
  $region7: #{pvt_attention.1} parent=0 // loop_footer_branch
    %14 = sbr.rel target = $region3
  $region8: #{pvt_attention.1} parent=0 // loop_exit
    _

</llo_original>
